<compile_context>
chip_gen: v6e
topology: v6e:2x2x1
jax: 0.10.0
libtpu: 0.0.40
codegen_flags: <defaults>
</compile_context>

<pallas_src>
import functools
import math

import jax
import jax.numpy as jnp
from jax.experimental import pallas as pl
from jax.experimental.pallas import tpu as pltpu

# bfloat16 matmul operands with f32 MXU accumulation.
MATMUL_DTYPE = jnp.bfloat16
LN_EPS = 1e-5


# --------------------------------------------------------------------------
# One fused kernel for the entire forward pass
# --------------------------------------------------------------------------
def _fused_transformer_kernel(
        x_ref,                      # (S*Nb, E)        f32 activations
        hb_ref,                     # (E, E)           bf16 head block-diag
        wqkv_ref, bqkv_ref,         # (L, E, 3*col) bf16 / (L, 1, 3*col) f32
        wo_ref, bo_ref,             # (L, E, E) bf16 / (L, 1, E) f32
        ln1g_ref, ln1b_ref,         # (L, 1, E) f32
        w1_ref, b1_ref,             # (L, E, F) bf16 / (L, 1, F) f32
        w2_ref, b2_ref,             # (L, F, E) bf16 / (L, 1, E) f32
        ln2g_ref, ln2b_ref,         # (L, 1, E) f32
        wf_ref, bf_ref,             # (Nb, E, Dm) bf16 / (1, Dm) f32
        o_ref,                      # (S, Dm) f32
        *, num_layers, S, Nb):
    f32 = jnp.float32
    E = x_ref.shape[-1]
    col = wqkv_ref.shape[-1] // 3              # 128-aligned q/k/v column stride

    def mm(a, b):
        # (M, K) @ (K, N) on the MXU; operands already MATMUL_DTYPE (casts are
        # hoisted to call sites), f32 accumulation.
        return jax.lax.dot_general(
            a, b, dimension_numbers=(((1,), (0,)), ((), ())),
            preferred_element_type=f32)

    def layer_norm(y, g, b):
        # PyTorch LayerNorm: biased variance, eps inside the rsqrt.  f32 math.
        mean = jnp.mean(y, axis=-1, keepdims=True)
        c = y - mean
        var = jnp.mean(c * c, axis=-1, keepdims=True)
        return c * jax.lax.rsqrt(var + LN_EPS) * g + b

    hb = hb_ref[...]                            # bf16, VMEM-resident
    x = x_ref[...]                              # (S*Nb, E) f32

    for l in range(num_layers):                 # unrolled at trace time
        xb = x.astype(MATMUL_DTYPE)             # hoisted cast, used once

        # ---- fused QKV projection (q-scale folded into weights/bias) ------
        qkv = mm(xb, wqkv_ref[l]) + bqkv_ref[l]           # (S*Nb, 3*col) f32
        q = qkv[:, 0:E]                                    # vreg-aligned slices
        k = qkv[:, col:col + E]
        v = qkv[:, 2 * col:2 * col + E]

        # ---- multi-head self-attention over the S (original batch) axis ---
        # Full 16-row tiles: loop only over key blocks sp; per-head <q,k>
        # reductions via one block-diagonal "head broadcast" matmul each.
        scores, v_tiles = [], []
        for sp in range(S):
            ksp = k[sp * Nb:(sp + 1) * Nb, :]              # (Nb, E)
            vsp = v[sp * Nb:(sp + 1) * Nb, :]
            if S > 1:                                      # tile across queries
                ksp = jnp.concatenate([ksp] * S, axis=0)   # (S*Nb, E)
                vsp = jnp.concatenate([vsp] * S, axis=0)
            v_tiles.append(vsp)
            scores.append(mm((q * ksp).astype(MATMUL_DTYPE), hb))
        mx = scores[0]
        for t in scores[1:]:
            mx = jnp.maximum(mx, t)
        probs = [jnp.exp(t - mx) for t in scores]          # f32 (EUP)
        denom = probs[0]
        for t in probs[1:]:
            denom = denom + t
        inv = pl.reciprocal(denom, approx=True)            # EUP slot, ~free
        acc = (probs[0] * inv) * v_tiles[0]
        for sp in range(1, S):
            acc = acc + (probs[sp] * inv) * v_tiles[sp]

        # ---- out-proj + fused residual-add + LayerNorm1 --------------------
        attn = mm(acc.astype(MATMUL_DTYPE), wo_ref[l]) + bo_ref[l]
        x = layer_norm(x + attn, ln1g_ref[l], ln1b_ref[l])

        # ---- FFN (ReLU) + fused residual-add + LayerNorm2 -------------------
        x1b = x.astype(MATMUL_DTYPE)
        h = jnp.maximum(mm(x1b, w1_ref[l]) + b1_ref[l], 0.0)   # (S*Nb, F) f32
        f = mm(h.astype(MATMUL_DTYPE), w2_ref[l]) + b2_ref[l]
        x = layer_norm(x + f, ln2g_ref[l], ln2b_ref[l])

    # ---- nn.Flatten + final Linear ------------------------------------------
    # out[b, :] = bf + sum_w x[b*Nb + w, :] @ Wf[w]
    # Row gather: static sublane slices + one tiny concat per w (proven ops),
    # then Nb small (S, E)@(E, Dm) matmuls.  No selection tensor / extra DMA.
    out = bf_ref[...]                                      # (1, Dm) f32
    for w in range(Nb):
        if S > 1:
            rows = jnp.concatenate(
                [x[b * Nb + w:b * Nb + w + 1, :] for b in range(S)], axis=0)
        else:
            rows = x[w:w + 1, :]
        out = out + mm(rows.astype(MATMUL_DTYPE), wf_ref[w])
    # NOTE: output is (S=2, Dm=32) -> masked store; pad/align lanes to 128 if
    # d_model is ever scaled up (review: lane-dense out_spec lever).
    o_ref[...] = out.astype(o_ref.dtype)


# --------------------------------------------------------------------------
# Parameter handling (PyTorch (out, in) convention in, kernel layout out)
# --------------------------------------------------------------------------
def init_params(key, d_model, window_size, num_layers, dim_ff):
    """Deterministic synthetic parameters in PyTorch (out, in) convention."""
    def dense(k, shape, scale=0.05):
        return scale * jax.random.normal(k, shape, dtype=jnp.float32)

    layers = []
    for i in range(num_layers):
        ks = jax.random.split(jax.random.fold_in(key, i), 8)
        layers.append(dict(
            in_proj_w=dense(ks[0], (3 * d_model, d_model)),
            in_proj_b=dense(ks[1], (3 * d_model,)),
            out_proj_w=dense(ks[2], (d_model, d_model)),
            out_proj_b=dense(ks[3], (d_model,)),
            ln1_g=jnp.ones((d_model,), jnp.float32),
            ln1_b=jnp.zeros((d_model,), jnp.float32),
            ff1_w=dense(ks[4], (dim_ff, d_model)),
            ff1_b=dense(ks[5], (dim_ff,)),
            ff2_w=dense(ks[6], (d_model, dim_ff)),
            ff2_b=dense(ks[7], (d_model,)),
            ln2_g=jnp.ones((d_model,), jnp.float32),
            ln2_b=jnp.zeros((d_model,), jnp.float32),
        ))
    ko = jax.random.split(jax.random.fold_in(key, 10_000), 2)
    return dict(
        layers=layers,
        out_w=dense(ko[0], (d_model, d_model * window_size)),
        out_b=dense(ko[1], (d_model,)),
    )


def prepare_params(params, num_heads, dtype=MATMUL_DTYPE):
    """Fuse QKV (with 1/sqrt(Dh) folded into q and 128-lane-aligned column
    blocks), pre-transpose all weights to (K, N), cast matmul operands to
    `dtype`, and stack per layer."""
    layers = params["layers"]
    E = layers[0]["out_proj_w"].shape[0]
    assert E % num_heads == 0
    dh = E // num_heads
    scale = 1.0 / math.sqrt(dh)
    col = ((E + 127) // 128) * 128          # q/k/v column stride (lane-aligned)

    def stack(fn, cast=None):
        arr = jnp.stack([fn(lp) for lp in layers], axis=0)
        return arr.astype(cast) if cast is not None else arr

    def qkv_w(lp):
        w = lp["in_proj_w"]                 # (3E, E)
        full = jnp.zeros((E, 3 * col), jnp.float32)
        full = full.at[:, 0:E].set((w[:E] * scale).T)
        full = full.at[:, col:col + E].set(w[E:2 * E].T)
        full = full.at[:, 2 * col:2 * col + E].set(w[2 * E:].T)
        return full

    def qkv_b(lp):
        b = lp["in_proj_b"]                 # (3E,)
        full = jnp.zeros((1, 3 * col), jnp.float32)
        full = full.at[0, 0:E].set(b[:E] * scale)
        full = full.at[0, col:col + E].set(b[E:2 * E])
        full = full.at[0, 2 * col:2 * col + E].set(b[2 * E:])
        return full

    prep = dict(
        wqkv=stack(qkv_w, dtype),
        bqkv=stack(qkv_b),
        wo=stack(lambda lp: lp["out_proj_w"].T, dtype),
        bo=stack(lambda lp: lp["out_proj_b"].reshape(1, E)),
        ln1g=stack(lambda lp: lp["ln1_g"].reshape(1, E)),
        ln1b=stack(lambda lp: lp["ln1_b"].reshape(1, E)),
        w1=stack(lambda lp: lp["ff1_w"].T, dtype),
        b1=stack(lambda lp: lp["ff1_b"].reshape(1, -1)),
        w2=stack(lambda lp: lp["ff2_w"].T, dtype),
        b2=stack(lambda lp: lp["ff2_b"].reshape(1, E)),
        ln2g=stack(lambda lp: lp["ln2_g"].reshape(1, E)),
        ln2b=stack(lambda lp: lp["ln2_b"].reshape(1, E)),
    )

    # head-broadcast matrix: hb[i, j] = 1 iff lanes i and j share a head.
    head_id = jnp.arange(E) // dh
    prep["hb"] = (head_id[:, None] == head_id[None, :]).astype(dtype)

    out_w, out_b = params["out_w"], params["out_b"]        # (Dm, W*E), (Dm,)
    d_out = out_w.shape[0]
    window = out_w.shape[1] // E
    # Wf[w, e, :] = out_w[:, w*E + e]  ->  Flatten+Linear = sum_w rows_w @ Wf[w]
    prep["wf"] = out_w.reshape(d_out, window, E).transpose(1, 2, 0).astype(dtype)
    prep["bf"] = out_b.reshape(1, d_out)
    return prep


def transformer_forward(x, prep):
    """x: (batch, d_model, window) -> (batch, d_model); one fused pallas_call."""
    B, E, W = x.shape
    num_layers = prep["wqkv"].shape[0]
    d_out = prep["bf"].shape[-1]

    # x.permute(0, 2, 1) flattened to (S*Nb, E) with row = b*W + w (S=B, Nb=W).
    xe = jnp.transpose(x, (0, 2, 1)).reshape(B * W, E).astype(jnp.float32)

    kernel = functools.partial(_fused_transformer_kernel,
                               num_layers=num_layers, S=B, Nb=W)
    args = (xe, prep["hb"],
            prep["wqkv"], prep["bqkv"], prep["wo"], prep["bo"],
            prep["ln1g"], prep["ln1b"], prep["w1"], prep["b1"],
            prep["w2"], prep["b2"], prep["ln2g"], prep["ln2b"],
            prep["wf"], prep["bf"])

    return pl.pallas_call(
        kernel,
        out_shape=jax.ShapeDtypeStruct((B, d_out), jnp.float32),
        # Whole arrays VMEM-resident for the single kernel invocation
        # (~0.6 MB of bf16 weights: fits every generation incl. v7x's 64 MiB).
        in_specs=[pl.BlockSpec(memory_space=pltpu.MemorySpace.VMEM)
                  for _ in args],
        out_specs=pl.BlockSpec(memory_space=pltpu.MemorySpace.VMEM),
    )(*args)


if __name__ == "__main__":
    # input_size must equal d_model for the PyTorch forward to type-check;
    # dropout_prob only affects training mode (identity here).
    d_model = 32
    window_size = 8
    num_heads = 4
    num_layers = 2
    dim_ff = 2048          # nn.TransformerEncoderLayer default dim_feedforward
    batch = 2

    root = jax.random.PRNGKey(0)
    k_params, k_x = jax.random.split(root)
    params = init_params(k_params, d_model, window_size, num_layers, dim_ff)
    prep = prepare_params(params, num_heads)
    x = jax.random.normal(k_x, (batch, d_model, window_size),
                          dtype=jnp.float32)

    fwd = jax.jit(lambda xx: transformer_forward(xx, prep))
    out = fwd(x)
    jax.block_until_ready(out)
    assert out.shape == (batch, d_model), out.shape
    assert bool(jnp.all(jnp.isfinite(out))), "non-finite output"
    print("KERNEL_OK")
</pallas_src>

<mosaic_0001>
module attributes {stable_mosaic.version = 11 : i64} {
  func.func @_fused_transformer_kernel(%arg0: memref<16x32xf32, #tpu.memory_space<vmem>>, %arg1: memref<32x32xbf16, #tpu.memory_space<vmem>>, %arg2: memref<2x32x384xbf16, #tpu.memory_space<vmem>>, %arg3: memref<2x1x384xf32, #tpu.memory_space<vmem>>, %arg4: memref<2x32x32xbf16, #tpu.memory_space<vmem>>, %arg5: memref<2x1x32xf32, #tpu.memory_space<vmem>>, %arg6: memref<2x1x32xf32, #tpu.memory_space<vmem>>, %arg7: memref<2x1x32xf32, #tpu.memory_space<vmem>>, %arg8: memref<2x32x2048xbf16, #tpu.memory_space<vmem>>, %arg9: memref<2x1x2048xf32, #tpu.memory_space<vmem>>, %arg10: memref<2x2048x32xbf16, #tpu.memory_space<vmem>>, %arg11: memref<2x1x32xf32, #tpu.memory_space<vmem>>, %arg12: memref<2x1x32xf32, #tpu.memory_space<vmem>>, %arg13: memref<2x1x32xf32, #tpu.memory_space<vmem>>, %arg14: memref<8x32x32xbf16, #tpu.memory_space<vmem>>, %arg15: memref<1x32xf32, #tpu.memory_space<vmem>>, %arg16: memref<2x32xf32, #tpu.memory_space<vmem>>) attributes {dimension_semantics = [], scalar_prefetch = 0 : i64, scratch_operands = 0 : i64, tpu.core_type = #tpu.core_type<tc>} {
    %c0 = arith.constant 0 : index
    %c0_0 = arith.constant 0 : index
    %0 = vector.load %arg1[%c0, %c0_0] : memref<32x32xbf16, #tpu.memory_space<vmem>>, vector<32x32xbf16>
    %c0_1 = arith.constant 0 : index
    %c0_2 = arith.constant 0 : index
    %1 = vector.load %arg0[%c0_1, %c0_2] : memref<16x32xf32, #tpu.memory_space<vmem>>, vector<16x32xf32>
    %2 = arith.truncf %1 : vector<16x32xf32> to vector<16x32xbf16>
    %c0_3 = arith.constant 0 : index
    %c0_4 = arith.constant 0 : index
    %c0_5 = arith.constant 0 : index
    %3 = vector.load %arg2[%c0_3, %c0_4, %c0_5] : memref<2x32x384xbf16, #tpu.memory_space<vmem>>, vector<1x32x384xbf16>
    %4 = vector.shape_cast %3 : vector<1x32x384xbf16> to vector<32x384xbf16>
    %cst = arith.constant dense<0.000000e+00> : vector<16x384xf32>
    %5 = tpu.matmul %2, %4, %cst {dimension_numbers = #tpu.dot_dimension_numbers<[1], [0], [0], [1], [0, 0, 1, 1], [], []>} : vector<16x32xbf16>, vector<32x384xbf16>, vector<16x384xf32> -> vector<16x384xf32>
    %c0_6 = arith.constant 0 : index
    %c0_7 = arith.constant 0 : index
    %c0_8 = arith.constant 0 : index
    %6 = vector.load %arg3[%c0_6, %c0_7, %c0_8] : memref<2x1x384xf32, #tpu.memory_space<vmem>>, vector<1x1x384xf32>
    %7 = vector.shape_cast %6 : vector<1x1x384xf32> to vector<1x384xf32>
    %8 = vector.broadcast %7 : vector<1x384xf32> to vector<16x384xf32>
    %9 = arith.addf %5, %8 : vector<16x384xf32>
    %10 = vector.extract_strided_slice %9 {offsets = [0, 0], sizes = [16, 32], strides = [1, 1]} : vector<16x384xf32> to vector<16x32xf32>
    %11 = vector.extract_strided_slice %9 {offsets = [0, 128], sizes = [16, 32], strides = [1, 1]} : vector<16x384xf32> to vector<16x32xf32>
    %12 = vector.extract_strided_slice %9 {offsets = [0, 256], sizes = [16, 32], strides = [1, 1]} : vector<16x384xf32> to vector<16x32xf32>
    %13 = vector.extract_strided_slice %11 {offsets = [0, 0], sizes = [8, 32], strides = [1, 1]} : vector<16x32xf32> to vector<8x32xf32>
    %14 = vector.extract_strided_slice %12 {offsets = [0, 0], sizes = [8, 32], strides = [1, 1]} : vector<16x32xf32> to vector<8x32xf32>
    %15 = tpu.concatenate %13, %13 in 0 : vector<8x32xf32>, vector<8x32xf32> -> vector<16x32xf32>
    %16 = tpu.concatenate %14, %14 in 0 : vector<8x32xf32>, vector<8x32xf32> -> vector<16x32xf32>
    %17 = arith.mulf %10, %15 : vector<16x32xf32>
    %18 = arith.truncf %17 : vector<16x32xf32> to vector<16x32xbf16>
    %cst_9 = arith.constant dense<0.000000e+00> : vector<16x32xf32>
    %19 = tpu.matmul %18, %0, %cst_9 {dimension_numbers = #tpu.dot_dimension_numbers<[1], [0], [0], [1], [0, 0, 1, 1], [], []>} : vector<16x32xbf16>, vector<32x32xbf16>, vector<16x32xf32> -> vector<16x32xf32>
    %20 = vector.extract_strided_slice %11 {offsets = [8, 0], sizes = [8, 32], strides = [1, 1]} : vector<16x32xf32> to vector<8x32xf32>
    %21 = vector.extract_strided_slice %12 {offsets = [8, 0], sizes = [8, 32], strides = [1, 1]} : vector<16x32xf32> to vector<8x32xf32>
    %22 = tpu.concatenate %20, %20 in 0 : vector<8x32xf32>, vector<8x32xf32> -> vector<16x32xf32>
    %23 = tpu.concatenate %21, %21 in 0 : vector<8x32xf32>, vector<8x32xf32> -> vector<16x32xf32>
    %24 = arith.mulf %10, %22 : vector<16x32xf32>
    %25 = arith.truncf %24 : vector<16x32xf32> to vector<16x32xbf16>
    %cst_10 = arith.constant dense<0.000000e+00> : vector<16x32xf32>
    %26 = tpu.matmul %25, %0, %cst_10 {dimension_numbers = #tpu.dot_dimension_numbers<[1], [0], [0], [1], [0, 0, 1, 1], [], []>} : vector<16x32xbf16>, vector<32x32xbf16>, vector<16x32xf32> -> vector<16x32xf32>
    %27 = arith.maximumf %19, %26 : vector<16x32xf32>
    %28 = arith.subf %19, %27 : vector<16x32xf32>
    %29 = math.exp %28 : vector<16x32xf32>
    %30 = arith.subf %26, %27 : vector<16x32xf32>
    %31 = math.exp %30 : vector<16x32xf32>
    %32 = arith.addf %29, %31 : vector<16x32xf32>
    %33 = tpu.reciprocal %32 {approx = true} : vector<16x32xf32> -> vector<16x32xf32>
    %34 = arith.mulf %29, %33 : vector<16x32xf32>
    %35 = arith.mulf %34, %16 : vector<16x32xf32>
    %36 = arith.mulf %31, %33 : vector<16x32xf32>
    %37 = arith.mulf %36, %23 : vector<16x32xf32>
    %38 = arith.addf %35, %37 : vector<16x32xf32>
    %39 = arith.truncf %38 : vector<16x32xf32> to vector<16x32xbf16>
    %c0_11 = arith.constant 0 : index
    %c0_12 = arith.constant 0 : index
    %c0_13 = arith.constant 0 : index
    %40 = vector.load %arg4[%c0_11, %c0_12, %c0_13] : memref<2x32x32xbf16, #tpu.memory_space<vmem>>, vector<1x32x32xbf16>
    %41 = vector.shape_cast %40 : vector<1x32x32xbf16> to vector<32x32xbf16>
    %cst_14 = arith.constant dense<0.000000e+00> : vector<16x32xf32>
    %42 = tpu.matmul %39, %41, %cst_14 {dimension_numbers = #tpu.dot_dimension_numbers<[1], [0], [0], [1], [0, 0, 1, 1], [], []>} : vector<16x32xbf16>, vector<32x32xbf16>, vector<16x32xf32> -> vector<16x32xf32>
    %c0_15 = arith.constant 0 : index
    %c0_16 = arith.constant 0 : index
    %c0_17 = arith.constant 0 : index
    %43 = vector.load %arg5[%c0_15, %c0_16, %c0_17] : memref<2x1x32xf32, #tpu.memory_space<vmem>>, vector<1x1x32xf32>
    %44 = vector.shape_cast %43 : vector<1x1x32xf32> to vector<1x32xf32>
    %45 = vector.broadcast %44 : vector<1x32xf32> to vector<16x32xf32>
    %46 = arith.addf %42, %45 : vector<16x32xf32>
    %47 = arith.addf %1, %46 : vector<16x32xf32>
    %c0_18 = arith.constant 0 : index
    %c0_19 = arith.constant 0 : index
    %c0_20 = arith.constant 0 : index
    %48 = vector.load %arg6[%c0_18, %c0_19, %c0_20] : memref<2x1x32xf32, #tpu.memory_space<vmem>>, vector<1x1x32xf32>
    %49 = vector.shape_cast %48 : vector<1x1x32xf32> to vector<1x32xf32>
    %c0_21 = arith.constant 0 : index
    %c0_22 = arith.constant 0 : index
    %c0_23 = arith.constant 0 : index
    %50 = vector.load %arg7[%c0_21, %c0_22, %c0_23] : memref<2x1x32xf32, #tpu.memory_space<vmem>>, vector<1x1x32xf32>
    %51 = vector.shape_cast %50 : vector<1x1x32xf32> to vector<1x32xf32>
    %cst_24 = arith.constant dense<0.000000e+00> : vector<16xf32>
    %52 = vector.multi_reduction <add>, %47, %cst_24 [1] : vector<16x32xf32> to vector<16xf32>
    %53 = vector.shape_cast %52 : vector<16xf32> to vector<16x1xf32>
    %cst_25 = arith.constant 3.200000e+01 : f32
    %54 = vector.broadcast %cst_25 : f32 to vector<16x1xf32>
    %55 = arith.divf %53, %54 : vector<16x1xf32>
    %56 = vector.broadcast %55 : vector<16x1xf32> to vector<16x32xf32>
    %57 = arith.subf %47, %56 : vector<16x32xf32>
    %58 = arith.mulf %57, %57 : vector<16x32xf32>
    %cst_26 = arith.constant dense<0.000000e+00> : vector<16xf32>
    %59 = vector.multi_reduction <add>, %58, %cst_26 [1] : vector<16x32xf32> to vector<16xf32>
    %60 = vector.shape_cast %59 : vector<16xf32> to vector<16x1xf32>
    %cst_27 = arith.constant 3.200000e+01 : f32
    %61 = vector.broadcast %cst_27 : f32 to vector<16x1xf32>
    %62 = arith.divf %60, %61 : vector<16x1xf32>
    %cst_28 = arith.constant 9.99999974E-6 : f32
    %63 = vector.broadcast %cst_28 : f32 to vector<16x1xf32>
    %64 = arith.addf %62, %63 : vector<16x1xf32>
    %65 = math.rsqrt %64 : vector<16x1xf32>
    %66 = vector.broadcast %65 : vector<16x1xf32> to vector<16x32xf32>
    %67 = arith.mulf %57, %66 : vector<16x32xf32>
    %68 = vector.broadcast %49 : vector<1x32xf32> to vector<16x32xf32>
    %69 = arith.mulf %67, %68 : vector<16x32xf32>
    %70 = vector.broadcast %51 : vector<1x32xf32> to vector<16x32xf32>
    %71 = arith.addf %69, %70 : vector<16x32xf32>
    %72 = arith.truncf %71 : vector<16x32xf32> to vector<16x32xbf16>
    %c0_29 = arith.constant 0 : index
    %c0_30 = arith.constant 0 : index
    %c0_31 = arith.constant 0 : index
    %73 = vector.load %arg8[%c0_29, %c0_30, %c0_31] : memref<2x32x2048xbf16, #tpu.memory_space<vmem>>, vector<1x32x2048xbf16>
    %74 = vector.shape_cast %73 : vector<1x32x2048xbf16> to vector<32x2048xbf16>
    %cst_32 = arith.constant dense<0.000000e+00> : vector<16x2048xf32>
    %75 = tpu.matmul %72, %74, %cst_32 {dimension_numbers = #tpu.dot_dimension_numbers<[1], [0], [0], [1], [0, 0, 1, 1], [], []>} : vector<16x32xbf16>, vector<32x2048xbf16>, vector<16x2048xf32> -> vector<16x2048xf32>
    %c0_33 = arith.constant 0 : index
    %c0_34 = arith.constant 0 : index
    %c0_35 = arith.constant 0 : index
    %76 = vector.load %arg9[%c0_33, %c0_34, %c0_35] : memref<2x1x2048xf32, #tpu.memory_space<vmem>>, vector<1x1x2048xf32>
    %77 = vector.shape_cast %76 : vector<1x1x2048xf32> to vector<1x2048xf32>
    %78 = vector.broadcast %77 : vector<1x2048xf32> to vector<16x2048xf32>
    %79 = arith.addf %75, %78 : vector<16x2048xf32>
    %cst_36 = arith.constant 0.000000e+00 : f32
    %80 = vector.broadcast %cst_36 : f32 to vector<16x2048xf32>
    %81 = arith.maximumf %79, %80 : vector<16x2048xf32>
    %82 = arith.truncf %81 : vector<16x2048xf32> to vector<16x2048xbf16>
    %c0_37 = arith.constant 0 : index
    %c0_38 = arith.constant 0 : index
    %c0_39 = arith.constant 0 : index
    %83 = vector.load %arg10[%c0_37, %c0_38, %c0_39] : memref<2x2048x32xbf16, #tpu.memory_space<vmem>>, vector<1x2048x32xbf16>
    %84 = vector.shape_cast %83 : vector<1x2048x32xbf16> to vector<2048x32xbf16>
    %cst_40 = arith.constant dense<0.000000e+00> : vector<16x32xf32>
    %85 = tpu.matmul %82, %84, %cst_40 {dimension_numbers = #tpu.dot_dimension_numbers<[1], [0], [0], [1], [0, 0, 1, 1], [], []>} : vector<16x2048xbf16>, vector<2048x32xbf16>, vector<16x32xf32> -> vector<16x32xf32>
    %c0_41 = arith.constant 0 : index
    %c0_42 = arith.constant 0 : index
    %c0_43 = arith.constant 0 : index
    %86 = vector.load %arg11[%c0_41, %c0_42, %c0_43] : memref<2x1x32xf32, #tpu.memory_space<vmem>>, vector<1x1x32xf32>
    %87 = vector.shape_cast %86 : vector<1x1x32xf32> to vector<1x32xf32>
    %88 = vector.broadcast %87 : vector<1x32xf32> to vector<16x32xf32>
    %89 = arith.addf %85, %88 : vector<16x32xf32>
    %90 = arith.addf %71, %89 : vector<16x32xf32>
    %c0_44 = arith.constant 0 : index
    %c0_45 = arith.constant 0 : index
    %c0_46 = arith.constant 0 : index
    %91 = vector.load %arg12[%c0_44, %c0_45, %c0_46] : memref<2x1x32xf32, #tpu.memory_space<vmem>>, vector<1x1x32xf32>
    %92 = vector.shape_cast %91 : vector<1x1x32xf32> to vector<1x32xf32>
    %c0_47 = arith.constant 0 : index
    %c0_48 = arith.constant 0 : index
    %c0_49 = arith.constant 0 : index
    %93 = vector.load %arg13[%c0_47, %c0_48, %c0_49] : memref<2x1x32xf32, #tpu.memory_space<vmem>>, vector<1x1x32xf32>
    %94 = vector.shape_cast %93 : vector<1x1x32xf32> to vector<1x32xf32>
    %cst_50 = arith.constant dense<0.000000e+00> : vector<16xf32>
    %95 = vector.multi_reduction <add>, %90, %cst_50 [1] : vector<16x32xf32> to vector<16xf32>
    %96 = vector.shape_cast %95 : vector<16xf32> to vector<16x1xf32>
    %cst_51 = arith.constant 3.200000e+01 : f32
    %97 = vector.broadcast %cst_51 : f32 to vector<16x1xf32>
    %98 = arith.divf %96, %97 : vector<16x1xf32>
    %99 = vector.broadcast %98 : vector<16x1xf32> to vector<16x32xf32>
    %100 = arith.subf %90, %99 : vector<16x32xf32>
    %101 = arith.mulf %100, %100 : vector<16x32xf32>
    %cst_52 = arith.constant dense<0.000000e+00> : vector<16xf32>
    %102 = vector.multi_reduction <add>, %101, %cst_52 [1] : vector<16x32xf32> to vector<16xf32>
    %103 = vector.shape_cast %102 : vector<16xf32> to vector<16x1xf32>
    %cst_53 = arith.constant 3.200000e+01 : f32
    %104 = vector.broadcast %cst_53 : f32 to vector<16x1xf32>
    %105 = arith.divf %103, %104 : vector<16x1xf32>
    %cst_54 = arith.constant 9.99999974E-6 : f32
    %106 = vector.broadcast %cst_54 : f32 to vector<16x1xf32>
    %107 = arith.addf %105, %106 : vector<16x1xf32>
    %108 = math.rsqrt %107 : vector<16x1xf32>
    %109 = vector.broadcast %108 : vector<16x1xf32> to vector<16x32xf32>
    %110 = arith.mulf %100, %109 : vector<16x32xf32>
    %111 = vector.broadcast %92 : vector<1x32xf32> to vector<16x32xf32>
    %112 = arith.mulf %110, %111 : vector<16x32xf32>
    %113 = vector.broadcast %94 : vector<1x32xf32> to vector<16x32xf32>
    %114 = arith.addf %112, %113 : vector<16x32xf32>
    %115 = arith.truncf %114 : vector<16x32xf32> to vector<16x32xbf16>
    %c1 = arith.constant 1 : index
    %c0_55 = arith.constant 0 : index
    %c0_56 = arith.constant 0 : index
    %116 = vector.load %arg2[%c1, %c0_55, %c0_56] : memref<2x32x384xbf16, #tpu.memory_space<vmem>>, vector<1x32x384xbf16>
    %117 = vector.shape_cast %116 : vector<1x32x384xbf16> to vector<32x384xbf16>
    %cst_57 = arith.constant dense<0.000000e+00> : vector<16x384xf32>
    %118 = tpu.matmul %115, %117, %cst_57 {dimension_numbers = #tpu.dot_dimension_numbers<[1], [0], [0], [1], [0, 0, 1, 1], [], []>} : vector<16x32xbf16>, vector<32x384xbf16>, vector<16x384xf32> -> vector<16x384xf32>
    %c1_58 = arith.constant 1 : index
    %c0_59 = arith.constant 0 : index
    %c0_60 = arith.constant 0 : index
    %119 = vector.load %arg3[%c1_58, %c0_59, %c0_60] : memref<2x1x384xf32, #tpu.memory_space<vmem>>, vector<1x1x384xf32>
    %120 = vector.shape_cast %119 : vector<1x1x384xf32> to vector<1x384xf32>
    %121 = vector.broadcast %120 : vector<1x384xf32> to vector<16x384xf32>
    %122 = arith.addf %118, %121 : vector<16x384xf32>
    %123 = vector.extract_strided_slice %122 {offsets = [0, 0], sizes = [16, 32], strides = [1, 1]} : vector<16x384xf32> to vector<16x32xf32>
    %124 = vector.extract_strided_slice %122 {offsets = [0, 128], sizes = [16, 32], strides = [1, 1]} : vector<16x384xf32> to vector<16x32xf32>
    %125 = vector.extract_strided_slice %122 {offsets = [0, 256], sizes = [16, 32], strides = [1, 1]} : vector<16x384xf32> to vector<16x32xf32>
    %126 = vector.extract_strided_slice %124 {offsets = [0, 0], sizes = [8, 32], strides = [1, 1]} : vector<16x32xf32> to vector<8x32xf32>
    %127 = vector.extract_strided_slice %125 {offsets = [0, 0], sizes = [8, 32], strides = [1, 1]} : vector<16x32xf32> to vector<8x32xf32>
    %128 = tpu.concatenate %126, %126 in 0 : vector<8x32xf32>, vector<8x32xf32> -> vector<16x32xf32>
    %129 = tpu.concatenate %127, %127 in 0 : vector<8x32xf32>, vector<8x32xf32> -> vector<16x32xf32>
    %130 = arith.mulf %123, %128 : vector<16x32xf32>
    %131 = arith.truncf %130 : vector<16x32xf32> to vector<16x32xbf16>
    %cst_61 = arith.constant dense<0.000000e+00> : vector<16x32xf32>
    %132 = tpu.matmul %131, %0, %cst_61 {dimension_numbers = #tpu.dot_dimension_numbers<[1], [0], [0], [1], [0, 0, 1, 1], [], []>} : vector<16x32xbf16>, vector<32x32xbf16>, vector<16x32xf32> -> vector<16x32xf32>
    %133 = vector.extract_strided_slice %124 {offsets = [8, 0], sizes = [8, 32], strides = [1, 1]} : vector<16x32xf32> to vector<8x32xf32>
    %134 = vector.extract_strided_slice %125 {offsets = [8, 0], sizes = [8, 32], strides = [1, 1]} : vector<16x32xf32> to vector<8x32xf32>
    %135 = tpu.concatenate %133, %133 in 0 : vector<8x32xf32>, vector<8x32xf32> -> vector<16x32xf32>
    %136 = tpu.concatenate %134, %134 in 0 : vector<8x32xf32>, vector<8x32xf32> -> vector<16x32xf32>
    %137 = arith.mulf %123, %135 : vector<16x32xf32>
    %138 = arith.truncf %137 : vector<16x32xf32> to vector<16x32xbf16>
    %cst_62 = arith.constant dense<0.000000e+00> : vector<16x32xf32>
    %139 = tpu.matmul %138, %0, %cst_62 {dimension_numbers = #tpu.dot_dimension_numbers<[1], [0], [0], [1], [0, 0, 1, 1], [], []>} : vector<16x32xbf16>, vector<32x32xbf16>, vector<16x32xf32> -> vector<16x32xf32>
    %140 = arith.maximumf %132, %139 : vector<16x32xf32>
    %141 = arith.subf %132, %140 : vector<16x32xf32>
    %142 = math.exp %141 : vector<16x32xf32>
    %143 = arith.subf %139, %140 : vector<16x32xf32>
    %144 = math.exp %143 : vector<16x32xf32>
    %145 = arith.addf %142, %144 : vector<16x32xf32>
    %146 = tpu.reciprocal %145 {approx = true} : vector<16x32xf32> -> vector<16x32xf32>
    %147 = arith.mulf %142, %146 : vector<16x32xf32>
    %148 = arith.mulf %147, %129 : vector<16x32xf32>
    %149 = arith.mulf %144, %146 : vector<16x32xf32>
    %150 = arith.mulf %149, %136 : vector<16x32xf32>
    %151 = arith.addf %148, %150 : vector<16x32xf32>
    %152 = arith.truncf %151 : vector<16x32xf32> to vector<16x32xbf16>
    %c1_63 = arith.constant 1 : index
    %c0_64 = arith.constant 0 : index
    %c0_65 = arith.constant 0 : index
    %153 = vector.load %arg4[%c1_63, %c0_64, %c0_65] : memref<2x32x32xbf16, #tpu.memory_space<vmem>>, vector<1x32x32xbf16>
    %154 = vector.shape_cast %153 : vector<1x32x32xbf16> to vector<32x32xbf16>
    %cst_66 = arith.constant dense<0.000000e+00> : vector<16x32xf32>
    %155 = tpu.matmul %152, %154, %cst_66 {dimension_numbers = #tpu.dot_dimension_numbers<[1], [0], [0], [1], [0, 0, 1, 1], [], []>} : vector<16x32xbf16>, vector<32x32xbf16>, vector<16x32xf32> -> vector<16x32xf32>
    %c1_67 = arith.constant 1 : index
    %c0_68 = arith.constant 0 : index
    %c0_69 = arith.constant 0 : index
    %156 = vector.load %arg5[%c1_67, %c0_68, %c0_69] : memref<2x1x32xf32, #tpu.memory_space<vmem>>, vector<1x1x32xf32>
    %157 = vector.shape_cast %156 : vector<1x1x32xf32> to vector<1x32xf32>
    %158 = vector.broadcast %157 : vector<1x32xf32> to vector<16x32xf32>
    %159 = arith.addf %155, %158 : vector<16x32xf32>
    %160 = arith.addf %114, %159 : vector<16x32xf32>
    %c1_70 = arith.constant 1 : index
    %c0_71 = arith.constant 0 : index
    %c0_72 = arith.constant 0 : index
    %161 = vector.load %arg6[%c1_70, %c0_71, %c0_72] : memref<2x1x32xf32, #tpu.memory_space<vmem>>, vector<1x1x32xf32>
    %162 = vector.shape_cast %161 : vector<1x1x32xf32> to vector<1x32xf32>
    %c1_73 = arith.constant 1 : index
    %c0_74 = arith.constant 0 : index
    %c0_75 = arith.constant 0 : index
    %163 = vector.load %arg7[%c1_73, %c0_74, %c0_75] : memref<2x1x32xf32, #tpu.memory_space<vmem>>, vector<1x1x32xf32>
    %164 = vector.shape_cast %163 : vector<1x1x32xf32> to vector<1x32xf32>
    %cst_76 = arith.constant dense<0.000000e+00> : vector<16xf32>
    %165 = vector.multi_reduction <add>, %160, %cst_76 [1] : vector<16x32xf32> to vector<16xf32>
    %166 = vector.shape_cast %165 : vector<16xf32> to vector<16x1xf32>
    %cst_77 = arith.constant 3.200000e+01 : f32
    %167 = vector.broadcast %cst_77 : f32 to vector<16x1xf32>
    %168 = arith.divf %166, %167 : vector<16x1xf32>
    %169 = vector.broadcast %168 : vector<16x1xf32> to vector<16x32xf32>
    %170 = arith.subf %160, %169 : vector<16x32xf32>
    %171 = arith.mulf %170, %170 : vector<16x32xf32>
    %cst_78 = arith.constant dense<0.000000e+00> : vector<16xf32>
    %172 = vector.multi_reduction <add>, %171, %cst_78 [1] : vector<16x32xf32> to vector<16xf32>
    %173 = vector.shape_cast %172 : vector<16xf32> to vector<16x1xf32>
    %cst_79 = arith.constant 3.200000e+01 : f32
    %174 = vector.broadcast %cst_79 : f32 to vector<16x1xf32>
    %175 = arith.divf %173, %174 : vector<16x1xf32>
    %cst_80 = arith.constant 9.99999974E-6 : f32
    %176 = vector.broadcast %cst_80 : f32 to vector<16x1xf32>
    %177 = arith.addf %175, %176 : vector<16x1xf32>
    %178 = math.rsqrt %177 : vector<16x1xf32>
    %179 = vector.broadcast %178 : vector<16x1xf32> to vector<16x32xf32>
    %180 = arith.mulf %170, %179 : vector<16x32xf32>
    %181 = vector.broadcast %162 : vector<1x32xf32> to vector<16x32xf32>
    %182 = arith.mulf %180, %181 : vector<16x32xf32>
    %183 = vector.broadcast %164 : vector<1x32xf32> to vector<16x32xf32>
    %184 = arith.addf %182, %183 : vector<16x32xf32>
    %185 = arith.truncf %184 : vector<16x32xf32> to vector<16x32xbf16>
    %c1_81 = arith.constant 1 : index
    %c0_82 = arith.constant 0 : index
    %c0_83 = arith.constant 0 : index
    %186 = vector.load %arg8[%c1_81, %c0_82, %c0_83] : memref<2x32x2048xbf16, #tpu.memory_space<vmem>>, vector<1x32x2048xbf16>
    %187 = vector.shape_cast %186 : vector<1x32x2048xbf16> to vector<32x2048xbf16>
    %cst_84 = arith.constant dense<0.000000e+00> : vector<16x2048xf32>
    %188 = tpu.matmul %185, %187, %cst_84 {dimension_numbers = #tpu.dot_dimension_numbers<[1], [0], [0], [1], [0, 0, 1, 1], [], []>} : vector<16x32xbf16>, vector<32x2048xbf16>, vector<16x2048xf32> -> vector<16x2048xf32>
    %c1_85 = arith.constant 1 : index
    %c0_86 = arith.constant 0 : index
    %c0_87 = arith.constant 0 : index
    %189 = vector.load %arg9[%c1_85, %c0_86, %c0_87] : memref<2x1x2048xf32, #tpu.memory_space<vmem>>, vector<1x1x2048xf32>
    %190 = vector.shape_cast %189 : vector<1x1x2048xf32> to vector<1x2048xf32>
    %191 = vector.broadcast %190 : vector<1x2048xf32> to vector<16x2048xf32>
    %192 = arith.addf %188, %191 : vector<16x2048xf32>
    %cst_88 = arith.constant 0.000000e+00 : f32
    %193 = vector.broadcast %cst_88 : f32 to vector<16x2048xf32>
    %194 = arith.maximumf %192, %193 : vector<16x2048xf32>
    %195 = arith.truncf %194 : vector<16x2048xf32> to vector<16x2048xbf16>
    %c1_89 = arith.constant 1 : index
    %c0_90 = arith.constant 0 : index
    %c0_91 = arith.constant 0 : index
    %196 = vector.load %arg10[%c1_89, %c0_90, %c0_91] : memref<2x2048x32xbf16, #tpu.memory_space<vmem>>, vector<1x2048x32xbf16>
    %197 = vector.shape_cast %196 : vector<1x2048x32xbf16> to vector<2048x32xbf16>
    %cst_92 = arith.constant dense<0.000000e+00> : vector<16x32xf32>
    %198 = tpu.matmul %195, %197, %cst_92 {dimension_numbers = #tpu.dot_dimension_numbers<[1], [0], [0], [1], [0, 0, 1, 1], [], []>} : vector<16x2048xbf16>, vector<2048x32xbf16>, vector<16x32xf32> -> vector<16x32xf32>
    %c1_93 = arith.constant 1 : index
    %c0_94 = arith.constant 0 : index
    %c0_95 = arith.constant 0 : index
    %199 = vector.load %arg11[%c1_93, %c0_94, %c0_95] : memref<2x1x32xf32, #tpu.memory_space<vmem>>, vector<1x1x32xf32>
    %200 = vector.shape_cast %199 : vector<1x1x32xf32> to vector<1x32xf32>
    %201 = vector.broadcast %200 : vector<1x32xf32> to vector<16x32xf32>
    %202 = arith.addf %198, %201 : vector<16x32xf32>
    %203 = arith.addf %184, %202 : vector<16x32xf32>
    %c1_96 = arith.constant 1 : index
    %c0_97 = arith.constant 0 : index
    %c0_98 = arith.constant 0 : index
    %204 = vector.load %arg12[%c1_96, %c0_97, %c0_98] : memref<2x1x32xf32, #tpu.memory_space<vmem>>, vector<1x1x32xf32>
    %205 = vector.shape_cast %204 : vector<1x1x32xf32> to vector<1x32xf32>
    %c1_99 = arith.constant 1 : index
    %c0_100 = arith.constant 0 : index
    %c0_101 = arith.constant 0 : index
    %206 = vector.load %arg13[%c1_99, %c0_100, %c0_101] : memref<2x1x32xf32, #tpu.memory_space<vmem>>, vector<1x1x32xf32>
    %207 = vector.shape_cast %206 : vector<1x1x32xf32> to vector<1x32xf32>
    %cst_102 = arith.constant dense<0.000000e+00> : vector<16xf32>
    %208 = vector.multi_reduction <add>, %203, %cst_102 [1] : vector<16x32xf32> to vector<16xf32>
    %209 = vector.shape_cast %208 : vector<16xf32> to vector<16x1xf32>
    %cst_103 = arith.constant 3.200000e+01 : f32
    %210 = vector.broadcast %cst_103 : f32 to vector<16x1xf32>
    %211 = arith.divf %209, %210 : vector<16x1xf32>
    %212 = vector.broadcast %211 : vector<16x1xf32> to vector<16x32xf32>
    %213 = arith.subf %203, %212 : vector<16x32xf32>
    %214 = arith.mulf %213, %213 : vector<16x32xf32>
    %cst_104 = arith.constant dense<0.000000e+00> : vector<16xf32>
    %215 = vector.multi_reduction <add>, %214, %cst_104 [1] : vector<16x32xf32> to vector<16xf32>
    %216 = vector.shape_cast %215 : vector<16xf32> to vector<16x1xf32>
    %cst_105 = arith.constant 3.200000e+01 : f32
    %217 = vector.broadcast %cst_105 : f32 to vector<16x1xf32>
    %218 = arith.divf %216, %217 : vector<16x1xf32>
    %cst_106 = arith.constant 9.99999974E-6 : f32
    %219 = vector.broadcast %cst_106 : f32 to vector<16x1xf32>
    %220 = arith.addf %218, %219 : vector<16x1xf32>
    %221 = math.rsqrt %220 : vector<16x1xf32>
    %222 = vector.broadcast %221 : vector<16x1xf32> to vector<16x32xf32>
    %223 = arith.mulf %213, %222 : vector<16x32xf32>
    %224 = vector.broadcast %205 : vector<1x32xf32> to vector<16x32xf32>
    %225 = arith.mulf %223, %224 : vector<16x32xf32>
    %226 = vector.broadcast %207 : vector<1x32xf32> to vector<16x32xf32>
    %227 = arith.addf %225, %226 : vector<16x32xf32>
    %c0_107 = arith.constant 0 : index
    %c0_108 = arith.constant 0 : index
    %228 = vector.load %arg15[%c0_107, %c0_108] : memref<1x32xf32, #tpu.memory_space<vmem>>, vector<1x32xf32>
    %229 = vector.extract_strided_slice %227 {offsets = [0, 0], sizes = [1, 32], strides = [1, 1]} : vector<16x32xf32> to vector<1x32xf32>
    %230 = vector.extract_strided_slice %227 {offsets = [8, 0], sizes = [1, 32], strides = [1, 1]} : vector<16x32xf32> to vector<1x32xf32>
    %231 = tpu.concatenate %229, %230 in 0 : vector<1x32xf32>, vector<1x32xf32> -> vector<2x32xf32>
    %232 = arith.truncf %231 : vector<2x32xf32> to vector<2x32xbf16>
    %c0_109 = arith.constant 0 : index
    %c0_110 = arith.constant 0 : index
    %c0_111 = arith.constant 0 : index
    %233 = vector.load %arg14[%c0_109, %c0_110, %c0_111] : memref<8x32x32xbf16, #tpu.memory_space<vmem>>, vector<1x32x32xbf16>
    %234 = vector.shape_cast %233 : vector<1x32x32xbf16> to vector<32x32xbf16>
    %cst_112 = arith.constant dense<0.000000e+00> : vector<2x32xf32>
    %235 = tpu.matmul %232, %234, %cst_112 {dimension_numbers = #tpu.dot_dimension_numbers<[1], [0], [0], [1], [0, 0, 1, 1], [], []>} : vector<2x32xbf16>, vector<32x32xbf16>, vector<2x32xf32> -> vector<2x32xf32>
    %236 = vector.broadcast %228 : vector<1x32xf32> to vector<2x32xf32>
    %237 = arith.addf %236, %235 : vector<2x32xf32>
    %238 = vector.extract_strided_slice %227 {offsets = [1, 0], sizes = [1, 32], strides = [1, 1]} : vector<16x32xf32> to vector<1x32xf32>
    %239 = vector.extract_strided_slice %227 {offsets = [9, 0], sizes = [1, 32], strides = [1, 1]} : vector<16x32xf32> to vector<1x32xf32>
    %240 = tpu.concatenate %238, %239 in 0 : vector<1x32xf32>, vector<1x32xf32> -> vector<2x32xf32>
    %241 = arith.truncf %240 : vector<2x32xf32> to vector<2x32xbf16>
    %c1_113 = arith.constant 1 : index
    %c0_114 = arith.constant 0 : index
    %c0_115 = arith.constant 0 : index
    %242 = vector.load %arg14[%c1_113, %c0_114, %c0_115] : memref<8x32x32xbf16, #tpu.memory_space<vmem>>, vector<1x32x32xbf16>
    %243 = vector.shape_cast %242 : vector<1x32x32xbf16> to vector<32x32xbf16>
    %cst_116 = arith.constant dense<0.000000e+00> : vector<2x32xf32>
    %244 = tpu.matmul %241, %243, %cst_116 {dimension_numbers = #tpu.dot_dimension_numbers<[1], [0], [0], [1], [0, 0, 1, 1], [], []>} : vector<2x32xbf16>, vector<32x32xbf16>, vector<2x32xf32> -> vector<2x32xf32>
    %245 = arith.addf %237, %244 : vector<2x32xf32>
    %246 = vector.extract_strided_slice %227 {offsets = [2, 0], sizes = [1, 32], strides = [1, 1]} : vector<16x32xf32> to vector<1x32xf32>
    %247 = vector.extract_strided_slice %227 {offsets = [10, 0], sizes = [1, 32], strides = [1, 1]} : vector<16x32xf32> to vector<1x32xf32>
    %248 = tpu.concatenate %246, %247 in 0 : vector<1x32xf32>, vector<1x32xf32> -> vector<2x32xf32>
    %249 = arith.truncf %248 : vector<2x32xf32> to vector<2x32xbf16>
    %c2 = arith.constant 2 : index
    %c0_117 = arith.constant 0 : index
    %c0_118 = arith.constant 0 : index
    %250 = vector.load %arg14[%c2, %c0_117, %c0_118] : memref<8x32x32xbf16, #tpu.memory_space<vmem>>, vector<1x32x32xbf16>
    %251 = vector.shape_cast %250 : vector<1x32x32xbf16> to vector<32x32xbf16>
    %cst_119 = arith.constant dense<0.000000e+00> : vector<2x32xf32>
    %252 = tpu.matmul %249, %251, %cst_119 {dimension_numbers = #tpu.dot_dimension_numbers<[1], [0], [0], [1], [0, 0, 1, 1], [], []>} : vector<2x32xbf16>, vector<32x32xbf16>, vector<2x32xf32> -> vector<2x32xf32>
    %253 = arith.addf %245, %252 : vector<2x32xf32>
    %254 = vector.extract_strided_slice %227 {offsets = [3, 0], sizes = [1, 32], strides = [1, 1]} : vector<16x32xf32> to vector<1x32xf32>
    %255 = vector.extract_strided_slice %227 {offsets = [11, 0], sizes = [1, 32], strides = [1, 1]} : vector<16x32xf32> to vector<1x32xf32>
    %256 = tpu.concatenate %254, %255 in 0 : vector<1x32xf32>, vector<1x32xf32> -> vector<2x32xf32>
    %257 = arith.truncf %256 : vector<2x32xf32> to vector<2x32xbf16>
    %c3 = arith.constant 3 : index
    %c0_120 = arith.constant 0 : index
    %c0_121 = arith.constant 0 : index
    %258 = vector.load %arg14[%c3, %c0_120, %c0_121] : memref<8x32x32xbf16, #tpu.memory_space<vmem>>, vector<1x32x32xbf16>
    %259 = vector.shape_cast %258 : vector<1x32x32xbf16> to vector<32x32xbf16>
    %cst_122 = arith.constant dense<0.000000e+00> : vector<2x32xf32>
    %260 = tpu.matmul %257, %259, %cst_122 {dimension_numbers = #tpu.dot_dimension_numbers<[1], [0], [0], [1], [0, 0, 1, 1], [], []>} : vector<2x32xbf16>, vector<32x32xbf16>, vector<2x32xf32> -> vector<2x32xf32>
    %261 = arith.addf %253, %260 : vector<2x32xf32>
    %262 = vector.extract_strided_slice %227 {offsets = [4, 0], sizes = [1, 32], strides = [1, 1]} : vector<16x32xf32> to vector<1x32xf32>
    %263 = vector.extract_strided_slice %227 {offsets = [12, 0], sizes = [1, 32], strides = [1, 1]} : vector<16x32xf32> to vector<1x32xf32>
    %264 = tpu.concatenate %262, %263 in 0 : vector<1x32xf32>, vector<1x32xf32> -> vector<2x32xf32>
    %265 = arith.truncf %264 : vector<2x32xf32> to vector<2x32xbf16>
    %c4 = arith.constant 4 : index
    %c0_123 = arith.constant 0 : index
    %c0_124 = arith.constant 0 : index
    %266 = vector.load %arg14[%c4, %c0_123, %c0_124] : memref<8x32x32xbf16, #tpu.memory_space<vmem>>, vector<1x32x32xbf16>
    %267 = vector.shape_cast %266 : vector<1x32x32xbf16> to vector<32x32xbf16>
    %cst_125 = arith.constant dense<0.000000e+00> : vector<2x32xf32>
    %268 = tpu.matmul %265, %267, %cst_125 {dimension_numbers = #tpu.dot_dimension_numbers<[1], [0], [0], [1], [0, 0, 1, 1], [], []>} : vector<2x32xbf16>, vector<32x32xbf16>, vector<2x32xf32> -> vector<2x32xf32>
    %269 = arith.addf %261, %268 : vector<2x32xf32>
    %270 = vector.extract_strided_slice %227 {offsets = [5, 0], sizes = [1, 32], strides = [1, 1]} : vector<16x32xf32> to vector<1x32xf32>
    %271 = vector.extract_strided_slice %227 {offsets = [13, 0], sizes = [1, 32], strides = [1, 1]} : vector<16x32xf32> to vector<1x32xf32>
    %272 = tpu.concatenate %270, %271 in 0 : vector<1x32xf32>, vector<1x32xf32> -> vector<2x32xf32>
    %273 = arith.truncf %272 : vector<2x32xf32> to vector<2x32xbf16>
    %c5 = arith.constant 5 : index
    %c0_126 = arith.constant 0 : index
    %c0_127 = arith.constant 0 : index
    %274 = vector.load %arg14[%c5, %c0_126, %c0_127] : memref<8x32x32xbf16, #tpu.memory_space<vmem>>, vector<1x32x32xbf16>
    %275 = vector.shape_cast %274 : vector<1x32x32xbf16> to vector<32x32xbf16>
    %cst_128 = arith.constant dense<0.000000e+00> : vector<2x32xf32>
    %276 = tpu.matmul %273, %275, %cst_128 {dimension_numbers = #tpu.dot_dimension_numbers<[1], [0], [0], [1], [0, 0, 1, 1], [], []>} : vector<2x32xbf16>, vector<32x32xbf16>, vector<2x32xf32> -> vector<2x32xf32>
    %277 = arith.addf %269, %276 : vector<2x32xf32>
    %278 = vector.extract_strided_slice %227 {offsets = [6, 0], sizes = [1, 32], strides = [1, 1]} : vector<16x32xf32> to vector<1x32xf32>
    %279 = vector.extract_strided_slice %227 {offsets = [14, 0], sizes = [1, 32], strides = [1, 1]} : vector<16x32xf32> to vector<1x32xf32>
    %280 = tpu.concatenate %278, %279 in 0 : vector<1x32xf32>, vector<1x32xf32> -> vector<2x32xf32>
    %281 = arith.truncf %280 : vector<2x32xf32> to vector<2x32xbf16>
    %c6 = arith.constant 6 : index
    %c0_129 = arith.constant 0 : index
    %c0_130 = arith.constant 0 : index
    %282 = vector.load %arg14[%c6, %c0_129, %c0_130] : memref<8x32x32xbf16, #tpu.memory_space<vmem>>, vector<1x32x32xbf16>
    %283 = vector.shape_cast %282 : vector<1x32x32xbf16> to vector<32x32xbf16>
    %cst_131 = arith.constant dense<0.000000e+00> : vector<2x32xf32>
    %284 = tpu.matmul %281, %283, %cst_131 {dimension_numbers = #tpu.dot_dimension_numbers<[1], [0], [0], [1], [0, 0, 1, 1], [], []>} : vector<2x32xbf16>, vector<32x32xbf16>, vector<2x32xf32> -> vector<2x32xf32>
    %285 = arith.addf %277, %284 : vector<2x32xf32>
    %286 = vector.extract_strided_slice %227 {offsets = [7, 0], sizes = [1, 32], strides = [1, 1]} : vector<16x32xf32> to vector<1x32xf32>
    %287 = vector.extract_strided_slice %227 {offsets = [15, 0], sizes = [1, 32], strides = [1, 1]} : vector<16x32xf32> to vector<1x32xf32>
    %288 = tpu.concatenate %286, %287 in 0 : vector<1x32xf32>, vector<1x32xf32> -> vector<2x32xf32>
    %289 = arith.truncf %288 : vector<2x32xf32> to vector<2x32xbf16>
    %c7 = arith.constant 7 : index
    %c0_132 = arith.constant 0 : index
    %c0_133 = arith.constant 0 : index
    %290 = vector.load %arg14[%c7, %c0_132, %c0_133] : memref<8x32x32xbf16, #tpu.memory_space<vmem>>, vector<1x32x32xbf16>
    %291 = vector.shape_cast %290 : vector<1x32x32xbf16> to vector<32x32xbf16>
    %cst_134 = arith.constant dense<0.000000e+00> : vector<2x32xf32>
    %292 = tpu.matmul %289, %291, %cst_134 {dimension_numbers = #tpu.dot_dimension_numbers<[1], [0], [0], [1], [0, 0, 1, 1], [], []>} : vector<2x32xbf16>, vector<32x32xbf16>, vector<2x32xf32> -> vector<2x32xf32>
    %293 = arith.addf %285, %292 : vector<2x32xf32>
    %c0_135 = arith.constant 0 : index
    %c0_136 = arith.constant 0 : index
    %294 = vector.load %arg16[%c0_135, %c0_136] : memref<2x32xf32, #tpu.memory_space<vmem>>, vector<2x32xf32>
    tpu.vector_store %arg16[%c0_135, %c0_136], %293 {strides = array<i32>} : memref<2x32xf32, #tpu.memory_space<vmem>>, vector<2x32xf32>,
    return
  }
}

</mosaic_0001>

<llo_original>
// kernel: _lambda_.1
$region0: #{_lambda_.1}
  #allocation0 [shape = 'u32[]', space=smem, size = 0x4, offset = 0x4, fixed_abs, tag = 'smem constant byte address 0x4 - core index']
  #allocation1 [shape = 'u32[144,128]{1,0:T(1,128)}', space=vmem, size = 0x12000, scoped, tag = 'internal scratch']
  %s0 = inlined_call_operand.hbm [shape: f32[16,32], index: 0, kind: input, shape index: {}]
  %s1 = inlined_call_operand.hbm [shape: bf16[32,32], index: 1, kind: input, shape index: {}]
  %s2 = inlined_call_operand.hbm [shape: bf16[2,32,384], index: 2, kind: input, shape index: {}]
  %s3 = inlined_call_operand.vmem [shape: f32[2,1,384], index: 3, kind: input, shape index: {}]
  %s4 = inlined_call_operand.hbm [shape: bf16[2,32,32], index: 4, kind: input, shape index: {}]
  %s5 = inlined_call_operand.vmem [shape: f32[2,1,32], index: 5, kind: input, shape index: {}]
  %s6 = inlined_call_operand.vmem [shape: f32[2,1,32], index: 6, kind: input, shape index: {}, may-alias: {6,12}]
  %s7 = inlined_call_operand.vmem [shape: f32[2,1,32], index: 7, kind: input, shape index: {}, may-alias: {7,13}]
  %s8 = inlined_call_operand.hbm [shape: bf16[2,32,2048], index: 8, kind: input, shape index: {}]
  %s9 = inlined_call_operand.hbm [shape: f32[2,1,2048], index: 9, kind: input, shape index: {}]
  %s10 = inlined_call_operand.hbm [shape: bf16[2,2048,32], index: 10, kind: input, shape index: {}]
  %s11 = inlined_call_operand.vmem [shape: f32[2,1,32], index: 11, kind: input, shape index: {}]
  %s12 = inlined_call_operand.vmem [shape: f32[2,1,32], index: 12, kind: input, shape index: {}, may-alias: {6,12}]
  %s13 = inlined_call_operand.vmem [shape: f32[2,1,32], index: 13, kind: input, shape index: {}, may-alias: {7,13}]
  %s14 = inlined_call_operand.hbm [shape: bf16[8,32,32], index: 14, kind: input, shape index: {}]
  %s15 = inlined_call_operand.vmem [shape: f32[1,32], index: 15, kind: input, shape index: {}]
  %s16 = inlined_call_operand.hbm [shape: f32[2,32], index: 16, kind: output, shape index: {}]
  %s17 = sld [smem:[#allocation0]]
  $region106: #{_lambda_.1} parent=0
    _
  %s19 = ssub.s32 1, %s17
  %s20 = scalar_select 0, %s19, %s17
  $region1: #{_lambda_.1} parent=0
    #allocation2 [shape = 'u8[8192]{0}', space=vmem, size = 0x2000, scoped, tag = 'input window, operand 0, single buffered']
    #allocation3 [shape = 's32[1]{0}', space=sflag, size = 0x4, scoped, tag = 'scoped memory for _lambda_.1']
    #allocation4 [shape = 's32[1]{0}', space=sflag, size = 0x4, scoped, tag = 'scoped memory for _lambda_.1']
    #allocation5 [shape = 'u8[8192]{0}', space=vmem, size = 0x2000, scoped, tag = 'input window, operand 1, single buffered']
    #allocation6 [shape = 's32[1]{0}', space=sflag, size = 0x4, scoped, tag = 'scoped memory for _lambda_.1']
    #allocation7 [shape = 'u8[49152]{0}', space=vmem, size = 0xc000, scoped, tag = 'input window, operand 2, single buffered']
    #allocation8 [shape = 'u8[16384]{0}', space=vmem, size = 0x4000, scoped, tag = 'input window, operand 4, single buffered']
    #allocation9 [shape = 's32[1]{0}', space=sflag, size = 0x4, scoped, tag = 'scoped memory for _lambda_.1']
    #allocation10 [shape = 'u8[262144]{0}', space=vmem, size = 0x40000, scoped, tag = 'input window, operand 8, single buffered']
    #allocation11 [shape = 'u8[16384]{0}', space=vmem, size = 0x4000, scoped, tag = 'input window, operand 9, single buffered']
    #allocation12 [shape = 's32[1]{0}', space=sflag, size = 0x4, scoped, tag = 'scoped memory for _lambda_.1']
    #allocation13 [shape = 'u8[1048576]{0}', space=vmem, size = 0x100000, scoped, tag = 'input window, operand 10, single buffered']
    #allocation14 [shape = 'u8[65536]{0}', space=vmem, size = 0x10000, scoped, tag = 'input window, operand 14, single buffered']
    #allocation15 [shape = 's32[1]{0}', space=sflag, size = 0x4, scoped, tag = 'scoped memory for _lambda_.1']
    #allocation16 [shape = 'u8[1024]{0}', space=vmem, size = 0x400, scoped, tag = 'output window, operand 0, single buffered']
    %21 = vsyncpa [#allocation3], 0
    %22 = vsyncpa [#allocation6], 0
    %23 = vsyncpa [#allocation9], 0
    %24 = vsyncpa [#allocation12], 0
    %25 = vsyncpa [#allocation15], 0
    %26 = vsyncpa [#allocation4], 0
    // Predicated region
    $region2: #{_lambda_.1} parent=1 // pred_check
      _
    $region3: #{_lambda_.1} parent=1 // pred_check_branch
      %28 = sbr.rel (0) target = $region5
    $region4: #{_lambda_.1} parent=1 // pred_region
      %s30 = ssub.s32 256, 256
      %31 = vsyncadd [#allocation3], %s30
      %s32 = sshll.u32 [#allocation2], 4
      %s33 = int_to_ptr.vmem [resolvable:$true] %s32
      %38 = dma.hbm_to_vmem [thread:$0]  %s0, 256, %s33, [#allocation3], 128, 128, 8
    $region5: #{_lambda_.1} parent=1 // pred_fallthru
      _
    // Predicated region
    $region6: #{_lambda_.1} parent=1 // pred_check
      _
    $region7: #{_lambda_.1} parent=1 // pred_check_branch
      %40 = sbr.rel (0) target = $region9
    $region8: #{_lambda_.1} parent=1 // pred_region
      %s42 = ssub.s32 256, 256
      %43 = vsyncadd [#allocation6], %s42
      %s44 = sshll.u32 [#allocation5], 4
      %s45 = int_to_ptr.vmem [resolvable:$true] %s44
      %50 = dma.hbm_to_vmem [thread:$0]  %s1, 256, %s45, [#allocation6], 64, 64, 4
    $region9: #{_lambda_.1} parent=1 // pred_fallthru
      _
    // Predicated region
    $region10: #{_lambda_.1} parent=1 // pred_check
      _
    $region11: #{_lambda_.1} parent=1 // pred_check_branch
      %52 = sbr.rel (0) target = $region13
    $region12: #{_lambda_.1} parent=1 // pred_region
      %s54 = ssub.s32 1536, 1536
      %55 = vsyncadd [#allocation6], %s54
      %s56 = sshll.u32 [#allocation7], 4
      %s57 = int_to_ptr.vmem [resolvable:$true] %s56
      %62 = dma.hbm_to_vmem [thread:$0]  %s2, 1536, %s57, [#allocation6], 192, 192, 12
    $region13: #{_lambda_.1} parent=1 // pred_fallthru
      _
    // Predicated region
    $region14: #{_lambda_.1} parent=1 // pred_check
      _
    $region15: #{_lambda_.1} parent=1 // pred_check_branch
      %64 = sbr.rel (0) target = $region17
    $region16: #{_lambda_.1} parent=1 // pred_region
      _
    $region17: #{_lambda_.1} parent=1 // pred_fallthru
      _
    // Predicated region
    $region18: #{_lambda_.1} parent=1 // pred_check
      _
    $region19: #{_lambda_.1} parent=1 // pred_check_branch
      %66 = sbr.rel (0) target = $region21
    $region20: #{_lambda_.1} parent=1 // pred_region
      %s68 = ssub.s32 512, 512
      %69 = vsyncadd [#allocation9], %s68
      %s70 = sshll.u32 [#allocation8], 4
      %s71 = int_to_ptr.vmem [resolvable:$true] %s70
      %76 = dma.hbm_to_vmem [thread:$0]  %s4, 512, %s71, [#allocation9], 64, 64, 4
    $region21: #{_lambda_.1} parent=1 // pred_fallthru
      _
    // Predicated region
    $region22: #{_lambda_.1} parent=1 // pred_check
      _
    $region23: #{_lambda_.1} parent=1 // pred_check_branch
      %78 = sbr.rel (0) target = $region25
    $region24: #{_lambda_.1} parent=1 // pred_region
      _
    $region25: #{_lambda_.1} parent=1 // pred_fallthru
      _
    // Predicated region
    $region26: #{_lambda_.1} parent=1 // pred_check
      _
    $region27: #{_lambda_.1} parent=1 // pred_check_branch
      %80 = sbr.rel (0) target = $region29
    $region28: #{_lambda_.1} parent=1 // pred_region
      _
    $region29: #{_lambda_.1} parent=1 // pred_fallthru
      _
    // Predicated region
    $region30: #{_lambda_.1} parent=1 // pred_check
      _
    $region31: #{_lambda_.1} parent=1 // pred_check_branch
      %82 = sbr.rel (0) target = $region33
    $region32: #{_lambda_.1} parent=1 // pred_region
      _
    $region33: #{_lambda_.1} parent=1 // pred_fallthru
      _
    // Predicated region
    $region34: #{_lambda_.1} parent=1 // pred_check
      _
    $region35: #{_lambda_.1} parent=1 // pred_check_branch
      %84 = sbr.rel (0) target = $region37
    $region36: #{_lambda_.1} parent=1 // pred_region
      %s86 = ssub.s32 8192, 8192
      %87 = vsyncadd [#allocation9], %s86
      %s88 = sshll.u32 [#allocation10], 4
      %s89 = int_to_ptr.vmem [resolvable:$true] %s88
      %94 = dma.hbm_to_vmem [thread:$0]  %s8, 8192, %s89, [#allocation9], 1024, 1024, 64
    $region37: #{_lambda_.1} parent=1 // pred_fallthru
      _
    // Predicated region
    $region38: #{_lambda_.1} parent=1 // pred_check
      _
    $region39: #{_lambda_.1} parent=1 // pred_check_branch
      %96 = sbr.rel (0) target = $region41
    $region40: #{_lambda_.1} parent=1 // pred_region
      %s98 = ssub.s32 512, 512
      %99 = vsyncadd [#allocation12], %s98
      %s100 = sshll.u32 [#allocation11], 4
      %s101 = int_to_ptr.vmem [resolvable:$true] %s100
      %106 = dma.hbm_to_vmem [thread:$0]  %s9, 512, %s101, [#allocation12], 256, 256, 16
    $region41: #{_lambda_.1} parent=1 // pred_fallthru
      _
    // Predicated region
    $region42: #{_lambda_.1} parent=1 // pred_check
      _
    $region43: #{_lambda_.1} parent=1 // pred_check_branch
      %108 = sbr.rel (0) target = $region45
    $region44: #{_lambda_.1} parent=1 // pred_region
      %s110 = ssub.s32 32768, 32768
      %111 = vsyncadd [#allocation12], %s110
      %s112 = sshll.u32 [#allocation13], 4
      %s113 = int_to_ptr.vmem [resolvable:$true] %s112
      %118 = dma.hbm_to_vmem [thread:$0]  %s10, 32768, %s113, [#allocation12], 64, 64, 4
    $region45: #{_lambda_.1} parent=1 // pred_fallthru
      _
    // Predicated region
    $region46: #{_lambda_.1} parent=1 // pred_check
      _
    $region47: #{_lambda_.1} parent=1 // pred_check_branch
      %120 = sbr.rel (0) target = $region49
    $region48: #{_lambda_.1} parent=1 // pred_region
      _
    $region49: #{_lambda_.1} parent=1 // pred_fallthru
      _
    // Predicated region
    $region50: #{_lambda_.1} parent=1 // pred_check
      _
    $region51: #{_lambda_.1} parent=1 // pred_check_branch
      %122 = sbr.rel (0) target = $region53
    $region52: #{_lambda_.1} parent=1 // pred_region
      _
    $region53: #{_lambda_.1} parent=1 // pred_fallthru
      _
    // Predicated region
    $region54: #{_lambda_.1} parent=1 // pred_check
      _
    $region55: #{_lambda_.1} parent=1 // pred_check_branch
      %124 = sbr.rel (0) target = $region57
    $region56: #{_lambda_.1} parent=1 // pred_region
      _
    $region57: #{_lambda_.1} parent=1 // pred_fallthru
      _
    // Predicated region
    $region58: #{_lambda_.1} parent=1 // pred_check
      _
    $region59: #{_lambda_.1} parent=1 // pred_check_branch
      %126 = sbr.rel (0) target = $region61
    $region60: #{_lambda_.1} parent=1 // pred_region
      %s128 = ssub.s32 2048, 2048
      %129 = vsyncadd [#allocation15], %s128
      %s130 = sshll.u32 [#allocation14], 4
      %s131 = int_to_ptr.vmem [resolvable:$true] %s130
      %136 = dma.hbm_to_vmem [thread:$0]  %s14, 2048, %s131, [#allocation15], 64, 64, 4
    $region61: #{_lambda_.1} parent=1 // pred_fallthru
      _
    // Predicated region
    $region62: #{_lambda_.1} parent=1 // pred_check
      _
    $region63: #{_lambda_.1} parent=1 // pred_check_branch
      %138 = sbr.rel (0) target = $region65
    $region64: #{_lambda_.1} parent=1 // pred_region
      _
    $region65: #{_lambda_.1} parent=1 // pred_fallthru
      _
    // Predicated region
    $region66: #{_lambda_.1} parent=1 // pred_check
      _
    $region67: #{_lambda_.1} parent=1 // pred_check_branch
      %140 = sbr.rel (0) target = $region69
    $region68: #{_lambda_.1} parent=1 // pred_region
      %141 = dma.done [#allocation3], 256
    $region69: #{_lambda_.1} parent=1 // pred_fallthru
      _
    // Predicated region
    $region70: #{_lambda_.1} parent=1 // pred_check
      _
    $region71: #{_lambda_.1} parent=1 // pred_check_branch
      %143 = sbr.rel (0) target = $region73
    $region72: #{_lambda_.1} parent=1 // pred_region
      %144 = dma.done [#allocation6], 256
    $region73: #{_lambda_.1} parent=1 // pred_fallthru
      _
    // Predicated region
    $region74: #{_lambda_.1} parent=1 // pred_check
      _
    $region75: #{_lambda_.1} parent=1 // pred_check_branch
      %146 = sbr.rel (0) target = $region77
    $region76: #{_lambda_.1} parent=1 // pred_region
      %147 = dma.done [#allocation6], 1536
    $region77: #{_lambda_.1} parent=1 // pred_fallthru
      _
    // Predicated region
    $region78: #{_lambda_.1} parent=1 // pred_check
      _
    $region79: #{_lambda_.1} parent=1 // pred_check_branch
      %149 = sbr.rel (0) target = $region81
    $region80: #{_lambda_.1} parent=1 // pred_region
      %150 = dma.done [#allocation9], 512
    $region81: #{_lambda_.1} parent=1 // pred_fallthru
      _
    // Predicated region
    $region82: #{_lambda_.1} parent=1 // pred_check
      _
    $region83: #{_lambda_.1} parent=1 // pred_check_branch
      %152 = sbr.rel (0) target = $region85
    $region84: #{_lambda_.1} parent=1 // pred_region
      %153 = dma.done [#allocation9], 8192
    $region85: #{_lambda_.1} parent=1 // pred_fallthru
      _
    // Predicated region
    $region86: #{_lambda_.1} parent=1 // pred_check
      _
    $region87: #{_lambda_.1} parent=1 // pred_check_branch
      %155 = sbr.rel (0) target = $region89
    $region88: #{_lambda_.1} parent=1 // pred_region
      %156 = dma.done [#allocation12], 512
    $region89: #{_lambda_.1} parent=1 // pred_fallthru
      _
    // Predicated region
    $region90: #{_lambda_.1} parent=1 // pred_check
      _
    $region91: #{_lambda_.1} parent=1 // pred_check_branch
      %158 = sbr.rel (0) target = $region93
    $region92: #{_lambda_.1} parent=1 // pred_region
      %159 = dma.done [#allocation12], 32768
    $region93: #{_lambda_.1} parent=1 // pred_fallthru
      _
    // Predicated region
    $region94: #{_lambda_.1} parent=1 // pred_check
      _
    $region95: #{_lambda_.1} parent=1 // pred_check_branch
      %161 = sbr.rel (0) target = $region97
    $region96: #{_lambda_.1} parent=1 // pred_region
      %162 = dma.done [#allocation15], 2048
    $region97: #{_lambda_.1} parent=1 // pred_fallthru
      _
    %v164 = vld [vmem:[#allocation5] sm:$0xf]
    %v165 = vld [vmem:[#allocation5 + $0x4] sm:$0xf]
    %v166 = vld [vmem:[#allocation5 + $0x8] sm:$0xf]
    %v167 = vld [vmem:[#allocation5 + $0xc] sm:$0xf]
    %v168 = vld [vmem:[#allocation2] sm:$0xff]
    %v169 = vld [vmem:[#allocation2 + $0x8] sm:$0xff]
    %v170 = vpack.c.bf16 %v169, %v168
    %v171 = vld [vmem:[#allocation7] sm:$0xff]
    %v172 = vld [vmem:[#allocation7 + $0x8] sm:$0xf]
    %v173 = vld [vmem:[#allocation7 + $0xc] sm:$0xff]
    %v174 = vld [vmem:[#allocation7 + $0x14] sm:$0xf]
    %v175 = vld [vmem:[#allocation7 + $0x18] sm:$0xff]
    %v176 = vld [vmem:[#allocation7 + $0x20] sm:$0xf]
    %v177 = vld [vmem:[#allocation7 + $0x24] sm:$0xff]
    %v178 = vld [vmem:[#allocation7 + $0x2c] sm:$0xf]
    %v179 = vld [vmem:[%s3] sm:$0x7]
    %v181 = vlaneseq
    %v182 = vshrl.u32 %v181, 7
    %v183 = vsub.s32 0, %v182
    %v184 = vrot.slane %v179, %v183
    %v185 = vlaneseq
    %v186 = vshrl.u32 %v185, 7
    %v187 = vsub.s32 1, %v186
    %v188 = vrot.slane %v179, %v187
    %v189 = vlaneseq
    %v190 = vshrl.u32 %v189, 7
    %v191 = vsub.s32 2, %v190
    %v192 = vrot.slane %v179, %v191
    %v204 = vunpack.c.l.b16 %v171
    %v205 = vunpack.c.h.b16 %v171
    %v206 = vunpack.c.l.b16 %v172
    %v207 = vunpack.c.l.b16 %v173
    %v208 = vunpack.c.h.b16 %v173
    %v209 = vunpack.c.l.b16 %v174
    %v210 = vunpack.c.l.b16 %v175
    %v211 = vunpack.c.h.b16 %v175
    %v212 = vunpack.c.l.b16 %v176
    %v213 = vunpack.c.l.b16 %v177
    %v214 = vunpack.c.h.b16 %v177
    %v215 = vunpack.c.l.b16 %v178
    %v216 = vpack.c.b16 %v207, %v204
    %v217 = vpack.c.b16 %v208, %v205
    %v218 = vpack.c.b16 %v209, %v206
    %v219 = vpack.c.b16 %v213, %v210
    %v220 = vpack.c.b16 %v214, %v211
    %v221 = vpack.c.b16 %v215, %v212
    %vm228 = vcmask 261120
    %v230 = vsel %vm228, %v170, 0
    %232 = vmatprep.subr.bf16.mxu0 0
    %233 = vmatpush1.bf16.msra.mxu0 0
    %234 = vmatprep.subr.bf16.mxu0 0
    %235 = vmatpush1.bf16.msra.mxu0 0
    %236 = vmatprep.subr.bf16.mxu0 0
    %237 = vmatpush1.bf16.msra.mxu0 0
    %238 = vmatprep.subr.bf16.mxu0 0
    %239 = vmatpush1.bf16.msra.mxu0 0
    %240 = vmatprep.subr.bf16.mxu0 0
    %241 = vmatpush1.bf16.msra.mxu0 0
    %242 = vmatprep.subr.bf16.mxu0 0
    %243 = vmatpush1.bf16.msra.mxu0 0
    %244 = vmatprep.subr.bf16.mxu0 %v220
    %245 = vmatpush1.bf16.msra.mxu0 %v219
    %246 = vmatprep.subr.bf16.mxu0 %v217
    %247 = vmatpush1.bf16.msra.mxu0 %v216
    %248 = vmatprep.subr.bf16.mxu0 0
    %249 = vmatpush2.bf16.msra.mxu0 0
    %250 = vmatprep.subr.bf16.mxu0 0
    %251 = vmatpush2.bf16.msra.mxu0 0
    %252 = vmatprep.subr.bf16.mxu0 0
    %253 = vmatpush2.bf16.msra.mxu0 0
    %254 = vmatprep.subr.bf16.mxu0 0
    %255 = vmatpush2.bf16.msra.mxu0 0
    %256 = vmatprep.subr.bf16.mxu0 0
    %257 = vmatpush2.bf16.msra.mxu0 0
    %258 = vmatprep.subr.bf16.mxu0 0
    %259 = vmatpush2.bf16.msra.mxu0 0
    %260 = vmatprep.subr.bf16.mxu0 0
    %261 = vmatpush2.bf16.msra.mxu0 0
    %262 = vmatprep.subr.bf16.mxu0 0
    %263 = vmatpush2.bf16.msra.mxu0 0
    %264 = vmatprep.mubr.bf16.mxu0 0
    %265 = vmatmul.mubr.bf16.gmra.mxu0 %v230
    %v266 = vpop.f32.mrf.mxu0
    %v267 = vadd.f32 %v184, %v266
    %v268 = vpop.f32.mrf.mxu0
    %v269 = vadd.f32 %v188, %v268
    %v270 = vpop.f32.mrf.mxu0
    %v271 = vadd.f32 %v184, %v270
    %v272 = vpop.f32.mrf.mxu0
    %v273 = vadd.f32 %v188, %v272
    %274 = vdwg.mxu0
    %275 = vmatprep.subr.bf16.mxu0 0
    %276 = vmatpush1.bf16.msra.mxu0 0
    %277 = vmatprep.subr.bf16.mxu0 0
    %278 = vmatpush1.bf16.msra.mxu0 0
    %279 = vmatprep.subr.bf16.mxu0 0
    %280 = vmatpush1.bf16.msra.mxu0 0
    %281 = vmatprep.subr.bf16.mxu0 0
    %282 = vmatpush1.bf16.msra.mxu0 0
    %283 = vmatprep.subr.bf16.mxu0 0
    %284 = vmatpush1.bf16.msra.mxu0 0
    %285 = vmatprep.subr.bf16.mxu0 0
    %286 = vmatpush1.bf16.msra.mxu0 0
    %287 = vmatprep.subr.bf16.mxu0 0
    %288 = vmatpush1.bf16.msra.mxu0 %v221
    %289 = vmatprep.subr.bf16.mxu0 0
    %290 = vmatpush1.bf16.msra.mxu0 %v218
    %291 = vmatprep.subr.bf16.mxu0 0
    %292 = vmatpush2.bf16.msra.mxu0 0
    %293 = vmatprep.subr.bf16.mxu0 0
    %294 = vmatpush2.bf16.msra.mxu0 0
    %295 = vmatprep.subr.bf16.mxu0 0
    %296 = vmatpush2.bf16.msra.mxu0 0
    %297 = vmatprep.subr.bf16.mxu0 0
    %298 = vmatpush2.bf16.msra.mxu0 0
    %299 = vmatprep.subr.bf16.mxu0 0
    %300 = vmatpush2.bf16.msra.mxu0 0
    %301 = vmatprep.subr.bf16.mxu0 0
    %302 = vmatpush2.bf16.msra.mxu0 0
    %303 = vmatprep.subr.bf16.mxu0 0
    %304 = vmatpush2.bf16.msra.mxu0 0
    %305 = vmatprep.subr.bf16.mxu0 0
    %306 = vmatpush2.bf16.msra.mxu0 0
    %307 = vmatprep.mubr.bf16.mxu0 0
    %308 = vmatmul.mubr.bf16.gmra.mxu0 %v230
    %v309 = vpop.f32.mrf.mxu0
    %v310 = vadd.f32 %v192, %v309
    %v311 = vpop.f32.mrf.mxu0
    %v312 = vpop.f32.mrf.mxu0
    %v313 = vadd.f32 %v192, %v312
    %v314 = vpop.f32.mrf.mxu0
    %315 = vdwg.mxu0
    %v316 = vmul.f32 %v267, %v269
    %v317 = vmul.f32 %v271, %v269
    %v318 = vpack.c.bf16 %v317, %v316
    %v323 = vunpack.c.l.b16 %v164
    %v324 = vunpack.c.l.b16 %v165
    %v325 = vunpack.c.l.b16 %v166
    %v326 = vunpack.c.l.b16 %v167
    %v327 = vpack.c.b16 %v324, %v323
    %v328 = vpack.c.b16 %v326, %v325
    %v332 = vsel %vm228, %v318, 0
    %334 = vmatprep.subr.bf16.mxu0 0
    %335 = vmatpush1.bf16.msra.mxu0 0
    %336 = vmatprep.subr.bf16.mxu0 0
    %337 = vmatpush1.bf16.msra.mxu0 0
    %338 = vmatprep.subr.bf16.mxu0 0
    %339 = vmatpush1.bf16.msra.mxu0 0
    %340 = vmatprep.subr.bf16.mxu0 0
    %341 = vmatpush1.bf16.msra.mxu0 0
    %342 = vmatprep.subr.bf16.mxu0 0
    %343 = vmatpush1.bf16.msra.mxu0 0
    %344 = vmatprep.subr.bf16.mxu0 0
    %345 = vmatpush1.bf16.msra.mxu0 0
    %346 = vmatprep.subr.bf16.mxu0 0
    %347 = vmatpush1.bf16.msra.mxu0 %v328
    %348 = vmatprep.subr.bf16.mxu0 0
    %349 = vmatpush1.bf16.msra.mxu0 %v327
    %350 = vmatprep.subr.bf16.mxu0 0
    %351 = vmatpush2.bf16.msra.mxu0 0
    %352 = vmatprep.subr.bf16.mxu0 0
    %353 = vmatpush2.bf16.msra.mxu0 0
    %354 = vmatprep.subr.bf16.mxu0 0
    %355 = vmatpush2.bf16.msra.mxu0 0
    %356 = vmatprep.subr.bf16.mxu0 0
    %357 = vmatpush2.bf16.msra.mxu0 0
    %358 = vmatprep.subr.bf16.mxu0 0
    %359 = vmatpush2.bf16.msra.mxu0 0
    %360 = vmatprep.subr.bf16.mxu0 0
    %361 = vmatpush2.bf16.msra.mxu0 0
    %362 = vmatprep.subr.bf16.mxu0 0
    %363 = vmatpush2.bf16.msra.mxu0 0
    %364 = vmatprep.subr.bf16.mxu0 0
    %365 = vmatpush2.bf16.msra.mxu0 0
    %366 = vmatprep.mubr.bf16.mxu0 0
    %367 = vmatmul.mubr.bf16.gmra.mxu0 %v332
    %v368 = vpop.f32.mrf.mxu0
    %v369 = vadd.f32 0.0, %v368
    %v370 = vpop.f32.mrf.mxu0
    %v371 = vpop.f32.mrf.mxu0
    %v372 = vadd.f32 0.0, %v371
    %v373 = vpop.f32.mrf.mxu0
    %374 = vdwg.mxu0
    %v375 = vmul.f32 %v267, %v273
    %v376 = vmul.f32 %v271, %v273
    %v377 = vpack.c.bf16 %v376, %v375
    %v379 = vsel %vm228, %v377, 0
    %381 = vmatprep.subr.bf16.mxu0 0
    %382 = vmatpush1.bf16.msra.mxu0 0
    %383 = vmatprep.subr.bf16.mxu0 0
    %384 = vmatpush1.bf16.msra.mxu0 0
    %385 = vmatprep.subr.bf16.mxu0 0
    %386 = vmatpush1.bf16.msra.mxu0 0
    %387 = vmatprep.subr.bf16.mxu0 0
    %388 = vmatpush1.bf16.msra.mxu0 0
    %389 = vmatprep.subr.bf16.mxu0 0
    %390 = vmatpush1.bf16.msra.mxu0 0
    %391 = vmatprep.subr.bf16.mxu0 0
    %392 = vmatpush1.bf16.msra.mxu0 0
    %393 = vmatprep.subr.bf16.mxu0 0
    %394 = vmatpush1.bf16.msra.mxu0 %v328
    %395 = vmatprep.subr.bf16.mxu0 0
    %396 = vmatpush1.bf16.msra.mxu0 %v327
    %397 = vmatprep.subr.bf16.mxu0 0
    %398 = vmatpush2.bf16.msra.mxu0 0
    %399 = vmatprep.subr.bf16.mxu0 0
    %400 = vmatpush2.bf16.msra.mxu0 0
    %401 = vmatprep.subr.bf16.mxu0 0
    %402 = vmatpush2.bf16.msra.mxu0 0
    %403 = vmatprep.subr.bf16.mxu0 0
    %404 = vmatpush2.bf16.msra.mxu0 0
    %405 = vmatprep.subr.bf16.mxu0 0
    %406 = vmatpush2.bf16.msra.mxu0 0
    %407 = vmatprep.subr.bf16.mxu0 0
    %408 = vmatpush2.bf16.msra.mxu0 0
    %409 = vmatprep.subr.bf16.mxu0 0
    %410 = vmatpush2.bf16.msra.mxu0 0
    %411 = vmatprep.subr.bf16.mxu0 0
    %412 = vmatpush2.bf16.msra.mxu0 0
    %413 = vmatprep.mubr.bf16.mxu0 0
    %414 = vmatmul.mubr.bf16.gmra.mxu0 %v379
    %v415 = vpop.f32.mrf.mxu0
    %v416 = vadd.f32 0.0, %v415
    %v417 = vpop.f32.mrf.mxu0
    %v418 = vpop.f32.mrf.mxu0
    %v419 = vadd.f32 0.0, %v418
    %v420 = vpop.f32.mrf.mxu0
    %421 = vdwg.mxu0
    %v422 = vmax.f32 %v369, %v416
    %v423 = vmax.f32 %v372, %v419
    %v424 = vsub.f32 %v369, %v422
    %v425 = vsub.f32 %v372, %v423
    %v426 = vmul.f32 %v424, 1.442695
    %v427 = vpow.pop %v426
    %v428 = vmul.f32 %v425, 1.442695
    %v429 = vpow.pop %v428
    %v430 = vsub.f32 %v416, %v422
    %v431 = vsub.f32 %v419, %v423
    %v432 = vmul.f32 %v430, 1.442695
    %v433 = vpow.pop %v432
    %v434 = vmul.f32 %v431, 1.442695
    %v435 = vpow.pop %v434
    %v436 = vadd.f32 %v427, %v433
    %v437 = vadd.f32 %v429, %v435
    %v438 = vrcp.pop %v436
    %v439 = vrcp.pop %v437
    %v440 = vmul.f32 %v427, %v438
    %v441 = vmul.f32 %v429, %v439
    %v442 = vmul.f32 %v440, %v310
    %v443 = vmul.f32 %v441, %v310
    %v444 = vmul.f32 %v433, %v438
    %v445 = vmul.f32 %v435, %v439
    %v446 = vmul.f32 %v444, %v313
    %v447 = vmul.f32 %v445, %v313
    %v448 = vadd.f32 %v442, %v446
    %v449 = vadd.f32 %v443, %v447
    %v450 = vpack.c.bf16 %v449, %v448
    %v451 = vld [vmem:[#allocation8] sm:$0xf]
    %v452 = vld [vmem:[#allocation8 + $0x4] sm:$0xf]
    %v453 = vld [vmem:[#allocation8 + $0x8] sm:$0xf]
    %v454 = vld [vmem:[#allocation8 + $0xc] sm:$0xf]
    %v455 = vld [vmem:[%s5] sm:$0x1]
    %v457 = vlaneseq
    %v458 = vshrl.u32 %v457, 7
    %v459 = vsub.s32 0, %v458
    %v460 = vrot.slane %v455, %v459
    %v466 = vunpack.c.l.b16 %v451
    %v467 = vunpack.c.l.b16 %v452
    %v468 = vunpack.c.l.b16 %v453
    %v469 = vunpack.c.l.b16 %v454
    %v470 = vpack.c.b16 %v467, %v466
    %v471 = vpack.c.b16 %v469, %v468
    %v475 = vsel %vm228, %v450, 0
    %477 = vmatprep.subr.bf16.mxu0 0
    %478 = vmatpush1.bf16.msra.mxu0 0
    %479 = vmatprep.subr.bf16.mxu0 0
    %480 = vmatpush1.bf16.msra.mxu0 0
    %481 = vmatprep.subr.bf16.mxu0 0
    %482 = vmatpush1.bf16.msra.mxu0 0
    %483 = vmatprep.subr.bf16.mxu0 0
    %484 = vmatpush1.bf16.msra.mxu0 0
    %485 = vmatprep.subr.bf16.mxu0 0
    %486 = vmatpush1.bf16.msra.mxu0 0
    %487 = vmatprep.subr.bf16.mxu0 0
    %488 = vmatpush1.bf16.msra.mxu0 0
    %489 = vmatprep.subr.bf16.mxu0 0
    %490 = vmatpush1.bf16.msra.mxu0 %v471
    %491 = vmatprep.subr.bf16.mxu0 0
    %492 = vmatpush1.bf16.msra.mxu0 %v470
    %493 = vmatprep.subr.bf16.mxu0 0
    %494 = vmatpush2.bf16.msra.mxu0 0
    %495 = vmatprep.subr.bf16.mxu0 0
    %496 = vmatpush2.bf16.msra.mxu0 0
    %497 = vmatprep.subr.bf16.mxu0 0
    %498 = vmatpush2.bf16.msra.mxu0 0
    %499 = vmatprep.subr.bf16.mxu0 0
    %500 = vmatpush2.bf16.msra.mxu0 0
    %501 = vmatprep.subr.bf16.mxu0 0
    %502 = vmatpush2.bf16.msra.mxu0 0
    %503 = vmatprep.subr.bf16.mxu0 0
    %504 = vmatpush2.bf16.msra.mxu0 0
    %505 = vmatprep.subr.bf16.mxu0 0
    %506 = vmatpush2.bf16.msra.mxu0 0
    %507 = vmatprep.subr.bf16.mxu0 0
    %508 = vmatpush2.bf16.msra.mxu0 0
    %509 = vmatprep.mubr.bf16.mxu0 0
    %510 = vmatmul.mubr.bf16.gmra.mxu0 %v475
    %v511 = vpop.f32.mrf.mxu0
    %v512 = vadd.f32 %v460, %v511
    %v513 = vpop.f32.mrf.mxu0
    %v514 = vpop.f32.mrf.mxu0
    %v515 = vadd.f32 %v460, %v514
    %v516 = vpop.f32.mrf.mxu0
    %517 = vdwg.mxu0
    %v518 = vadd.f32 %v168, %v512
    %v519 = vadd.f32 %v169, %v515
    %v520 = vld [vmem:[%s6] sm:$0x1]
    %v521 = vld [vmem:[%s7] sm:$0x1]
    %v522 = vsel %vm228, %v518, 0.0
    %523 = vadd.xlane.f32.xlu0 %v522
    %v524 = vpop.xlane.xlu0 %523
    %v525 = vsel %vm228, %v519, 0.0
    %526 = vadd.xlane.f32.xlu0 %v525
    %v527 = vpop.xlane.xlu0 %526
    %v528 = vrcp.pop 32.0
    %v529 = vmul.f32 %v524, %v528
    %v530 = vmul.f32 %v527, %v528
    %v531 = vsub.f32 %v518, %v529
    %v532 = vsub.f32 %v519, %v530
    %v533 = vmul.f32 %v531, %v531
    %v534 = vmul.f32 %v532, %v532
    %v535 = vsel %vm228, %v533, 0.0
    %536 = vadd.xlane.f32.xlu0 %v535
    %v537 = vpop.xlane.xlu0 %536
    %v538 = vsel %vm228, %v534, 0.0
    %539 = vadd.xlane.f32.xlu0 %v538
    %v540 = vpop.xlane.xlu0 %539
    %v541 = vmul.f32 %v537, %v528
    %v542 = vmul.f32 %v540, %v528
    %v543 = vadd.f32 %v541, 1e-05
    %v544 = vadd.f32 %v542, 1e-05
    %v545 = vrsqrt.pop %v543
    %v546 = vrsqrt.pop %v544
    %v547 = vmul.f32 %v531, %v545
    %v548 = vmul.f32 %v532, %v546
    %v550 = vlaneseq
    %v551 = vshrl.u32 %v550, 7
    %v552 = vsub.s32 0, %v551
    %v553 = vrot.slane %v520, %v552
    %v555 = vmul.f32 %v547, %v553
    %v556 = vmul.f32 %v548, %v553
    %v558 = vlaneseq
    %v559 = vshrl.u32 %v558, 7
    %v560 = vsub.s32 0, %v559
    %v561 = vrot.slane %v521, %v560
    %v563 = vadd.f32 %v555, %v561
    %v564 = vadd.f32 %v556, %v561
    %v565 = vpack.c.bf16 %v564, %v563
    %v566 = vld [vmem:[#allocation10] sm:$0xff]
    %v567 = vld [vmem:[#allocation10 + $0x8] sm:$0xff]
    %v568 = vld [vmem:[#allocation10 + $0x10] sm:$0xff]
    %v569 = vld [vmem:[#allocation10 + $0x18] sm:$0xff]
    %v570 = vld [vmem:[#allocation10 + $0x20] sm:$0xff]
    %v571 = vld [vmem:[#allocation10 + $0x28] sm:$0xff]
    %v572 = vld [vmem:[#allocation10 + $0x30] sm:$0xff]
    %v573 = vld [vmem:[#allocation10 + $0x38] sm:$0xff]
    %v574 = vld [vmem:[#allocation10 + $0x40] sm:$0xff]
    %v575 = vld [vmem:[#allocation10 + $0x48] sm:$0xff]
    %v576 = vld [vmem:[#allocation10 + $0x50] sm:$0xff]
    %v577 = vld [vmem:[#allocation10 + $0x58] sm:$0xff]
    %v578 = vld [vmem:[#allocation10 + $0x60] sm:$0xff]
    %v579 = vld [vmem:[#allocation10 + $0x68] sm:$0xff]
    %v580 = vld [vmem:[#allocation10 + $0x70] sm:$0xff]
    %v581 = vld [vmem:[#allocation10 + $0x78] sm:$0xff]
    %v582 = vld [vmem:[#allocation10 + $0x80] sm:$0xff]
    %v583 = vld [vmem:[#allocation10 + $0x88] sm:$0xff]
    %v584 = vld [vmem:[#allocation10 + $0x90] sm:$0xff]
    %v585 = vld [vmem:[#allocation10 + $0x98] sm:$0xff]
    %v586 = vld [vmem:[#allocation10 + $0xa0] sm:$0xff]
    %v587 = vld [vmem:[#allocation10 + $0xa8] sm:$0xff]
    %v588 = vld [vmem:[#allocation10 + $0xb0] sm:$0xff]
    %v589 = vld [vmem:[#allocation10 + $0xb8] sm:$0xff]
    %v590 = vld [vmem:[#allocation10 + $0xc0] sm:$0xff]
    %v591 = vld [vmem:[#allocation10 + $0xc8] sm:$0xff]
    %v592 = vld [vmem:[#allocation10 + $0xd0] sm:$0xff]
    %v593 = vld [vmem:[#allocation10 + $0xd8] sm:$0xff]
    %v594 = vld [vmem:[#allocation10 + $0xe0] sm:$0xff]
    %v595 = vld [vmem:[#allocation10 + $0xe8] sm:$0xff]
    %v596 = vld [vmem:[#allocation10 + $0xf0] sm:$0xff]
    %v597 = vld [vmem:[#allocation10 + $0xf8] sm:$0xff]
    %v598 = vld [vmem:[#allocation11] sm:$0xff]
    %v599 = vld [vmem:[#allocation11 + $0x8] sm:$0xff]
    %v602 = vlaneseq
    %v603 = vshrl.u32 %v602, 7
    %v604 = vsub.s32 0, %v603
    %v605 = vrot.slane %v598, %v604
    %v606 = vlaneseq
    %v607 = vshrl.u32 %v606, 7
    %v608 = vsub.s32 1, %v607
    %v609 = vrot.slane %v598, %v608
    %v610 = vlaneseq
    %v611 = vshrl.u32 %v610, 7
    %v612 = vsub.s32 2, %v611
    %v613 = vrot.slane %v598, %v612
    %v614 = vlaneseq
    %v615 = vshrl.u32 %v614, 7
    %v616 = vsub.s32 3, %v615
    %v617 = vrot.slane %v598, %v616
    %v618 = vlaneseq
    %v619 = vshrl.u32 %v618, 7
    %v620 = vsub.s32 4, %v619
    %v621 = vrot.slane %v598, %v620
    %v622 = vlaneseq
    %v623 = vshrl.u32 %v622, 7
    %v624 = vsub.s32 5, %v623
    %v625 = vrot.slane %v598, %v624
    %v626 = vlaneseq
    %v627 = vshrl.u32 %v626, 7
    %v628 = vsub.s32 6, %v627
    %v629 = vrot.slane %v598, %v628
    %v630 = vlaneseq
    %v631 = vshrl.u32 %v630, 7
    %v632 = vsub.s32 7, %v631
    %v633 = vrot.slane %v598, %v632
    %v634 = vlaneseq
    %v635 = vshrl.u32 %v634, 7
    %v636 = vsub.s32 0, %v635
    %v637 = vrot.slane %v599, %v636
    %v638 = vlaneseq
    %v639 = vshrl.u32 %v638, 7
    %v640 = vsub.s32 1, %v639
    %v641 = vrot.slane %v599, %v640
    %v642 = vlaneseq
    %v643 = vshrl.u32 %v642, 7
    %v644 = vsub.s32 2, %v643
    %v645 = vrot.slane %v599, %v644
    %v646 = vlaneseq
    %v647 = vshrl.u32 %v646, 7
    %v648 = vsub.s32 3, %v647
    %v649 = vrot.slane %v599, %v648
    %v650 = vlaneseq
    %v651 = vshrl.u32 %v650, 7
    %v652 = vsub.s32 4, %v651
    %v653 = vrot.slane %v599, %v652
    %v654 = vlaneseq
    %v655 = vshrl.u32 %v654, 7
    %v656 = vsub.s32 5, %v655
    %v657 = vrot.slane %v599, %v656
    %v658 = vlaneseq
    %v659 = vshrl.u32 %v658, 7
    %v660 = vsub.s32 6, %v659
    %v661 = vrot.slane %v599, %v660
    %v662 = vlaneseq
    %v663 = vshrl.u32 %v662, 7
    %v664 = vsub.s32 7, %v663
    %v665 = vrot.slane %v599, %v664
    %v714 = vunpack.c.l.b16 %v566
    %v715 = vunpack.c.h.b16 %v566
    %v716 = vunpack.c.l.b16 %v567
    %v717 = vunpack.c.h.b16 %v567
    %v718 = vunpack.c.l.b16 %v568
    %v719 = vunpack.c.h.b16 %v568
    %v720 = vunpack.c.l.b16 %v569
    %v721 = vunpack.c.h.b16 %v569
    %v722 = vunpack.c.l.b16 %v570
    %v723 = vunpack.c.h.b16 %v570
    %v724 = vunpack.c.l.b16 %v571
    %v725 = vunpack.c.h.b16 %v571
    %v726 = vunpack.c.l.b16 %v572
    %v727 = vunpack.c.h.b16 %v572
    %v728 = vunpack.c.l.b16 %v573
    %v729 = vunpack.c.h.b16 %v573
    %v730 = vunpack.c.l.b16 %v574
    %v731 = vunpack.c.h.b16 %v574
    %v732 = vunpack.c.l.b16 %v575
    %v733 = vunpack.c.h.b16 %v575
    %v734 = vunpack.c.l.b16 %v576
    %v735 = vunpack.c.h.b16 %v576
    %v736 = vunpack.c.l.b16 %v577
    %v737 = vunpack.c.h.b16 %v577
    %v738 = vunpack.c.l.b16 %v578
    %v739 = vunpack.c.h.b16 %v578
    %v740 = vunpack.c.l.b16 %v579
    %v741 = vunpack.c.h.b16 %v579
    %v742 = vunpack.c.l.b16 %v580
    %v743 = vunpack.c.h.b16 %v580
    %v744 = vunpack.c.l.b16 %v581
    %v745 = vunpack.c.h.b16 %v581
    %v746 = vunpack.c.l.b16 %v582
    %v747 = vunpack.c.h.b16 %v582
    %v748 = vunpack.c.l.b16 %v583
    %v749 = vunpack.c.h.b16 %v583
    %v750 = vunpack.c.l.b16 %v584
    %v751 = vunpack.c.h.b16 %v584
    %v752 = vunpack.c.l.b16 %v585
    %v753 = vunpack.c.h.b16 %v585
    %v754 = vunpack.c.l.b16 %v586
    %v755 = vunpack.c.h.b16 %v586
    %v756 = vunpack.c.l.b16 %v587
    %v757 = vunpack.c.h.b16 %v587
    %v758 = vunpack.c.l.b16 %v588
    %v759 = vunpack.c.h.b16 %v588
    %v760 = vunpack.c.l.b16 %v589
    %v761 = vunpack.c.h.b16 %v589
    %v762 = vunpack.c.l.b16 %v590
    %v763 = vunpack.c.h.b16 %v590
    %v764 = vunpack.c.l.b16 %v591
    %v765 = vunpack.c.h.b16 %v591
    %v766 = vunpack.c.l.b16 %v592
    %v767 = vunpack.c.h.b16 %v592
    %v768 = vunpack.c.l.b16 %v593
    %v769 = vunpack.c.h.b16 %v593
    %v770 = vunpack.c.l.b16 %v594
    %v771 = vunpack.c.h.b16 %v594
    %v772 = vunpack.c.l.b16 %v595
    %v773 = vunpack.c.h.b16 %v595
    %v774 = vunpack.c.l.b16 %v596
    %v775 = vunpack.c.h.b16 %v596
    %v776 = vunpack.c.l.b16 %v597
    %v777 = vunpack.c.h.b16 %v597
    %v778 = vpack.c.b16 %v730, %v714
    %v779 = vpack.c.b16 %v731, %v715
    %v780 = vpack.c.b16 %v732, %v716
    %v781 = vpack.c.b16 %v733, %v717
    %v782 = vpack.c.b16 %v734, %v718
    %v783 = vpack.c.b16 %v735, %v719
    %v784 = vpack.c.b16 %v736, %v720
    %v785 = vpack.c.b16 %v737, %v721
    %v786 = vpack.c.b16 %v738, %v722
    %v787 = vpack.c.b16 %v739, %v723
    %v788 = vpack.c.b16 %v740, %v724
    %v789 = vpack.c.b16 %v741, %v725
    %v790 = vpack.c.b16 %v742, %v726
    %v791 = vpack.c.b16 %v743, %v727
    %v792 = vpack.c.b16 %v744, %v728
    %v793 = vpack.c.b16 %v745, %v729
    %v794 = vpack.c.b16 %v762, %v746
    %v795 = vpack.c.b16 %v763, %v747
    %v796 = vpack.c.b16 %v764, %v748
    %v797 = vpack.c.b16 %v765, %v749
    %v798 = vpack.c.b16 %v766, %v750
    %v799 = vpack.c.b16 %v767, %v751
    %v800 = vpack.c.b16 %v768, %v752
    %v801 = vpack.c.b16 %v769, %v753
    %v802 = vpack.c.b16 %v770, %v754
    %v803 = vpack.c.b16 %v771, %v755
    %v804 = vpack.c.b16 %v772, %v756
    %v805 = vpack.c.b16 %v773, %v757
    %v806 = vpack.c.b16 %v774, %v758
    %v807 = vpack.c.b16 %v775, %v759
    %v808 = vpack.c.b16 %v776, %v760
    %v809 = vpack.c.b16 %v777, %v761
    %v843 = vsel %vm228, %v565, 0
    %845 = vmatprep.subr.bf16.mxu0 0
    %846 = vmatpush1.bf16.msra.mxu0 0
    %847 = vmatprep.subr.bf16.mxu0 0
    %848 = vmatpush1.bf16.msra.mxu0 0
    %849 = vmatprep.subr.bf16.mxu0 0
    %850 = vmatpush1.bf16.msra.mxu0 0
    %851 = vmatprep.subr.bf16.mxu0 0
    %852 = vmatpush1.bf16.msra.mxu0 0
    %853 = vmatprep.subr.bf16.mxu0 0
    %854 = vmatpush1.bf16.msra.mxu0 0
    %855 = vmatprep.subr.bf16.mxu0 0
    %856 = vmatpush1.bf16.msra.mxu0 0
    %857 = vmatprep.subr.bf16.mxu0 %v795
    %858 = vmatpush1.bf16.msra.mxu0 %v794
    %859 = vmatprep.subr.bf16.mxu0 %v779
    %860 = vmatpush1.bf16.msra.mxu0 %v778
    %861 = vmatprep.subr.bf16.mxu0 0
    %862 = vmatpush2.bf16.msra.mxu0 0
    %863 = vmatprep.subr.bf16.mxu0 0
    %864 = vmatpush2.bf16.msra.mxu0 0
    %865 = vmatprep.subr.bf16.mxu0 0
    %866 = vmatpush2.bf16.msra.mxu0 0
    %867 = vmatprep.subr.bf16.mxu0 0
    %868 = vmatpush2.bf16.msra.mxu0 0
    %869 = vmatprep.subr.bf16.mxu0 0
    %870 = vmatpush2.bf16.msra.mxu0 0
    %871 = vmatprep.subr.bf16.mxu0 0
    %872 = vmatpush2.bf16.msra.mxu0 0
    %873 = vmatprep.subr.bf16.mxu0 0
    %874 = vmatpush2.bf16.msra.mxu0 0
    %875 = vmatprep.subr.bf16.mxu0 0
    %876 = vmatpush2.bf16.msra.mxu0 0
    %877 = vmatprep.mubr.bf16.mxu0 0
    %878 = vmatmul.mubr.bf16.gmra.mxu0 %v843
    %v879 = vpop.f32.mrf.mxu0
    %v880 = vadd.f32 %v605, %v879
    %v881 = vpop.f32.mrf.mxu0
    %v882 = vadd.f32 %v609, %v881
    %v883 = vpop.f32.mrf.mxu0
    %v884 = vadd.f32 %v605, %v883
    %v885 = vpop.f32.mrf.mxu0
    %v886 = vadd.f32 %v609, %v885
    %887 = vdwg.mxu0
    %888 = vmatprep.subr.bf16.mxu0 0
    %889 = vmatpush1.bf16.msra.mxu0 0
    %890 = vmatprep.subr.bf16.mxu0 0
    %891 = vmatpush1.bf16.msra.mxu0 0
    %892 = vmatprep.subr.bf16.mxu0 0
    %893 = vmatpush1.bf16.msra.mxu0 0
    %894 = vmatprep.subr.bf16.mxu0 0
    %895 = vmatpush1.bf16.msra.mxu0 0
    %896 = vmatprep.subr.bf16.mxu0 0
    %897 = vmatpush1.bf16.msra.mxu0 0
    %898 = vmatprep.subr.bf16.mxu0 0
    %899 = vmatpush1.bf16.msra.mxu0 0
    %900 = vmatprep.subr.bf16.mxu0 %v797
    %901 = vmatpush1.bf16.msra.mxu0 %v796
    %902 = vmatprep.subr.bf16.mxu0 %v781
    %903 = vmatpush1.bf16.msra.mxu0 %v780
    %904 = vmatprep.subr.bf16.mxu0 0
    %905 = vmatpush2.bf16.msra.mxu0 0
    %906 = vmatprep.subr.bf16.mxu0 0
    %907 = vmatpush2.bf16.msra.mxu0 0
    %908 = vmatprep.subr.bf16.mxu0 0
    %909 = vmatpush2.bf16.msra.mxu0 0
    %910 = vmatprep.subr.bf16.mxu0 0
    %911 = vmatpush2.bf16.msra.mxu0 0
    %912 = vmatprep.subr.bf16.mxu0 0
    %913 = vmatpush2.bf16.msra.mxu0 0
    %914 = vmatprep.subr.bf16.mxu0 0
    %915 = vmatpush2.bf16.msra.mxu0 0
    %916 = vmatprep.subr.bf16.mxu0 0
    %917 = vmatpush2.bf16.msra.mxu0 0
    %918 = vmatprep.subr.bf16.mxu0 0
    %919 = vmatpush2.bf16.msra.mxu0 0
    %920 = vmatprep.mubr.bf16.mxu0 0
    %921 = vmatmul.mubr.bf16.gmra.mxu0 %v843
    %v922 = vpop.f32.mrf.mxu0
    %v923 = vadd.f32 %v613, %v922
    %v924 = vpop.f32.mrf.mxu0
    %v925 = vadd.f32 %v617, %v924
    %v926 = vpop.f32.mrf.mxu0
    %v927 = vadd.f32 %v613, %v926
    %v928 = vpop.f32.mrf.mxu0
    %v929 = vadd.f32 %v617, %v928
    %930 = vdwg.mxu0
    %931 = vmatprep.subr.bf16.mxu0 0
    %932 = vmatpush1.bf16.msra.mxu0 0
    %933 = vmatprep.subr.bf16.mxu0 0
    %934 = vmatpush1.bf16.msra.mxu0 0
    %935 = vmatprep.subr.bf16.mxu0 0
    %936 = vmatpush1.bf16.msra.mxu0 0
    %937 = vmatprep.subr.bf16.mxu0 0
    %938 = vmatpush1.bf16.msra.mxu0 0
    %939 = vmatprep.subr.bf16.mxu0 0
    %940 = vmatpush1.bf16.msra.mxu0 0
    %941 = vmatprep.subr.bf16.mxu0 0
    %942 = vmatpush1.bf16.msra.mxu0 0
    %943 = vmatprep.subr.bf16.mxu0 %v799
    %944 = vmatpush1.bf16.msra.mxu0 %v798
    %945 = vmatprep.subr.bf16.mxu0 %v783
    %946 = vmatpush1.bf16.msra.mxu0 %v782
    %947 = vmatprep.subr.bf16.mxu0 0
    %948 = vmatpush2.bf16.msra.mxu0 0
    %949 = vmatprep.subr.bf16.mxu0 0
    %950 = vmatpush2.bf16.msra.mxu0 0
    %951 = vmatprep.subr.bf16.mxu0 0
    %952 = vmatpush2.bf16.msra.mxu0 0
    %953 = vmatprep.subr.bf16.mxu0 0
    %954 = vmatpush2.bf16.msra.mxu0 0
    %955 = vmatprep.subr.bf16.mxu0 0
    %956 = vmatpush2.bf16.msra.mxu0 0
    %957 = vmatprep.subr.bf16.mxu0 0
    %958 = vmatpush2.bf16.msra.mxu0 0
    %959 = vmatprep.subr.bf16.mxu0 0
    %960 = vmatpush2.bf16.msra.mxu0 0
    %961 = vmatprep.subr.bf16.mxu0 0
    %962 = vmatpush2.bf16.msra.mxu0 0
    %963 = vmatprep.mubr.bf16.mxu0 0
    %964 = vmatmul.mubr.bf16.gmra.mxu0 %v843
    %v965 = vpop.f32.mrf.mxu0
    %v966 = vadd.f32 %v621, %v965
    %v967 = vpop.f32.mrf.mxu0
    %v968 = vadd.f32 %v625, %v967
    %v969 = vpop.f32.mrf.mxu0
    %v970 = vadd.f32 %v621, %v969
    %v971 = vpop.f32.mrf.mxu0
    %v972 = vadd.f32 %v625, %v971
    %973 = vdwg.mxu0
    %974 = vmatprep.subr.bf16.mxu0 0
    %975 = vmatpush1.bf16.msra.mxu0 0
    %976 = vmatprep.subr.bf16.mxu0 0
    %977 = vmatpush1.bf16.msra.mxu0 0
    %978 = vmatprep.subr.bf16.mxu0 0
    %979 = vmatpush1.bf16.msra.mxu0 0
    %980 = vmatprep.subr.bf16.mxu0 0
    %981 = vmatpush1.bf16.msra.mxu0 0
    %982 = vmatprep.subr.bf16.mxu0 0
    %983 = vmatpush1.bf16.msra.mxu0 0
    %984 = vmatprep.subr.bf16.mxu0 0
    %985 = vmatpush1.bf16.msra.mxu0 0
    %986 = vmatprep.subr.bf16.mxu0 %v801
    %987 = vmatpush1.bf16.msra.mxu0 %v800
    %988 = vmatprep.subr.bf16.mxu0 %v785
    %989 = vmatpush1.bf16.msra.mxu0 %v784
    %990 = vmatprep.subr.bf16.mxu0 0
    %991 = vmatpush2.bf16.msra.mxu0 0
    %992 = vmatprep.subr.bf16.mxu0 0
    %993 = vmatpush2.bf16.msra.mxu0 0
    %994 = vmatprep.subr.bf16.mxu0 0
    %995 = vmatpush2.bf16.msra.mxu0 0
    %996 = vmatprep.subr.bf16.mxu0 0
    %997 = vmatpush2.bf16.msra.mxu0 0
    %998 = vmatprep.subr.bf16.mxu0 0
    %999 = vmatpush2.bf16.msra.mxu0 0
    %1000 = vmatprep.subr.bf16.mxu0 0
    %1001 = vmatpush2.bf16.msra.mxu0 0
    %1002 = vmatprep.subr.bf16.mxu0 0
    %1003 = vmatpush2.bf16.msra.mxu0 0
    %1004 = vmatprep.subr.bf16.mxu0 0
    %1005 = vmatpush2.bf16.msra.mxu0 0
    %1006 = vmatprep.mubr.bf16.mxu0 0
    %1007 = vmatmul.mubr.bf16.gmra.mxu0 %v843
    %v1008 = vpop.f32.mrf.mxu0
    %v1009 = vadd.f32 %v629, %v1008
    %v1010 = vpop.f32.mrf.mxu0
    %v1011 = vadd.f32 %v633, %v1010
    %v1012 = vpop.f32.mrf.mxu0
    %v1013 = vadd.f32 %v629, %v1012
    %v1014 = vpop.f32.mrf.mxu0
    %v1015 = vadd.f32 %v633, %v1014
    %1016 = vdwg.mxu0
    %1017 = vmatprep.subr.bf16.mxu0 0
    %1018 = vmatpush1.bf16.msra.mxu0 0
    %1019 = vmatprep.subr.bf16.mxu0 0
    %1020 = vmatpush1.bf16.msra.mxu0 0
    %1021 = vmatprep.subr.bf16.mxu0 0
    %1022 = vmatpush1.bf16.msra.mxu0 0
    %1023 = vmatprep.subr.bf16.mxu0 0
    %1024 = vmatpush1.bf16.msra.mxu0 0
    %1025 = vmatprep.subr.bf16.mxu0 0
    %1026 = vmatpush1.bf16.msra.mxu0 0
    %1027 = vmatprep.subr.bf16.mxu0 0
    %1028 = vmatpush1.bf16.msra.mxu0 0
    %1029 = vmatprep.subr.bf16.mxu0 %v803
    %1030 = vmatpush1.bf16.msra.mxu0 %v802
    %1031 = vmatprep.subr.bf16.mxu0 %v787
    %1032 = vmatpush1.bf16.msra.mxu0 %v786
    %1033 = vmatprep.subr.bf16.mxu0 0
    %1034 = vmatpush2.bf16.msra.mxu0 0
    %1035 = vmatprep.subr.bf16.mxu0 0
    %1036 = vmatpush2.bf16.msra.mxu0 0
    %1037 = vmatprep.subr.bf16.mxu0 0
    %1038 = vmatpush2.bf16.msra.mxu0 0
    %1039 = vmatprep.subr.bf16.mxu0 0
    %1040 = vmatpush2.bf16.msra.mxu0 0
    %1041 = vmatprep.subr.bf16.mxu0 0
    %1042 = vmatpush2.bf16.msra.mxu0 0
    %1043 = vmatprep.subr.bf16.mxu0 0
    %1044 = vmatpush2.bf16.msra.mxu0 0
    %1045 = vmatprep.subr.bf16.mxu0 0
    %1046 = vmatpush2.bf16.msra.mxu0 0
    %1047 = vmatprep.subr.bf16.mxu0 0
    %1048 = vmatpush2.bf16.msra.mxu0 0
    %1049 = vmatprep.mubr.bf16.mxu0 0
    %1050 = vmatmul.mubr.bf16.gmra.mxu0 %v843
    %v1051 = vpop.f32.mrf.mxu0
    %v1052 = vadd.f32 %v637, %v1051
    %v1053 = vpop.f32.mrf.mxu0
    %v1054 = vadd.f32 %v641, %v1053
    %v1055 = vpop.f32.mrf.mxu0
    %v1056 = vadd.f32 %v637, %v1055
    %v1057 = vpop.f32.mrf.mxu0
    %v1058 = vadd.f32 %v641, %v1057
    %1059 = vdwg.mxu0
    %1060 = vmatprep.subr.bf16.mxu0 0
    %1061 = vmatpush1.bf16.msra.mxu0 0
    %1062 = vmatprep.subr.bf16.mxu0 0
    %1063 = vmatpush1.bf16.msra.mxu0 0
    %1064 = vmatprep.subr.bf16.mxu0 0
    %1065 = vmatpush1.bf16.msra.mxu0 0
    %1066 = vmatprep.subr.bf16.mxu0 0
    %1067 = vmatpush1.bf16.msra.mxu0 0
    %1068 = vmatprep.subr.bf16.mxu0 0
    %1069 = vmatpush1.bf16.msra.mxu0 0
    %1070 = vmatprep.subr.bf16.mxu0 0
    %1071 = vmatpush1.bf16.msra.mxu0 0
    %1072 = vmatprep.subr.bf16.mxu0 %v805
    %1073 = vmatpush1.bf16.msra.mxu0 %v804
    %1074 = vmatprep.subr.bf16.mxu0 %v789
    %1075 = vmatpush1.bf16.msra.mxu0 %v788
    %1076 = vmatprep.subr.bf16.mxu0 0
    %1077 = vmatpush2.bf16.msra.mxu0 0
    %1078 = vmatprep.subr.bf16.mxu0 0
    %1079 = vmatpush2.bf16.msra.mxu0 0
    %1080 = vmatprep.subr.bf16.mxu0 0
    %1081 = vmatpush2.bf16.msra.mxu0 0
    %1082 = vmatprep.subr.bf16.mxu0 0
    %1083 = vmatpush2.bf16.msra.mxu0 0
    %1084 = vmatprep.subr.bf16.mxu0 0
    %1085 = vmatpush2.bf16.msra.mxu0 0
    %1086 = vmatprep.subr.bf16.mxu0 0
    %1087 = vmatpush2.bf16.msra.mxu0 0
    %1088 = vmatprep.subr.bf16.mxu0 0
    %1089 = vmatpush2.bf16.msra.mxu0 0
    %1090 = vmatprep.subr.bf16.mxu0 0
    %1091 = vmatpush2.bf16.msra.mxu0 0
    %1092 = vmatprep.mubr.bf16.mxu0 0
    %1093 = vmatmul.mubr.bf16.gmra.mxu0 %v843
    %v1094 = vpop.f32.mrf.mxu0
    %v1095 = vadd.f32 %v645, %v1094
    %v1096 = vpop.f32.mrf.mxu0
    %v1097 = vadd.f32 %v649, %v1096
    %v1098 = vpop.f32.mrf.mxu0
    %v1099 = vadd.f32 %v645, %v1098
    %v1100 = vpop.f32.mrf.mxu0
    %v1101 = vadd.f32 %v649, %v1100
    %1102 = vdwg.mxu0
    %1103 = vmatprep.subr.bf16.mxu0 0
    %1104 = vmatpush1.bf16.msra.mxu0 0
    %1105 = vmatprep.subr.bf16.mxu0 0
    %1106 = vmatpush1.bf16.msra.mxu0 0
    %1107 = vmatprep.subr.bf16.mxu0 0
    %1108 = vmatpush1.bf16.msra.mxu0 0
    %1109 = vmatprep.subr.bf16.mxu0 0
    %1110 = vmatpush1.bf16.msra.mxu0 0
    %1111 = vmatprep.subr.bf16.mxu0 0
    %1112 = vmatpush1.bf16.msra.mxu0 0
    %1113 = vmatprep.subr.bf16.mxu0 0
    %1114 = vmatpush1.bf16.msra.mxu0 0
    %1115 = vmatprep.subr.bf16.mxu0 %v807
    %1116 = vmatpush1.bf16.msra.mxu0 %v806
    %1117 = vmatprep.subr.bf16.mxu0 %v791
    %1118 = vmatpush1.bf16.msra.mxu0 %v790
    %1119 = vmatprep.subr.bf16.mxu0 0
    %1120 = vmatpush2.bf16.msra.mxu0 0
    %1121 = vmatprep.subr.bf16.mxu0 0
    %1122 = vmatpush2.bf16.msra.mxu0 0
    %1123 = vmatprep.subr.bf16.mxu0 0
    %1124 = vmatpush2.bf16.msra.mxu0 0
    %1125 = vmatprep.subr.bf16.mxu0 0
    %1126 = vmatpush2.bf16.msra.mxu0 0
    %1127 = vmatprep.subr.bf16.mxu0 0
    %1128 = vmatpush2.bf16.msra.mxu0 0
    %1129 = vmatprep.subr.bf16.mxu0 0
    %1130 = vmatpush2.bf16.msra.mxu0 0
    %1131 = vmatprep.subr.bf16.mxu0 0
    %1132 = vmatpush2.bf16.msra.mxu0 0
    %1133 = vmatprep.subr.bf16.mxu0 0
    %1134 = vmatpush2.bf16.msra.mxu0 0
    %1135 = vmatprep.mubr.bf16.mxu0 0
    %1136 = vmatmul.mubr.bf16.gmra.mxu0 %v843
    %v1137 = vpop.f32.mrf.mxu0
    %v1138 = vadd.f32 %v653, %v1137
    %v1139 = vpop.f32.mrf.mxu0
    %v1140 = vadd.f32 %v657, %v1139
    %v1141 = vpop.f32.mrf.mxu0
    %v1142 = vadd.f32 %v653, %v1141
    %v1143 = vpop.f32.mrf.mxu0
    %v1144 = vadd.f32 %v657, %v1143
    %1145 = vdwg.mxu0
    %1146 = vmatprep.subr.bf16.mxu0 0
    %1147 = vmatpush1.bf16.msra.mxu0 0
    %1148 = vmatprep.subr.bf16.mxu0 0
    %1149 = vmatpush1.bf16.msra.mxu0 0
    %1150 = vmatprep.subr.bf16.mxu0 0
    %1151 = vmatpush1.bf16.msra.mxu0 0
    %1152 = vmatprep.subr.bf16.mxu0 0
    %1153 = vmatpush1.bf16.msra.mxu0 0
    %1154 = vmatprep.subr.bf16.mxu0 0
    %1155 = vmatpush1.bf16.msra.mxu0 0
    %1156 = vmatprep.subr.bf16.mxu0 0
    %1157 = vmatpush1.bf16.msra.mxu0 0
    %1158 = vmatprep.subr.bf16.mxu0 %v809
    %1159 = vmatpush1.bf16.msra.mxu0 %v808
    %1160 = vmatprep.subr.bf16.mxu0 %v793
    %1161 = vmatpush1.bf16.msra.mxu0 %v792
    %1162 = vmatprep.subr.bf16.mxu0 0
    %1163 = vmatpush2.bf16.msra.mxu0 0
    %1164 = vmatprep.subr.bf16.mxu0 0
    %1165 = vmatpush2.bf16.msra.mxu0 0
    %1166 = vmatprep.subr.bf16.mxu0 0
    %1167 = vmatpush2.bf16.msra.mxu0 0
    %1168 = vmatprep.subr.bf16.mxu0 0
    %1169 = vmatpush2.bf16.msra.mxu0 0
    %1170 = vmatprep.subr.bf16.mxu0 0
    %1171 = vmatpush2.bf16.msra.mxu0 0
    %1172 = vmatprep.subr.bf16.mxu0 0
    %1173 = vmatpush2.bf16.msra.mxu0 0
    %1174 = vmatprep.subr.bf16.mxu0 0
    %1175 = vmatpush2.bf16.msra.mxu0 0
    %1176 = vmatprep.subr.bf16.mxu0 0
    %1177 = vmatpush2.bf16.msra.mxu0 0
    %1178 = vmatprep.mubr.bf16.mxu0 0
    %1179 = vmatmul.mubr.bf16.gmra.mxu0 %v843
    %v1180 = vpop.f32.mrf.mxu0
    %v1181 = vadd.f32 %v661, %v1180
    %v1182 = vpop.f32.mrf.mxu0
    %v1183 = vadd.f32 %v665, %v1182
    %v1184 = vpop.f32.mrf.mxu0
    %v1185 = vadd.f32 %v661, %v1184
    %v1186 = vpop.f32.mrf.mxu0
    %v1187 = vadd.f32 %v665, %v1186
    %1188 = vdwg.mxu0
    %v1189 = vmax.f32 %v880, 0.0
    %v1190 = vmax.f32 %v882, 0.0
    %v1191 = vmax.f32 %v923, 0.0
    %v1192 = vmax.f32 %v925, 0.0
    %v1193 = vmax.f32 %v966, 0.0
    %v1194 = vmax.f32 %v968, 0.0
    %v1195 = vmax.f32 %v1009, 0.0
    %v1196 = vmax.f32 %v1011, 0.0
    %v1197 = vmax.f32 %v1052, 0.0
    %v1198 = vmax.f32 %v1054, 0.0
    %v1199 = vmax.f32 %v1095, 0.0
    %v1200 = vmax.f32 %v1097, 0.0
    %v1201 = vmax.f32 %v1138, 0.0
    %v1202 = vmax.f32 %v1140, 0.0
    %v1203 = vmax.f32 %v1181, 0.0
    %v1204 = vmax.f32 %v1183, 0.0
    %v1205 = vmax.f32 %v884, 0.0
    %v1206 = vmax.f32 %v886, 0.0
    %v1207 = vmax.f32 %v927, 0.0
    %v1208 = vmax.f32 %v929, 0.0
    %v1209 = vmax.f32 %v970, 0.0
    %v1210 = vmax.f32 %v972, 0.0
    %v1211 = vmax.f32 %v1013, 0.0
    %v1212 = vmax.f32 %v1015, 0.0
    %v1213 = vmax.f32 %v1056, 0.0
    %v1214 = vmax.f32 %v1058, 0.0
    %v1215 = vmax.f32 %v1099, 0.0
    %v1216 = vmax.f32 %v1101, 0.0
    %v1217 = vmax.f32 %v1142, 0.0
    %v1218 = vmax.f32 %v1144, 0.0
    %v1219 = vmax.f32 %v1185, 0.0
    %v1220 = vmax.f32 %v1187, 0.0
    %v1221 = vpack.c.bf16 %v1205, %v1189
    %v1222 = vpack.c.bf16 %v1206, %v1190
    %v1223 = vpack.c.bf16 %v1207, %v1191
    %v1224 = vpack.c.bf16 %v1208, %v1192
    %v1225 = vpack.c.bf16 %v1209, %v1193
    %v1226 = vpack.c.bf16 %v1210, %v1194
    %v1227 = vpack.c.bf16 %v1211, %v1195
    %v1228 = vpack.c.bf16 %v1212, %v1196
    %v1229 = vpack.c.bf16 %v1213, %v1197
    %v1230 = vpack.c.bf16 %v1214, %v1198
    %v1231 = vpack.c.bf16 %v1215, %v1199
    %v1232 = vpack.c.bf16 %v1216, %v1200
    %v1233 = vpack.c.bf16 %v1217, %v1201
    %v1234 = vpack.c.bf16 %v1218, %v1202
    %v1235 = vpack.c.bf16 %v1219, %v1203
    %v1236 = vpack.c.bf16 %v1220, %v1204
    %v1237 = vld [vmem:[#allocation13] sm:$0xf]
    %v1238 = vld [vmem:[#allocation13 + $0x4] sm:$0xf]
    %v1239 = vld [vmem:[#allocation13 + $0x8] sm:$0xf]
    %v1240 = vld [vmem:[#allocation13 + $0xc] sm:$0xf]
    %v1241 = vld [vmem:[#allocation13 + $0x10] sm:$0xf]
    %v1242 = vld [vmem:[#allocation13 + $0x14] sm:$0xf]
    %v1243 = vld [vmem:[#allocation13 + $0x18] sm:$0xf]
    %v1244 = vld [vmem:[#allocation13 + $0x1c] sm:$0xf]
    %v1245 = vld [vmem:[#allocation13 + $0x20] sm:$0xf]
    %v1246 = vld [vmem:[#allocation13 + $0x24] sm:$0xf]
    %v1247 = vld [vmem:[#allocation13 + $0x28] sm:$0xf]
    %v1248 = vld [vmem:[#allocation13 + $0x2c] sm:$0xf]
    %v1249 = vld [vmem:[#allocation13 + $0x30] sm:$0xf]
    %v1250 = vld [vmem:[#allocation13 + $0x34] sm:$0xf]
    %v1251 = vld [vmem:[#allocation13 + $0x38] sm:$0xf]
    %v1252 = vld [vmem:[#allocation13 + $0x3c] sm:$0xf]
    %v1253 = vld [vmem:[#allocation13 + $0x40] sm:$0xf]
    %v1254 = vld [vmem:[#allocation13 + $0x44] sm:$0xf]
    %v1255 = vld [vmem:[#allocation13 + $0x48] sm:$0xf]
    %v1256 = vld [vmem:[#allocation13 + $0x4c] sm:$0xf]
    %v1257 = vld [vmem:[#allocation13 + $0x50] sm:$0xf]
    %v1258 = vld [vmem:[#allocation13 + $0x54] sm:$0xf]
    %v1259 = vld [vmem:[#allocation13 + $0x58] sm:$0xf]
    %v1260 = vld [vmem:[#allocation13 + $0x5c] sm:$0xf]
    %v1261 = vld [vmem:[#allocation13 + $0x60] sm:$0xf]
    %v1262 = vld [vmem:[#allocation13 + $0x64] sm:$0xf]
    %v1263 = vld [vmem:[#allocation13 + $0x68] sm:$0xf]
    %v1264 = vld [vmem:[#allocation13 + $0x6c] sm:$0xf]
    %v1265 = vld [vmem:[#allocation13 + $0x70] sm:$0xf]
    %v1266 = vld [vmem:[#allocation13 + $0x74] sm:$0xf]
    %v1267 = vld [vmem:[#allocation13 + $0x78] sm:$0xf]
    %v1268 = vld [vmem:[#allocation13 + $0x7c] sm:$0xf]
    %v1269 = vld [vmem:[#allocation13 + $0x80] sm:$0xf]
    %v1270 = vld [vmem:[#allocation13 + $0x84] sm:$0xf]
    %v1271 = vld [vmem:[#allocation13 + $0x88] sm:$0xf]
    %v1272 = vld [vmem:[#allocation13 + $0x8c] sm:$0xf]
    %v1273 = vld [vmem:[#allocation13 + $0x90] sm:$0xf]
    %v1274 = vld [vmem:[#allocation13 + $0x94] sm:$0xf]
    %v1275 = vld [vmem:[#allocation13 + $0x98] sm:$0xf]
    %v1276 = vld [vmem:[#allocation13 + $0x9c] sm:$0xf]
    %v1277 = vld [vmem:[#allocation13 + $0xa0] sm:$0xf]
    %v1278 = vld [vmem:[#allocation13 + $0xa4] sm:$0xf]
    %v1279 = vld [vmem:[#allocation13 + $0xa8] sm:$0xf]
    %v1280 = vld [vmem:[#allocation13 + $0xac] sm:$0xf]
    %v1281 = vld [vmem:[#allocation13 + $0xb0] sm:$0xf]
    %v1282 = vld [vmem:[#allocation13 + $0xb4] sm:$0xf]
    %v1283 = vld [vmem:[#allocation13 + $0xb8] sm:$0xf]
    %v1284 = vld [vmem:[#allocation13 + $0xbc] sm:$0xf]
    %v1285 = vld [vmem:[#allocation13 + $0xc0] sm:$0xf]
    %v1286 = vld [vmem:[#allocation13 + $0xc4] sm:$0xf]
    %v1287 = vld [vmem:[#allocation13 + $0xc8] sm:$0xf]
    %v1288 = vld [vmem:[#allocation13 + $0xcc] sm:$0xf]
    %v1289 = vld [vmem:[#allocation13 + $0xd0] sm:$0xf]
    %v1290 = vld [vmem:[#allocation13 + $0xd4] sm:$0xf]
    %v1291 = vld [vmem:[#allocation13 + $0xd8] sm:$0xf]
    %v1292 = vld [vmem:[#allocation13 + $0xdc] sm:$0xf]
    %v1293 = vld [vmem:[#allocation13 + $0xe0] sm:$0xf]
    %v1294 = vld [vmem:[#allocation13 + $0xe4] sm:$0xf]
    %v1295 = vld [vmem:[#allocation13 + $0xe8] sm:$0xf]
    %v1296 = vld [vmem:[#allocation13 + $0xec] sm:$0xf]
    %v1297 = vld [vmem:[#allocation13 + $0xf0] sm:$0xf]
    %v1298 = vld [vmem:[#allocation13 + $0xf4] sm:$0xf]
    %v1299 = vld [vmem:[#allocation13 + $0xf8] sm:$0xf]
    %v1300 = vld [vmem:[#allocation13 + $0xfc] sm:$0xf]
    %v1301 = vld [vmem:[#allocation13 + $0x100] sm:$0xf]
    %v1302 = vld [vmem:[#allocation13 + $0x104] sm:$0xf]
    %v1303 = vld [vmem:[#allocation13 + $0x108] sm:$0xf]
    %v1304 = vld [vmem:[#allocation13 + $0x10c] sm:$0xf]
    %v1305 = vld [vmem:[#allocation13 + $0x110] sm:$0xf]
    %v1306 = vld [vmem:[#allocation13 + $0x114] sm:$0xf]
    %v1307 = vld [vmem:[#allocation13 + $0x118] sm:$0xf]
    %v1308 = vld [vmem:[#allocation13 + $0x11c] sm:$0xf]
    %v1309 = vld [vmem:[#allocation13 + $0x120] sm:$0xf]
    %v1310 = vld [vmem:[#allocation13 + $0x124] sm:$0xf]
    %v1311 = vld [vmem:[#allocation13 + $0x128] sm:$0xf]
    %v1312 = vld [vmem:[#allocation13 + $0x12c] sm:$0xf]
    %v1313 = vld [vmem:[#allocation13 + $0x130] sm:$0xf]
    %v1314 = vld [vmem:[#allocation13 + $0x134] sm:$0xf]
    %v1315 = vld [vmem:[#allocation13 + $0x138] sm:$0xf]
    %v1316 = vld [vmem:[#allocation13 + $0x13c] sm:$0xf]
    %v1317 = vld [vmem:[#allocation13 + $0x140] sm:$0xf]
    %v1318 = vld [vmem:[#allocation13 + $0x144] sm:$0xf]
    %v1319 = vld [vmem:[#allocation13 + $0x148] sm:$0xf]
    %v1320 = vld [vmem:[#allocation13 + $0x14c] sm:$0xf]
    %v1321 = vld [vmem:[#allocation13 + $0x150] sm:$0xf]
    %v1322 = vld [vmem:[#allocation13 + $0x154] sm:$0xf]
    %v1323 = vld [vmem:[#allocation13 + $0x158] sm:$0xf]
    %v1324 = vld [vmem:[#allocation13 + $0x15c] sm:$0xf]
    %v1325 = vld [vmem:[#allocation13 + $0x160] sm:$0xf]
    %v1326 = vld [vmem:[#allocation13 + $0x164] sm:$0xf]
    %v1327 = vld [vmem:[#allocation13 + $0x168] sm:$0xf]
    %v1328 = vld [vmem:[#allocation13 + $0x16c] sm:$0xf]
    %v1329 = vld [vmem:[#allocation13 + $0x170] sm:$0xf]
    %v1330 = vld [vmem:[#allocation13 + $0x174] sm:$0xf]
    %v1331 = vld [vmem:[#allocation13 + $0x178] sm:$0xf]
    %v1332 = vld [vmem:[#allocation13 + $0x17c] sm:$0xf]
    %v1333 = vld [vmem:[#allocation13 + $0x180] sm:$0xf]
    %v1334 = vld [vmem:[#allocation13 + $0x184] sm:$0xf]
    %v1335 = vld [vmem:[#allocation13 + $0x188] sm:$0xf]
    %v1336 = vld [vmem:[#allocation13 + $0x18c] sm:$0xf]
    %v1337 = vld [vmem:[#allocation13 + $0x190] sm:$0xf]
    %v1338 = vld [vmem:[#allocation13 + $0x194] sm:$0xf]
    %v1339 = vld [vmem:[#allocation13 + $0x198] sm:$0xf]
    %v1340 = vld [vmem:[#allocation13 + $0x19c] sm:$0xf]
    %v1341 = vld [vmem:[#allocation13 + $0x1a0] sm:$0xf]
    %v1342 = vld [vmem:[#allocation13 + $0x1a4] sm:$0xf]
    %v1343 = vld [vmem:[#allocation13 + $0x1a8] sm:$0xf]
    %v1344 = vld [vmem:[#allocation13 + $0x1ac] sm:$0xf]
    %v1345 = vld [vmem:[#allocation13 + $0x1b0] sm:$0xf]
    %v1346 = vld [vmem:[#allocation13 + $0x1b4] sm:$0xf]
    %v1347 = vld [vmem:[#allocation13 + $0x1b8] sm:$0xf]
    %v1348 = vld [vmem:[#allocation13 + $0x1bc] sm:$0xf]
    %v1349 = vld [vmem:[#allocation13 + $0x1c0] sm:$0xf]
    %v1350 = vld [vmem:[#allocation13 + $0x1c4] sm:$0xf]
    %v1351 = vld [vmem:[#allocation13 + $0x1c8] sm:$0xf]
    %v1352 = vld [vmem:[#allocation13 + $0x1cc] sm:$0xf]
    %v1353 = vld [vmem:[#allocation13 + $0x1d0] sm:$0xf]
    %v1354 = vld [vmem:[#allocation13 + $0x1d4] sm:$0xf]
    %v1355 = vld [vmem:[#allocation13 + $0x1d8] sm:$0xf]
    %v1356 = vld [vmem:[#allocation13 + $0x1dc] sm:$0xf]
    %v1357 = vld [vmem:[#allocation13 + $0x1e0] sm:$0xf]
    %v1358 = vld [vmem:[#allocation13 + $0x1e4] sm:$0xf]
    %v1359 = vld [vmem:[#allocation13 + $0x1e8] sm:$0xf]
    %v1360 = vld [vmem:[#allocation13 + $0x1ec] sm:$0xf]
    %v1361 = vld [vmem:[#allocation13 + $0x1f0] sm:$0xf]
    %v1362 = vld [vmem:[#allocation13 + $0x1f4] sm:$0xf]
    %v1363 = vld [vmem:[#allocation13 + $0x1f8] sm:$0xf]
    %v1364 = vld [vmem:[#allocation13 + $0x1fc] sm:$0xf]
    %v1365 = vld [vmem:[#allocation13 + $0x200] sm:$0xf]
    %v1366 = vld [vmem:[#allocation13 + $0x204] sm:$0xf]
    %v1367 = vld [vmem:[#allocation13 + $0x208] sm:$0xf]
    %v1368 = vld [vmem:[#allocation13 + $0x20c] sm:$0xf]
    %v1369 = vld [vmem:[#allocation13 + $0x210] sm:$0xf]
    %v1370 = vld [vmem:[#allocation13 + $0x214] sm:$0xf]
    %v1371 = vld [vmem:[#allocation13 + $0x218] sm:$0xf]
    %v1372 = vld [vmem:[#allocation13 + $0x21c] sm:$0xf]
    %v1373 = vld [vmem:[#allocation13 + $0x220] sm:$0xf]
    %v1374 = vld [vmem:[#allocation13 + $0x224] sm:$0xf]
    %v1375 = vld [vmem:[#allocation13 + $0x228] sm:$0xf]
    %v1376 = vld [vmem:[#allocation13 + $0x22c] sm:$0xf]
    %v1377 = vld [vmem:[#allocation13 + $0x230] sm:$0xf]
    %v1378 = vld [vmem:[#allocation13 + $0x234] sm:$0xf]
    %v1379 = vld [vmem:[#allocation13 + $0x238] sm:$0xf]
    %v1380 = vld [vmem:[#allocation13 + $0x23c] sm:$0xf]
    %v1381 = vld [vmem:[#allocation13 + $0x240] sm:$0xf]
    %v1382 = vld [vmem:[#allocation13 + $0x244] sm:$0xf]
    %v1383 = vld [vmem:[#allocation13 + $0x248] sm:$0xf]
    %v1384 = vld [vmem:[#allocation13 + $0x24c] sm:$0xf]
    %v1385 = vld [vmem:[#allocation13 + $0x250] sm:$0xf]
    %v1386 = vld [vmem:[#allocation13 + $0x254] sm:$0xf]
    %v1387 = vld [vmem:[#allocation13 + $0x258] sm:$0xf]
    %v1388 = vld [vmem:[#allocation13 + $0x25c] sm:$0xf]
    %v1389 = vld [vmem:[#allocation13 + $0x260] sm:$0xf]
    %v1390 = vld [vmem:[#allocation13 + $0x264] sm:$0xf]
    %v1391 = vld [vmem:[#allocation13 + $0x268] sm:$0xf]
    %v1392 = vld [vmem:[#allocation13 + $0x26c] sm:$0xf]
    %v1393 = vld [vmem:[#allocation13 + $0x270] sm:$0xf]
    %v1394 = vld [vmem:[#allocation13 + $0x274] sm:$0xf]
    %v1395 = vld [vmem:[#allocation13 + $0x278] sm:$0xf]
    %v1396 = vld [vmem:[#allocation13 + $0x27c] sm:$0xf]
    %v1397 = vld [vmem:[#allocation13 + $0x280] sm:$0xf]
    %v1398 = vld [vmem:[#allocation13 + $0x284] sm:$0xf]
    %v1399 = vld [vmem:[#allocation13 + $0x288] sm:$0xf]
    %v1400 = vld [vmem:[#allocation13 + $0x28c] sm:$0xf]
    %v1401 = vld [vmem:[#allocation13 + $0x290] sm:$0xf]
    %v1402 = vld [vmem:[#allocation13 + $0x294] sm:$0xf]
    %v1403 = vld [vmem:[#allocation13 + $0x298] sm:$0xf]
    %v1404 = vld [vmem:[#allocation13 + $0x29c] sm:$0xf]
    %v1405 = vld [vmem:[#allocation13 + $0x2a0] sm:$0xf]
    %v1406 = vld [vmem:[#allocation13 + $0x2a4] sm:$0xf]
    %v1407 = vld [vmem:[#allocation13 + $0x2a8] sm:$0xf]
    %v1408 = vld [vmem:[#allocation13 + $0x2ac] sm:$0xf]
    %v1409 = vld [vmem:[#allocation13 + $0x2b0] sm:$0xf]
    %v1410 = vld [vmem:[#allocation13 + $0x2b4] sm:$0xf]
    %v1411 = vld [vmem:[#allocation13 + $0x2b8] sm:$0xf]
    %v1412 = vld [vmem:[#allocation13 + $0x2bc] sm:$0xf]
    %v1413 = vld [vmem:[#allocation13 + $0x2c0] sm:$0xf]
    %v1414 = vld [vmem:[#allocation13 + $0x2c4] sm:$0xf]
    %v1415 = vld [vmem:[#allocation13 + $0x2c8] sm:$0xf]
    %v1416 = vld [vmem:[#allocation13 + $0x2cc] sm:$0xf]
    %v1417 = vld [vmem:[#allocation13 + $0x2d0] sm:$0xf]
    %v1418 = vld [vmem:[#allocation13 + $0x2d4] sm:$0xf]
    %v1419 = vld [vmem:[#allocation13 + $0x2d8] sm:$0xf]
    %v1420 = vld [vmem:[#allocation13 + $0x2dc] sm:$0xf]
    %v1421 = vld [vmem:[#allocation13 + $0x2e0] sm:$0xf]
    %v1422 = vld [vmem:[#allocation13 + $0x2e4] sm:$0xf]
    %v1423 = vld [vmem:[#allocation13 + $0x2e8] sm:$0xf]
    %v1424 = vld [vmem:[#allocation13 + $0x2ec] sm:$0xf]
    %v1425 = vld [vmem:[#allocation13 + $0x2f0] sm:$0xf]
    %v1426 = vld [vmem:[#allocation13 + $0x2f4] sm:$0xf]
    %v1427 = vld [vmem:[#allocation13 + $0x2f8] sm:$0xf]
    %v1428 = vld [vmem:[#allocation13 + $0x2fc] sm:$0xf]
    %v1429 = vld [vmem:[#allocation13 + $0x300] sm:$0xf]
    %v1430 = vld [vmem:[#allocation13 + $0x304] sm:$0xf]
    %v1431 = vld [vmem:[#allocation13 + $0x308] sm:$0xf]
    %v1432 = vld [vmem:[#allocation13 + $0x30c] sm:$0xf]
    %v1433 = vld [vmem:[#allocation13 + $0x310] sm:$0xf]
    %v1434 = vld [vmem:[#allocation13 + $0x314] sm:$0xf]
    %v1435 = vld [vmem:[#allocation13 + $0x318] sm:$0xf]
    %v1436 = vld [vmem:[#allocation13 + $0x31c] sm:$0xf]
    %v1437 = vld [vmem:[#allocation13 + $0x320] sm:$0xf]
    %v1438 = vld [vmem:[#allocation13 + $0x324] sm:$0xf]
    %v1439 = vld [vmem:[#allocation13 + $0x328] sm:$0xf]
    %v1440 = vld [vmem:[#allocation13 + $0x32c] sm:$0xf]
    %v1441 = vld [vmem:[#allocation13 + $0x330] sm:$0xf]
    %v1442 = vld [vmem:[#allocation13 + $0x334] sm:$0xf]
    %v1443 = vld [vmem:[#allocation13 + $0x338] sm:$0xf]
    %v1444 = vld [vmem:[#allocation13 + $0x33c] sm:$0xf]
    %v1445 = vld [vmem:[#allocation13 + $0x340] sm:$0xf]
    %v1446 = vld [vmem:[#allocation13 + $0x344] sm:$0xf]
    %v1447 = vld [vmem:[#allocation13 + $0x348] sm:$0xf]
    %v1448 = vld [vmem:[#allocation13 + $0x34c] sm:$0xf]
    %v1449 = vld [vmem:[#allocation13 + $0x350] sm:$0xf]
    %v1450 = vld [vmem:[#allocation13 + $0x354] sm:$0xf]
    %v1451 = vld [vmem:[#allocation13 + $0x358] sm:$0xf]
    %v1452 = vld [vmem:[#allocation13 + $0x35c] sm:$0xf]
    %v1453 = vld [vmem:[#allocation13 + $0x360] sm:$0xf]
    %v1454 = vld [vmem:[#allocation13 + $0x364] sm:$0xf]
    %v1455 = vld [vmem:[#allocation13 + $0x368] sm:$0xf]
    %v1456 = vld [vmem:[#allocation13 + $0x36c] sm:$0xf]
    %v1457 = vld [vmem:[#allocation13 + $0x370] sm:$0xf]
    %v1458 = vld [vmem:[#allocation13 + $0x374] sm:$0xf]
    %v1459 = vld [vmem:[#allocation13 + $0x378] sm:$0xf]
    %v1460 = vld [vmem:[#allocation13 + $0x37c] sm:$0xf]
    %v1461 = vld [vmem:[#allocation13 + $0x380] sm:$0xf]
    %v1462 = vld [vmem:[#allocation13 + $0x384] sm:$0xf]
    %v1463 = vld [vmem:[#allocation13 + $0x388] sm:$0xf]
    %v1464 = vld [vmem:[#allocation13 + $0x38c] sm:$0xf]
    %v1465 = vld [vmem:[#allocation13 + $0x390] sm:$0xf]
    %v1466 = vld [vmem:[#allocation13 + $0x394] sm:$0xf]
    %v1467 = vld [vmem:[#allocation13 + $0x398] sm:$0xf]
    %v1468 = vld [vmem:[#allocation13 + $0x39c] sm:$0xf]
    %v1469 = vld [vmem:[#allocation13 + $0x3a0] sm:$0xf]
    %v1470 = vld [vmem:[#allocation13 + $0x3a4] sm:$0xf]
    %v1471 = vld [vmem:[#allocation13 + $0x3a8] sm:$0xf]
    %v1472 = vld [vmem:[#allocation13 + $0x3ac] sm:$0xf]
    %v1473 = vld [vmem:[#allocation13 + $0x3b0] sm:$0xf]
    %v1474 = vld [vmem:[#allocation13 + $0x3b4] sm:$0xf]
    %v1475 = vld [vmem:[#allocation13 + $0x3b8] sm:$0xf]
    %v1476 = vld [vmem:[#allocation13 + $0x3bc] sm:$0xf]
    %v1477 = vld [vmem:[#allocation13 + $0x3c0] sm:$0xf]
    %v1478 = vld [vmem:[#allocation13 + $0x3c4] sm:$0xf]
    %v1479 = vld [vmem:[#allocation13 + $0x3c8] sm:$0xf]
    %v1480 = vld [vmem:[#allocation13 + $0x3cc] sm:$0xf]
    %v1481 = vld [vmem:[#allocation13 + $0x3d0] sm:$0xf]
    %v1482 = vld [vmem:[#allocation13 + $0x3d4] sm:$0xf]
    %v1483 = vld [vmem:[#allocation13 + $0x3d8] sm:$0xf]
    %v1484 = vld [vmem:[#allocation13 + $0x3dc] sm:$0xf]
    %v1485 = vld [vmem:[#allocation13 + $0x3e0] sm:$0xf]
    %v1486 = vld [vmem:[#allocation13 + $0x3e4] sm:$0xf]
    %v1487 = vld [vmem:[#allocation13 + $0x3e8] sm:$0xf]
    %v1488 = vld [vmem:[#allocation13 + $0x3ec] sm:$0xf]
    %v1489 = vld [vmem:[#allocation13 + $0x3f0] sm:$0xf]
    %v1490 = vld [vmem:[#allocation13 + $0x3f4] sm:$0xf]
    %v1491 = vld [vmem:[#allocation13 + $0x3f8] sm:$0xf]
    %v1492 = vld [vmem:[#allocation13 + $0x3fc] sm:$0xf]
    %v1493 = vld [vmem:[%s11] sm:$0x1]
    %v1495 = vlaneseq
    %v1496 = vshrl.u32 %v1495, 7
    %v1497 = vsub.s32 0, %v1496
    %v1498 = vrot.slane %v1493, %v1497
    %v1756 = vunpack.c.l.b16 %v1237
    %v1757 = vunpack.c.l.b16 %v1238
    %v1758 = vunpack.c.l.b16 %v1239
    %v1759 = vunpack.c.l.b16 %v1240
    %v1760 = vunpack.c.l.b16 %v1241
    %v1761 = vunpack.c.l.b16 %v1242
    %v1762 = vunpack.c.l.b16 %v1243
    %v1763 = vunpack.c.l.b16 %v1244
    %v1764 = vunpack.c.l.b16 %v1245
    %v1765 = vunpack.c.l.b16 %v1246
    %v1766 = vunpack.c.l.b16 %v1247
    %v1767 = vunpack.c.l.b16 %v1248
    %v1768 = vunpack.c.l.b16 %v1249
    %v1769 = vunpack.c.l.b16 %v1250
    %v1770 = vunpack.c.l.b16 %v1251
    %v1771 = vunpack.c.l.b16 %v1252
    %v1772 = vunpack.c.l.b16 %v1253
    %v1773 = vunpack.c.l.b16 %v1254
    %v1774 = vunpack.c.l.b16 %v1255
    %v1775 = vunpack.c.l.b16 %v1256
    %v1776 = vunpack.c.l.b16 %v1257
    %v1777 = vunpack.c.l.b16 %v1258
    %v1778 = vunpack.c.l.b16 %v1259
    %v1779 = vunpack.c.l.b16 %v1260
    %v1780 = vunpack.c.l.b16 %v1261
    %v1781 = vunpack.c.l.b16 %v1262
    %v1782 = vunpack.c.l.b16 %v1263
    %v1783 = vunpack.c.l.b16 %v1264
    %v1784 = vunpack.c.l.b16 %v1265
    %v1785 = vunpack.c.l.b16 %v1266
    %v1786 = vunpack.c.l.b16 %v1267
    %v1787 = vunpack.c.l.b16 %v1268
    %v1788 = vunpack.c.l.b16 %v1269
    %v1789 = vunpack.c.l.b16 %v1270
    %v1790 = vunpack.c.l.b16 %v1271
    %v1791 = vunpack.c.l.b16 %v1272
    %v1792 = vunpack.c.l.b16 %v1273
    %v1793 = vunpack.c.l.b16 %v1274
    %v1794 = vunpack.c.l.b16 %v1275
    %v1795 = vunpack.c.l.b16 %v1276
    %v1796 = vunpack.c.l.b16 %v1277
    %v1797 = vunpack.c.l.b16 %v1278
    %v1798 = vunpack.c.l.b16 %v1279
    %v1799 = vunpack.c.l.b16 %v1280
    %v1800 = vunpack.c.l.b16 %v1281
    %v1801 = vunpack.c.l.b16 %v1282
    %v1802 = vunpack.c.l.b16 %v1283
    %v1803 = vunpack.c.l.b16 %v1284
    %v1804 = vunpack.c.l.b16 %v1285
    %v1805 = vunpack.c.l.b16 %v1286
    %v1806 = vunpack.c.l.b16 %v1287
    %v1807 = vunpack.c.l.b16 %v1288
    %v1808 = vunpack.c.l.b16 %v1289
    %v1809 = vunpack.c.l.b16 %v1290
    %v1810 = vunpack.c.l.b16 %v1291
    %v1811 = vunpack.c.l.b16 %v1292
    %v1812 = vunpack.c.l.b16 %v1293
    %v1813 = vunpack.c.l.b16 %v1294
    %v1814 = vunpack.c.l.b16 %v1295
    %v1815 = vunpack.c.l.b16 %v1296
    %v1816 = vunpack.c.l.b16 %v1297
    %v1817 = vunpack.c.l.b16 %v1298
    %v1818 = vunpack.c.l.b16 %v1299
    %v1819 = vunpack.c.l.b16 %v1300
    %v1820 = vunpack.c.l.b16 %v1301
    %v1821 = vunpack.c.l.b16 %v1302
    %v1822 = vunpack.c.l.b16 %v1303
    %v1823 = vunpack.c.l.b16 %v1304
    %v1824 = vunpack.c.l.b16 %v1305
    %v1825 = vunpack.c.l.b16 %v1306
    %v1826 = vunpack.c.l.b16 %v1307
    %v1827 = vunpack.c.l.b16 %v1308
    %v1828 = vunpack.c.l.b16 %v1309
    %v1829 = vunpack.c.l.b16 %v1310
    %v1830 = vunpack.c.l.b16 %v1311
    %v1831 = vunpack.c.l.b16 %v1312
    %v1832 = vunpack.c.l.b16 %v1313
    %v1833 = vunpack.c.l.b16 %v1314
    %v1834 = vunpack.c.l.b16 %v1315
    %v1835 = vunpack.c.l.b16 %v1316
    %v1836 = vunpack.c.l.b16 %v1317
    %v1837 = vunpack.c.l.b16 %v1318
    %v1838 = vunpack.c.l.b16 %v1319
    %v1839 = vunpack.c.l.b16 %v1320
    %v1840 = vunpack.c.l.b16 %v1321
    %v1841 = vunpack.c.l.b16 %v1322
    %v1842 = vunpack.c.l.b16 %v1323
    %v1843 = vunpack.c.l.b16 %v1324
    %v1844 = vunpack.c.l.b16 %v1325
    %v1845 = vunpack.c.l.b16 %v1326
    %v1846 = vunpack.c.l.b16 %v1327
    %v1847 = vunpack.c.l.b16 %v1328
    %v1848 = vunpack.c.l.b16 %v1329
    %v1849 = vunpack.c.l.b16 %v1330
    %v1850 = vunpack.c.l.b16 %v1331
    %v1851 = vunpack.c.l.b16 %v1332
    %v1852 = vunpack.c.l.b16 %v1333
    %v1853 = vunpack.c.l.b16 %v1334
    %v1854 = vunpack.c.l.b16 %v1335
    %v1855 = vunpack.c.l.b16 %v1336
    %v1856 = vunpack.c.l.b16 %v1337
    %v1857 = vunpack.c.l.b16 %v1338
    %v1858 = vunpack.c.l.b16 %v1339
    %v1859 = vunpack.c.l.b16 %v1340
    %v1860 = vunpack.c.l.b16 %v1341
    %v1861 = vunpack.c.l.b16 %v1342
    %v1862 = vunpack.c.l.b16 %v1343
    %v1863 = vunpack.c.l.b16 %v1344
    %v1864 = vunpack.c.l.b16 %v1345
    %v1865 = vunpack.c.l.b16 %v1346
    %v1866 = vunpack.c.l.b16 %v1347
    %v1867 = vunpack.c.l.b16 %v1348
    %v1868 = vunpack.c.l.b16 %v1349
    %v1869 = vunpack.c.l.b16 %v1350
    %v1870 = vunpack.c.l.b16 %v1351
    %v1871 = vunpack.c.l.b16 %v1352
    %v1872 = vunpack.c.l.b16 %v1353
    %v1873 = vunpack.c.l.b16 %v1354
    %v1874 = vunpack.c.l.b16 %v1355
    %v1875 = vunpack.c.l.b16 %v1356
    %v1876 = vunpack.c.l.b16 %v1357
    %v1877 = vunpack.c.l.b16 %v1358
    %v1878 = vunpack.c.l.b16 %v1359
    %v1879 = vunpack.c.l.b16 %v1360
    %v1880 = vunpack.c.l.b16 %v1361
    %v1881 = vunpack.c.l.b16 %v1362
    %v1882 = vunpack.c.l.b16 %v1363
    %v1883 = vunpack.c.l.b16 %v1364
    %v1884 = vunpack.c.l.b16 %v1365
    %v1885 = vunpack.c.l.b16 %v1366
    %v1886 = vunpack.c.l.b16 %v1367
    %v1887 = vunpack.c.l.b16 %v1368
    %v1888 = vunpack.c.l.b16 %v1369
    %v1889 = vunpack.c.l.b16 %v1370
    %v1890 = vunpack.c.l.b16 %v1371
    %v1891 = vunpack.c.l.b16 %v1372
    %v1892 = vunpack.c.l.b16 %v1373
    %v1893 = vunpack.c.l.b16 %v1374
    %v1894 = vunpack.c.l.b16 %v1375
    %v1895 = vunpack.c.l.b16 %v1376
    %v1896 = vunpack.c.l.b16 %v1377
    %v1897 = vunpack.c.l.b16 %v1378
    %v1898 = vunpack.c.l.b16 %v1379
    %v1899 = vunpack.c.l.b16 %v1380
    %v1900 = vunpack.c.l.b16 %v1381
    %v1901 = vunpack.c.l.b16 %v1382
    %v1902 = vunpack.c.l.b16 %v1383
    %v1903 = vunpack.c.l.b16 %v1384
    %v1904 = vunpack.c.l.b16 %v1385
    %v1905 = vunpack.c.l.b16 %v1386
    %v1906 = vunpack.c.l.b16 %v1387
    %v1907 = vunpack.c.l.b16 %v1388
    %v1908 = vunpack.c.l.b16 %v1389
    %v1909 = vunpack.c.l.b16 %v1390
    %v1910 = vunpack.c.l.b16 %v1391
    %v1911 = vunpack.c.l.b16 %v1392
    %v1912 = vunpack.c.l.b16 %v1393
    %v1913 = vunpack.c.l.b16 %v1394
    %v1914 = vunpack.c.l.b16 %v1395
    %v1915 = vunpack.c.l.b16 %v1396
    %v1916 = vunpack.c.l.b16 %v1397
    %v1917 = vunpack.c.l.b16 %v1398
    %v1918 = vunpack.c.l.b16 %v1399
    %v1919 = vunpack.c.l.b16 %v1400
    %v1920 = vunpack.c.l.b16 %v1401
    %v1921 = vunpack.c.l.b16 %v1402
    %v1922 = vunpack.c.l.b16 %v1403
    %v1923 = vunpack.c.l.b16 %v1404
    %v1924 = vunpack.c.l.b16 %v1405
    %v1925 = vunpack.c.l.b16 %v1406
    %v1926 = vunpack.c.l.b16 %v1407
    %v1927 = vunpack.c.l.b16 %v1408
    %v1928 = vunpack.c.l.b16 %v1409
    %v1929 = vunpack.c.l.b16 %v1410
    %v1930 = vunpack.c.l.b16 %v1411
    %v1931 = vunpack.c.l.b16 %v1412
    %v1932 = vunpack.c.l.b16 %v1413
    %v1933 = vunpack.c.l.b16 %v1414
    %v1934 = vunpack.c.l.b16 %v1415
    %v1935 = vunpack.c.l.b16 %v1416
    %v1936 = vunpack.c.l.b16 %v1417
    %v1937 = vunpack.c.l.b16 %v1418
    %v1938 = vunpack.c.l.b16 %v1419
    %v1939 = vunpack.c.l.b16 %v1420
    %v1940 = vunpack.c.l.b16 %v1421
    %v1941 = vunpack.c.l.b16 %v1422
    %v1942 = vunpack.c.l.b16 %v1423
    %v1943 = vunpack.c.l.b16 %v1424
    %v1944 = vunpack.c.l.b16 %v1425
    %v1945 = vunpack.c.l.b16 %v1426
    %v1946 = vunpack.c.l.b16 %v1427
    %v1947 = vunpack.c.l.b16 %v1428
    %v1948 = vunpack.c.l.b16 %v1429
    %v1949 = vunpack.c.l.b16 %v1430
    %v1950 = vunpack.c.l.b16 %v1431
    %v1951 = vunpack.c.l.b16 %v1432
    %v1952 = vunpack.c.l.b16 %v1433
    %v1953 = vunpack.c.l.b16 %v1434
    %v1954 = vunpack.c.l.b16 %v1435
    %v1955 = vunpack.c.l.b16 %v1436
    %v1956 = vunpack.c.l.b16 %v1437
    %v1957 = vunpack.c.l.b16 %v1438
    %v1958 = vunpack.c.l.b16 %v1439
    %v1959 = vunpack.c.l.b16 %v1440
    %v1960 = vunpack.c.l.b16 %v1441
    %v1961 = vunpack.c.l.b16 %v1442
    %v1962 = vunpack.c.l.b16 %v1443
    %v1963 = vunpack.c.l.b16 %v1444
    %v1964 = vunpack.c.l.b16 %v1445
    %v1965 = vunpack.c.l.b16 %v1446
    %v1966 = vunpack.c.l.b16 %v1447
    %v1967 = vunpack.c.l.b16 %v1448
    %v1968 = vunpack.c.l.b16 %v1449
    %v1969 = vunpack.c.l.b16 %v1450
    %v1970 = vunpack.c.l.b16 %v1451
    %v1971 = vunpack.c.l.b16 %v1452
    %v1972 = vunpack.c.l.b16 %v1453
    %v1973 = vunpack.c.l.b16 %v1454
    %v1974 = vunpack.c.l.b16 %v1455
    %v1975 = vunpack.c.l.b16 %v1456
    %v1976 = vunpack.c.l.b16 %v1457
    %v1977 = vunpack.c.l.b16 %v1458
    %v1978 = vunpack.c.l.b16 %v1459
    %v1979 = vunpack.c.l.b16 %v1460
    %v1980 = vunpack.c.l.b16 %v1461
    %v1981 = vunpack.c.l.b16 %v1462
    %v1982 = vunpack.c.l.b16 %v1463
    %v1983 = vunpack.c.l.b16 %v1464
    %v1984 = vunpack.c.l.b16 %v1465
    %v1985 = vunpack.c.l.b16 %v1466
    %v1986 = vunpack.c.l.b16 %v1467
    %v1987 = vunpack.c.l.b16 %v1468
    %v1988 = vunpack.c.l.b16 %v1469
    %v1989 = vunpack.c.l.b16 %v1470
    %v1990 = vunpack.c.l.b16 %v1471
    %v1991 = vunpack.c.l.b16 %v1472
    %v1992 = vunpack.c.l.b16 %v1473
    %v1993 = vunpack.c.l.b16 %v1474
    %v1994 = vunpack.c.l.b16 %v1475
    %v1995 = vunpack.c.l.b16 %v1476
    %v1996 = vunpack.c.l.b16 %v1477
    %v1997 = vunpack.c.l.b16 %v1478
    %v1998 = vunpack.c.l.b16 %v1479
    %v1999 = vunpack.c.l.b16 %v1480
    %v2000 = vunpack.c.l.b16 %v1481
    %v2001 = vunpack.c.l.b16 %v1482
    %v2002 = vunpack.c.l.b16 %v1483
    %v2003 = vunpack.c.l.b16 %v1484
    %v2004 = vunpack.c.l.b16 %v1485
    %v2005 = vunpack.c.l.b16 %v1486
    %v2006 = vunpack.c.l.b16 %v1487
    %v2007 = vunpack.c.l.b16 %v1488
    %v2008 = vunpack.c.l.b16 %v1489
    %v2009 = vunpack.c.l.b16 %v1490
    %v2010 = vunpack.c.l.b16 %v1491
    %v2011 = vunpack.c.l.b16 %v1492
    %v2012 = vpack.c.b16 %v1757, %v1756
    %v2013 = vpack.c.b16 %v1759, %v1758
    %v2014 = vpack.c.b16 %v1761, %v1760
    %v2015 = vpack.c.b16 %v1763, %v1762
    %v2016 = vpack.c.b16 %v1765, %v1764
    %v2017 = vpack.c.b16 %v1767, %v1766
    %v2018 = vpack.c.b16 %v1769, %v1768
    %v2019 = vpack.c.b16 %v1771, %v1770
    %v2020 = vpack.c.b16 %v1773, %v1772
    %v2021 = vpack.c.b16 %v1775, %v1774
    %v2022 = vpack.c.b16 %v1777, %v1776
    %v2023 = vpack.c.b16 %v1779, %v1778
    %v2024 = vpack.c.b16 %v1781, %v1780
    %v2025 = vpack.c.b16 %v1783, %v1782
    %v2026 = vpack.c.b16 %v1785, %v1784
    %v2027 = vpack.c.b16 %v1787, %v1786
    %v2028 = vpack.c.b16 %v1789, %v1788
    %v2029 = vpack.c.b16 %v1791, %v1790
    %v2030 = vpack.c.b16 %v1793, %v1792
    %v2031 = vpack.c.b16 %v1795, %v1794
    %v2032 = vpack.c.b16 %v1797, %v1796
    %v2033 = vpack.c.b16 %v1799, %v1798
    %v2034 = vpack.c.b16 %v1801, %v1800
    %v2035 = vpack.c.b16 %v1803, %v1802
    %v2036 = vpack.c.b16 %v1805, %v1804
    %v2037 = vpack.c.b16 %v1807, %v1806
    %v2038 = vpack.c.b16 %v1809, %v1808
    %v2039 = vpack.c.b16 %v1811, %v1810
    %v2040 = vpack.c.b16 %v1813, %v1812
    %v2041 = vpack.c.b16 %v1815, %v1814
    %v2042 = vpack.c.b16 %v1817, %v1816
    %v2043 = vpack.c.b16 %v1819, %v1818
    %v2044 = vpack.c.b16 %v1821, %v1820
    %v2045 = vpack.c.b16 %v1823, %v1822
    %v2046 = vpack.c.b16 %v1825, %v1824
    %v2047 = vpack.c.b16 %v1827, %v1826
    %v2048 = vpack.c.b16 %v1829, %v1828
    %v2049 = vpack.c.b16 %v1831, %v1830
    %v2050 = vpack.c.b16 %v1833, %v1832
    %v2051 = vpack.c.b16 %v1835, %v1834
    %v2052 = vpack.c.b16 %v1837, %v1836
    %v2053 = vpack.c.b16 %v1839, %v1838
    %v2054 = vpack.c.b16 %v1841, %v1840
    %v2055 = vpack.c.b16 %v1843, %v1842
    %v2056 = vpack.c.b16 %v1845, %v1844
    %v2057 = vpack.c.b16 %v1847, %v1846
    %v2058 = vpack.c.b16 %v1849, %v1848
    %v2059 = vpack.c.b16 %v1851, %v1850
    %v2060 = vpack.c.b16 %v1853, %v1852
    %v2061 = vpack.c.b16 %v1855, %v1854
    %v2062 = vpack.c.b16 %v1857, %v1856
    %v2063 = vpack.c.b16 %v1859, %v1858
    %v2064 = vpack.c.b16 %v1861, %v1860
    %v2065 = vpack.c.b16 %v1863, %v1862
    %v2066 = vpack.c.b16 %v1865, %v1864
    %v2067 = vpack.c.b16 %v1867, %v1866
    %v2068 = vpack.c.b16 %v1869, %v1868
    %v2069 = vpack.c.b16 %v1871, %v1870
    %v2070 = vpack.c.b16 %v1873, %v1872
    %v2071 = vpack.c.b16 %v1875, %v1874
    %v2072 = vpack.c.b16 %v1877, %v1876
    %v2073 = vpack.c.b16 %v1879, %v1878
    %v2074 = vpack.c.b16 %v1881, %v1880
    %v2075 = vpack.c.b16 %v1883, %v1882
    %v2076 = vpack.c.b16 %v1885, %v1884
    %v2077 = vpack.c.b16 %v1887, %v1886
    %v2078 = vpack.c.b16 %v1889, %v1888
    %v2079 = vpack.c.b16 %v1891, %v1890
    %v2080 = vpack.c.b16 %v1893, %v1892
    %v2081 = vpack.c.b16 %v1895, %v1894
    %v2082 = vpack.c.b16 %v1897, %v1896
    %v2083 = vpack.c.b16 %v1899, %v1898
    %v2084 = vpack.c.b16 %v1901, %v1900
    %v2085 = vpack.c.b16 %v1903, %v1902
    %v2086 = vpack.c.b16 %v1905, %v1904
    %v2087 = vpack.c.b16 %v1907, %v1906
    %v2088 = vpack.c.b16 %v1909, %v1908
    %v2089 = vpack.c.b16 %v1911, %v1910
    %v2090 = vpack.c.b16 %v1913, %v1912
    %v2091 = vpack.c.b16 %v1915, %v1914
    %v2092 = vpack.c.b16 %v1917, %v1916
    %v2093 = vpack.c.b16 %v1919, %v1918
    %v2094 = vpack.c.b16 %v1921, %v1920
    %v2095 = vpack.c.b16 %v1923, %v1922
    %v2096 = vpack.c.b16 %v1925, %v1924
    %v2097 = vpack.c.b16 %v1927, %v1926
    %v2098 = vpack.c.b16 %v1929, %v1928
    %v2099 = vpack.c.b16 %v1931, %v1930
    %v2100 = vpack.c.b16 %v1933, %v1932
    %v2101 = vpack.c.b16 %v1935, %v1934
    %v2102 = vpack.c.b16 %v1937, %v1936
    %v2103 = vpack.c.b16 %v1939, %v1938
    %v2104 = vpack.c.b16 %v1941, %v1940
    %v2105 = vpack.c.b16 %v1943, %v1942
    %v2106 = vpack.c.b16 %v1945, %v1944
    %v2107 = vpack.c.b16 %v1947, %v1946
    %v2108 = vpack.c.b16 %v1949, %v1948
    %v2109 = vpack.c.b16 %v1951, %v1950
    %v2110 = vpack.c.b16 %v1953, %v1952
    %v2111 = vpack.c.b16 %v1955, %v1954
    %v2112 = vpack.c.b16 %v1957, %v1956
    %v2113 = vpack.c.b16 %v1959, %v1958
    %v2114 = vpack.c.b16 %v1961, %v1960
    %v2115 = vpack.c.b16 %v1963, %v1962
    %v2116 = vpack.c.b16 %v1965, %v1964
    %v2117 = vpack.c.b16 %v1967, %v1966
    %v2118 = vpack.c.b16 %v1969, %v1968
    %v2119 = vpack.c.b16 %v1971, %v1970
    %v2120 = vpack.c.b16 %v1973, %v1972
    %v2121 = vpack.c.b16 %v1975, %v1974
    %v2122 = vpack.c.b16 %v1977, %v1976
    %v2123 = vpack.c.b16 %v1979, %v1978
    %v2124 = vpack.c.b16 %v1981, %v1980
    %v2125 = vpack.c.b16 %v1983, %v1982
    %v2126 = vpack.c.b16 %v1985, %v1984
    %v2127 = vpack.c.b16 %v1987, %v1986
    %v2128 = vpack.c.b16 %v1989, %v1988
    %v2129 = vpack.c.b16 %v1991, %v1990
    %v2130 = vpack.c.b16 %v1993, %v1992
    %v2131 = vpack.c.b16 %v1995, %v1994
    %v2132 = vpack.c.b16 %v1997, %v1996
    %v2133 = vpack.c.b16 %v1999, %v1998
    %v2134 = vpack.c.b16 %v2001, %v2000
    %v2135 = vpack.c.b16 %v2003, %v2002
    %v2136 = vpack.c.b16 %v2005, %v2004
    %v2137 = vpack.c.b16 %v2007, %v2006
    %v2138 = vpack.c.b16 %v2009, %v2008
    %v2139 = vpack.c.b16 %v2011, %v2010
    %2268 = vmatprep.subr.bf16.mxu0 0
    %2269 = vmatpush1.bf16.msra.mxu0 %v2019
    %2270 = vmatprep.subr.bf16.mxu0 0
    %2271 = vmatpush1.bf16.msra.mxu0 %v2018
    %2272 = vmatprep.subr.bf16.mxu0 0
    %2273 = vmatpush1.bf16.msra.mxu0 %v2017
    %2274 = vmatprep.subr.bf16.mxu0 0
    %2275 = vmatpush1.bf16.msra.mxu0 %v2016
    %2276 = vmatprep.subr.bf16.mxu0 0
    %2277 = vmatpush1.bf16.msra.mxu0 %v2015
    %2278 = vmatprep.subr.bf16.mxu0 0
    %2279 = vmatpush1.bf16.msra.mxu0 %v2014
    %2280 = vmatprep.subr.bf16.mxu0 0
    %2281 = vmatpush1.bf16.msra.mxu0 %v2013
    %2282 = vmatprep.subr.bf16.mxu0 0
    %2283 = vmatpush1.bf16.msra.mxu0 %v2012
    %2284 = vmatprep.subr.bf16.mxu0 0
    %2285 = vmatpush2.bf16.msra.mxu0 %v2027
    %2286 = vmatprep.subr.bf16.mxu0 0
    %2287 = vmatpush2.bf16.msra.mxu0 %v2026
    %2288 = vmatprep.subr.bf16.mxu0 0
    %2289 = vmatpush2.bf16.msra.mxu0 %v2025
    %2290 = vmatprep.subr.bf16.mxu0 0
    %2291 = vmatpush2.bf16.msra.mxu0 %v2024
    %2292 = vmatprep.subr.bf16.mxu0 0
    %2293 = vmatpush2.bf16.msra.mxu0 %v2023
    %2294 = vmatprep.subr.bf16.mxu0 0
    %2295 = vmatpush2.bf16.msra.mxu0 %v2022
    %2296 = vmatprep.subr.bf16.mxu0 0
    %2297 = vmatpush2.bf16.msra.mxu0 %v2021
    %2298 = vmatprep.subr.bf16.mxu0 0
    %2299 = vmatpush2.bf16.msra.mxu0 %v2020
    %2300 = vmatprep.mubr.bf16.mxu0 %v1222
    %2301 = vmatmul.mubr.bf16.gmra.mxu0 %v1221
    %v2302 = vpop.f32.mrf.mxu0
    %v2303 = vadd.f32 %v1498, %v2302
    %v2304 = vpop.f32.mrf.mxu0
    %v2305 = vpop.f32.mrf.mxu0
    %v2306 = vadd.f32 %v1498, %v2305
    %v2307 = vpop.f32.mrf.mxu0
    %2308 = vdwg.mxu0
    %2309 = vmatprep.subr.bf16.mxu0 0
    %2310 = vmatpush1.bf16.msra.mxu0 %v2035
    %2311 = vmatprep.subr.bf16.mxu0 0
    %2312 = vmatpush1.bf16.msra.mxu0 %v2034
    %2313 = vmatprep.subr.bf16.mxu0 0
    %2314 = vmatpush1.bf16.msra.mxu0 %v2033
    %2315 = vmatprep.subr.bf16.mxu0 0
    %2316 = vmatpush1.bf16.msra.mxu0 %v2032
    %2317 = vmatprep.subr.bf16.mxu0 0
    %2318 = vmatpush1.bf16.msra.mxu0 %v2031
    %2319 = vmatprep.subr.bf16.mxu0 0
    %2320 = vmatpush1.bf16.msra.mxu0 %v2030
    %2321 = vmatprep.subr.bf16.mxu0 0
    %2322 = vmatpush1.bf16.msra.mxu0 %v2029
    %2323 = vmatprep.subr.bf16.mxu0 0
    %2324 = vmatpush1.bf16.msra.mxu0 %v2028
    %2325 = vmatprep.subr.bf16.mxu0 0
    %2326 = vmatpush2.bf16.msra.mxu0 %v2043
    %2327 = vmatprep.subr.bf16.mxu0 0
    %2328 = vmatpush2.bf16.msra.mxu0 %v2042
    %2329 = vmatprep.subr.bf16.mxu0 0
    %2330 = vmatpush2.bf16.msra.mxu0 %v2041
    %2331 = vmatprep.subr.bf16.mxu0 0
    %2332 = vmatpush2.bf16.msra.mxu0 %v2040
    %2333 = vmatprep.subr.bf16.mxu0 0
    %2334 = vmatpush2.bf16.msra.mxu0 %v2039
    %2335 = vmatprep.subr.bf16.mxu0 0
    %2336 = vmatpush2.bf16.msra.mxu0 %v2038
    %2337 = vmatprep.subr.bf16.mxu0 0
    %2338 = vmatpush2.bf16.msra.mxu0 %v2037
    %2339 = vmatprep.subr.bf16.mxu0 0
    %2340 = vmatpush2.bf16.msra.mxu0 %v2036
    %2341 = vmatprep.mubr.bf16.mxu0 %v1224
    %2342 = vmatmul.mubr.bf16.gmra.mxu0 %v1223
    %v2343 = vpop.f32.mrf.mxu0
    %v2344 = vadd.f32 %v2303, %v2343
    %v2345 = vpop.f32.mrf.mxu0
    %v2346 = vpop.f32.mrf.mxu0
    %v2347 = vadd.f32 %v2306, %v2346
    %v2348 = vpop.f32.mrf.mxu0
    %2349 = vdwg.mxu0
    %2350 = vmatprep.subr.bf16.mxu0 0
    %2351 = vmatpush1.bf16.msra.mxu0 %v2051
    %2352 = vmatprep.subr.bf16.mxu0 0
    %2353 = vmatpush1.bf16.msra.mxu0 %v2050
    %2354 = vmatprep.subr.bf16.mxu0 0
    %2355 = vmatpush1.bf16.msra.mxu0 %v2049
    %2356 = vmatprep.subr.bf16.mxu0 0
    %2357 = vmatpush1.bf16.msra.mxu0 %v2048
    %2358 = vmatprep.subr.bf16.mxu0 0
    %2359 = vmatpush1.bf16.msra.mxu0 %v2047
    %2360 = vmatprep.subr.bf16.mxu0 0
    %2361 = vmatpush1.bf16.msra.mxu0 %v2046
    %2362 = vmatprep.subr.bf16.mxu0 0
    %2363 = vmatpush1.bf16.msra.mxu0 %v2045
    %2364 = vmatprep.subr.bf16.mxu0 0
    %2365 = vmatpush1.bf16.msra.mxu0 %v2044
    %2366 = vmatprep.subr.bf16.mxu0 0
    %2367 = vmatpush2.bf16.msra.mxu0 %v2059
    %2368 = vmatprep.subr.bf16.mxu0 0
    %2369 = vmatpush2.bf16.msra.mxu0 %v2058
    %2370 = vmatprep.subr.bf16.mxu0 0
    %2371 = vmatpush2.bf16.msra.mxu0 %v2057
    %2372 = vmatprep.subr.bf16.mxu0 0
    %2373 = vmatpush2.bf16.msra.mxu0 %v2056
    %2374 = vmatprep.subr.bf16.mxu0 0
    %2375 = vmatpush2.bf16.msra.mxu0 %v2055
    %2376 = vmatprep.subr.bf16.mxu0 0
    %2377 = vmatpush2.bf16.msra.mxu0 %v2054
    %2378 = vmatprep.subr.bf16.mxu0 0
    %2379 = vmatpush2.bf16.msra.mxu0 %v2053
    %2380 = vmatprep.subr.bf16.mxu0 0
    %2381 = vmatpush2.bf16.msra.mxu0 %v2052
    %2382 = vmatprep.mubr.bf16.mxu0 %v1226
    %2383 = vmatmul.mubr.bf16.gmra.mxu0 %v1225
    %v2384 = vpop.f32.mrf.mxu0
    %v2385 = vadd.f32 %v2344, %v2384
    %v2386 = vpop.f32.mrf.mxu0
    %v2387 = vpop.f32.mrf.mxu0
    %v2388 = vadd.f32 %v2347, %v2387
    %v2389 = vpop.f32.mrf.mxu0
    %2390 = vdwg.mxu0
    %2391 = vmatprep.subr.bf16.mxu0 0
    %2392 = vmatpush1.bf16.msra.mxu0 %v2067
    %2393 = vmatprep.subr.bf16.mxu0 0
    %2394 = vmatpush1.bf16.msra.mxu0 %v2066
    %2395 = vmatprep.subr.bf16.mxu0 0
    %2396 = vmatpush1.bf16.msra.mxu0 %v2065
    %2397 = vmatprep.subr.bf16.mxu0 0
    %2398 = vmatpush1.bf16.msra.mxu0 %v2064
    %2399 = vmatprep.subr.bf16.mxu0 0
    %2400 = vmatpush1.bf16.msra.mxu0 %v2063
    %2401 = vmatprep.subr.bf16.mxu0 0
    %2402 = vmatpush1.bf16.msra.mxu0 %v2062
    %2403 = vmatprep.subr.bf16.mxu0 0
    %2404 = vmatpush1.bf16.msra.mxu0 %v2061
    %2405 = vmatprep.subr.bf16.mxu0 0
    %2406 = vmatpush1.bf16.msra.mxu0 %v2060
    %2407 = vmatprep.subr.bf16.mxu0 0
    %2408 = vmatpush2.bf16.msra.mxu0 %v2075
    %2409 = vmatprep.subr.bf16.mxu0 0
    %2410 = vmatpush2.bf16.msra.mxu0 %v2074
    %2411 = vmatprep.subr.bf16.mxu0 0
    %2412 = vmatpush2.bf16.msra.mxu0 %v2073
    %2413 = vmatprep.subr.bf16.mxu0 0
    %2414 = vmatpush2.bf16.msra.mxu0 %v2072
    %2415 = vmatprep.subr.bf16.mxu0 0
    %2416 = vmatpush2.bf16.msra.mxu0 %v2071
    %2417 = vmatprep.subr.bf16.mxu0 0
    %2418 = vmatpush2.bf16.msra.mxu0 %v2070
    %2419 = vmatprep.subr.bf16.mxu0 0
    %2420 = vmatpush2.bf16.msra.mxu0 %v2069
    %2421 = vmatprep.subr.bf16.mxu0 0
    %2422 = vmatpush2.bf16.msra.mxu0 %v2068
    %2423 = vmatprep.mubr.bf16.mxu0 %v1228
    %2424 = vmatmul.mubr.bf16.gmra.mxu0 %v1227
    %v2425 = vpop.f32.mrf.mxu0
    %v2426 = vadd.f32 %v2385, %v2425
    %v2427 = vpop.f32.mrf.mxu0
    %v2428 = vpop.f32.mrf.mxu0
    %v2429 = vadd.f32 %v2388, %v2428
    %v2430 = vpop.f32.mrf.mxu0
    %2431 = vdwg.mxu0
    %2432 = vmatprep.subr.bf16.mxu0 0
    %2433 = vmatpush1.bf16.msra.mxu0 %v2083
    %2434 = vmatprep.subr.bf16.mxu0 0
    %2435 = vmatpush1.bf16.msra.mxu0 %v2082
    %2436 = vmatprep.subr.bf16.mxu0 0
    %2437 = vmatpush1.bf16.msra.mxu0 %v2081
    %2438 = vmatprep.subr.bf16.mxu0 0
    %2439 = vmatpush1.bf16.msra.mxu0 %v2080
    %2440 = vmatprep.subr.bf16.mxu0 0
    %2441 = vmatpush1.bf16.msra.mxu0 %v2079
    %2442 = vmatprep.subr.bf16.mxu0 0
    %2443 = vmatpush1.bf16.msra.mxu0 %v2078
    %2444 = vmatprep.subr.bf16.mxu0 0
    %2445 = vmatpush1.bf16.msra.mxu0 %v2077
    %2446 = vmatprep.subr.bf16.mxu0 0
    %2447 = vmatpush1.bf16.msra.mxu0 %v2076
    %2448 = vmatprep.subr.bf16.mxu0 0
    %2449 = vmatpush2.bf16.msra.mxu0 %v2091
    %2450 = vmatprep.subr.bf16.mxu0 0
    %2451 = vmatpush2.bf16.msra.mxu0 %v2090
    %2452 = vmatprep.subr.bf16.mxu0 0
    %2453 = vmatpush2.bf16.msra.mxu0 %v2089
    %2454 = vmatprep.subr.bf16.mxu0 0
    %2455 = vmatpush2.bf16.msra.mxu0 %v2088
    %2456 = vmatprep.subr.bf16.mxu0 0
    %2457 = vmatpush2.bf16.msra.mxu0 %v2087
    %2458 = vmatprep.subr.bf16.mxu0 0
    %2459 = vmatpush2.bf16.msra.mxu0 %v2086
    %2460 = vmatprep.subr.bf16.mxu0 0
    %2461 = vmatpush2.bf16.msra.mxu0 %v2085
    %2462 = vmatprep.subr.bf16.mxu0 0
    %2463 = vmatpush2.bf16.msra.mxu0 %v2084
    %2464 = vmatprep.mubr.bf16.mxu0 %v1230
    %2465 = vmatmul.mubr.bf16.gmra.mxu0 %v1229
    %v2466 = vpop.f32.mrf.mxu0
    %v2467 = vadd.f32 %v2426, %v2466
    %v2468 = vpop.f32.mrf.mxu0
    %v2469 = vpop.f32.mrf.mxu0
    %v2470 = vadd.f32 %v2429, %v2469
    %v2471 = vpop.f32.mrf.mxu0
    %2472 = vdwg.mxu0
    %2473 = vmatprep.subr.bf16.mxu0 0
    %2474 = vmatpush1.bf16.msra.mxu0 %v2099
    %2475 = vmatprep.subr.bf16.mxu0 0
    %2476 = vmatpush1.bf16.msra.mxu0 %v2098
    %2477 = vmatprep.subr.bf16.mxu0 0
    %2478 = vmatpush1.bf16.msra.mxu0 %v2097
    %2479 = vmatprep.subr.bf16.mxu0 0
    %2480 = vmatpush1.bf16.msra.mxu0 %v2096
    %2481 = vmatprep.subr.bf16.mxu0 0
    %2482 = vmatpush1.bf16.msra.mxu0 %v2095
    %2483 = vmatprep.subr.bf16.mxu0 0
    %2484 = vmatpush1.bf16.msra.mxu0 %v2094
    %2485 = vmatprep.subr.bf16.mxu0 0
    %2486 = vmatpush1.bf16.msra.mxu0 %v2093
    %2487 = vmatprep.subr.bf16.mxu0 0
    %2488 = vmatpush1.bf16.msra.mxu0 %v2092
    %2489 = vmatprep.subr.bf16.mxu0 0
    %2490 = vmatpush2.bf16.msra.mxu0 %v2107
    %2491 = vmatprep.subr.bf16.mxu0 0
    %2492 = vmatpush2.bf16.msra.mxu0 %v2106
    %2493 = vmatprep.subr.bf16.mxu0 0
    %2494 = vmatpush2.bf16.msra.mxu0 %v2105
    %2495 = vmatprep.subr.bf16.mxu0 0
    %2496 = vmatpush2.bf16.msra.mxu0 %v2104
    %2497 = vmatprep.subr.bf16.mxu0 0
    %2498 = vmatpush2.bf16.msra.mxu0 %v2103
    %2499 = vmatprep.subr.bf16.mxu0 0
    %2500 = vmatpush2.bf16.msra.mxu0 %v2102
    %2501 = vmatprep.subr.bf16.mxu0 0
    %2502 = vmatpush2.bf16.msra.mxu0 %v2101
    %2503 = vmatprep.subr.bf16.mxu0 0
    %2504 = vmatpush2.bf16.msra.mxu0 %v2100
    %2505 = vmatprep.mubr.bf16.mxu0 %v1232
    %2506 = vmatmul.mubr.bf16.gmra.mxu0 %v1231
    %v2507 = vpop.f32.mrf.mxu0
    %v2508 = vadd.f32 %v2467, %v2507
    %v2509 = vpop.f32.mrf.mxu0
    %v2510 = vpop.f32.mrf.mxu0
    %v2511 = vadd.f32 %v2470, %v2510
    %v2512 = vpop.f32.mrf.mxu0
    %2513 = vdwg.mxu0
    %2514 = vmatprep.subr.bf16.mxu0 0
    %2515 = vmatpush1.bf16.msra.mxu0 %v2115
    %2516 = vmatprep.subr.bf16.mxu0 0
    %2517 = vmatpush1.bf16.msra.mxu0 %v2114
    %2518 = vmatprep.subr.bf16.mxu0 0
    %2519 = vmatpush1.bf16.msra.mxu0 %v2113
    %2520 = vmatprep.subr.bf16.mxu0 0
    %2521 = vmatpush1.bf16.msra.mxu0 %v2112
    %2522 = vmatprep.subr.bf16.mxu0 0
    %2523 = vmatpush1.bf16.msra.mxu0 %v2111
    %2524 = vmatprep.subr.bf16.mxu0 0
    %2525 = vmatpush1.bf16.msra.mxu0 %v2110
    %2526 = vmatprep.subr.bf16.mxu0 0
    %2527 = vmatpush1.bf16.msra.mxu0 %v2109
    %2528 = vmatprep.subr.bf16.mxu0 0
    %2529 = vmatpush1.bf16.msra.mxu0 %v2108
    %2530 = vmatprep.subr.bf16.mxu0 0
    %2531 = vmatpush2.bf16.msra.mxu0 %v2123
    %2532 = vmatprep.subr.bf16.mxu0 0
    %2533 = vmatpush2.bf16.msra.mxu0 %v2122
    %2534 = vmatprep.subr.bf16.mxu0 0
    %2535 = vmatpush2.bf16.msra.mxu0 %v2121
    %2536 = vmatprep.subr.bf16.mxu0 0
    %2537 = vmatpush2.bf16.msra.mxu0 %v2120
    %2538 = vmatprep.subr.bf16.mxu0 0
    %2539 = vmatpush2.bf16.msra.mxu0 %v2119
    %2540 = vmatprep.subr.bf16.mxu0 0
    %2541 = vmatpush2.bf16.msra.mxu0 %v2118
    %2542 = vmatprep.subr.bf16.mxu0 0
    %2543 = vmatpush2.bf16.msra.mxu0 %v2117
    %2544 = vmatprep.subr.bf16.mxu0 0
    %2545 = vmatpush2.bf16.msra.mxu0 %v2116
    %2546 = vmatprep.mubr.bf16.mxu0 %v1234
    %2547 = vmatmul.mubr.bf16.gmra.mxu0 %v1233
    %v2548 = vpop.f32.mrf.mxu0
    %v2549 = vadd.f32 %v2508, %v2548
    %v2550 = vpop.f32.mrf.mxu0
    %v2551 = vpop.f32.mrf.mxu0
    %v2552 = vadd.f32 %v2511, %v2551
    %v2553 = vpop.f32.mrf.mxu0
    %2554 = vdwg.mxu0
    %2555 = vmatprep.subr.bf16.mxu0 0
    %2556 = vmatpush1.bf16.msra.mxu0 %v2131
    %2557 = vmatprep.subr.bf16.mxu0 0
    %2558 = vmatpush1.bf16.msra.mxu0 %v2130
    %2559 = vmatprep.subr.bf16.mxu0 0
    %2560 = vmatpush1.bf16.msra.mxu0 %v2129
    %2561 = vmatprep.subr.bf16.mxu0 0
    %2562 = vmatpush1.bf16.msra.mxu0 %v2128
    %2563 = vmatprep.subr.bf16.mxu0 0
    %2564 = vmatpush1.bf16.msra.mxu0 %v2127
    %2565 = vmatprep.subr.bf16.mxu0 0
    %2566 = vmatpush1.bf16.msra.mxu0 %v2126
    %2567 = vmatprep.subr.bf16.mxu0 0
    %2568 = vmatpush1.bf16.msra.mxu0 %v2125
    %2569 = vmatprep.subr.bf16.mxu0 0
    %2570 = vmatpush1.bf16.msra.mxu0 %v2124
    %2571 = vmatprep.subr.bf16.mxu0 0
    %2572 = vmatpush2.bf16.msra.mxu0 %v2139
    %2573 = vmatprep.subr.bf16.mxu0 0
    %2574 = vmatpush2.bf16.msra.mxu0 %v2138
    %2575 = vmatprep.subr.bf16.mxu0 0
    %2576 = vmatpush2.bf16.msra.mxu0 %v2137
    %2577 = vmatprep.subr.bf16.mxu0 0
    %2578 = vmatpush2.bf16.msra.mxu0 %v2136
    %2579 = vmatprep.subr.bf16.mxu0 0
    %2580 = vmatpush2.bf16.msra.mxu0 %v2135
    %2581 = vmatprep.subr.bf16.mxu0 0
    %2582 = vmatpush2.bf16.msra.mxu0 %v2134
    %2583 = vmatprep.subr.bf16.mxu0 0
    %2584 = vmatpush2.bf16.msra.mxu0 %v2133
    %2585 = vmatprep.subr.bf16.mxu0 0
    %2586 = vmatpush2.bf16.msra.mxu0 %v2132
    %2587 = vmatprep.mubr.bf16.mxu0 %v1236
    %2588 = vmatmul.mubr.bf16.gmra.mxu0 %v1235
    %v2589 = vpop.f32.mrf.mxu0
    %v2590 = vadd.f32 %v2549, %v2589
    %v2591 = vpop.f32.mrf.mxu0
    %v2592 = vpop.f32.mrf.mxu0
    %v2593 = vadd.f32 %v2552, %v2592
    %v2594 = vpop.f32.mrf.mxu0
    %2595 = vdwg.mxu0
    %v2596 = vadd.f32 %v563, %v2590
    %v2597 = vadd.f32 %v564, %v2593
    %v2598 = vld [vmem:[%s12] sm:$0x1]
    %v2599 = vld [vmem:[%s13] sm:$0x1]
    %v2600 = vsel %vm228, %v2596, 0.0
    %2601 = vadd.xlane.f32.xlu0 %v2600
    %v2602 = vpop.xlane.xlu0 %2601
    %v2603 = vsel %vm228, %v2597, 0.0
    %2604 = vadd.xlane.f32.xlu0 %v2603
    %v2605 = vpop.xlane.xlu0 %2604
    %v2606 = vmul.f32 %v2602, %v528
    %v2607 = vmul.f32 %v2605, %v528
    %v2608 = vsub.f32 %v2596, %v2606
    %v2609 = vsub.f32 %v2597, %v2607
    %v2610 = vmul.f32 %v2608, %v2608
    %v2611 = vmul.f32 %v2609, %v2609
    %v2612 = vsel %vm228, %v2610, 0.0
    %2613 = vadd.xlane.f32.xlu0 %v2612
    %v2614 = vpop.xlane.xlu0 %2613
    %v2615 = vsel %vm228, %v2611, 0.0
    %2616 = vadd.xlane.f32.xlu0 %v2615
    %v2617 = vpop.xlane.xlu0 %2616
    %v2618 = vmul.f32 %v2614, %v528
    %v2619 = vmul.f32 %v2617, %v528
    %v2620 = vadd.f32 %v2618, 1e-05
    %v2621 = vadd.f32 %v2619, 1e-05
    %v2622 = vrsqrt.pop %v2620
    %v2623 = vrsqrt.pop %v2621
    %v2624 = vmul.f32 %v2608, %v2622
    %v2625 = vmul.f32 %v2609, %v2623
    %v2627 = vlaneseq
    %v2628 = vshrl.u32 %v2627, 7
    %v2629 = vsub.s32 0, %v2628
    %v2630 = vrot.slane %v2598, %v2629
    %v2632 = vmul.f32 %v2624, %v2630
    %v2633 = vmul.f32 %v2625, %v2630
    %v2635 = vlaneseq
    %v2636 = vshrl.u32 %v2635, 7
    %v2637 = vsub.s32 0, %v2636
    %v2638 = vrot.slane %v2599, %v2637
    %v2640 = vadd.f32 %v2632, %v2638
    %v2641 = vadd.f32 %v2633, %v2638
    %v2642 = vpack.c.bf16 %v2641, %v2640
    %s2643 = scalar_lea.vmem [#allocation7], 48
    %v2644 = vld [vmem:[%s2643] sm:$0xff]
    %v2645 = vld [vmem:[%s2643 + $0x8] sm:$0xf]
    %v2646 = vld [vmem:[%s2643 + $0xc] sm:$0xff]
    %v2647 = vld [vmem:[%s2643 + $0x14] sm:$0xf]
    %v2648 = vld [vmem:[%s2643 + $0x18] sm:$0xff]
    %v2649 = vld [vmem:[%s2643 + $0x20] sm:$0xf]
    %v2650 = vld [vmem:[%s2643 + $0x24] sm:$0xff]
    %v2651 = vld [vmem:[%s2643 + $0x2c] sm:$0xf]
    %s2652 = scalar_lea.vmem %s3, 3
    %v2653 = vld [vmem:[%s2652] sm:$0x7]
    %v2655 = vlaneseq
    %v2656 = vshrl.u32 %v2655, 7
    %v2657 = vsub.s32 0, %v2656
    %v2658 = vrot.slane %v2653, %v2657
    %v2659 = vlaneseq
    %v2660 = vshrl.u32 %v2659, 7
    %v2661 = vsub.s32 1, %v2660
    %v2662 = vrot.slane %v2653, %v2661
    %v2663 = vlaneseq
    %v2664 = vshrl.u32 %v2663, 7
    %v2665 = vsub.s32 2, %v2664
    %v2666 = vrot.slane %v2653, %v2665
    %v2678 = vunpack.c.l.b16 %v2644
    %v2679 = vunpack.c.h.b16 %v2644
    %v2680 = vunpack.c.l.b16 %v2645
    %v2681 = vunpack.c.l.b16 %v2646
    %v2682 = vunpack.c.h.b16 %v2646
    %v2683 = vunpack.c.l.b16 %v2647
    %v2684 = vunpack.c.l.b16 %v2648
    %v2685 = vunpack.c.h.b16 %v2648
    %v2686 = vunpack.c.l.b16 %v2649
    %v2687 = vunpack.c.l.b16 %v2650
    %v2688 = vunpack.c.h.b16 %v2650
    %v2689 = vunpack.c.l.b16 %v2651
    %v2690 = vpack.c.b16 %v2681, %v2678
    %v2691 = vpack.c.b16 %v2682, %v2679
    %v2692 = vpack.c.b16 %v2683, %v2680
    %v2693 = vpack.c.b16 %v2687, %v2684
    %v2694 = vpack.c.b16 %v2688, %v2685
    %v2695 = vpack.c.b16 %v2689, %v2686
    %v2703 = vsel %vm228, %v2642, 0
    %2705 = vmatprep.subr.bf16.mxu0 0
    %2706 = vmatpush1.bf16.msra.mxu0 0
    %2707 = vmatprep.subr.bf16.mxu0 0
    %2708 = vmatpush1.bf16.msra.mxu0 0
    %2709 = vmatprep.subr.bf16.mxu0 0
    %2710 = vmatpush1.bf16.msra.mxu0 0
    %2711 = vmatprep.subr.bf16.mxu0 0
    %2712 = vmatpush1.bf16.msra.mxu0 0
    %2713 = vmatprep.subr.bf16.mxu0 0
    %2714 = vmatpush1.bf16.msra.mxu0 0
    %2715 = vmatprep.subr.bf16.mxu0 0
    %2716 = vmatpush1.bf16.msra.mxu0 0
    %2717 = vmatprep.subr.bf16.mxu0 %v2694
    %2718 = vmatpush1.bf16.msra.mxu0 %v2693
    %2719 = vmatprep.subr.bf16.mxu0 %v2691
    %2720 = vmatpush1.bf16.msra.mxu0 %v2690
    %2721 = vmatprep.subr.bf16.mxu0 0
    %2722 = vmatpush2.bf16.msra.mxu0 0
    %2723 = vmatprep.subr.bf16.mxu0 0
    %2724 = vmatpush2.bf16.msra.mxu0 0
    %2725 = vmatprep.subr.bf16.mxu0 0
    %2726 = vmatpush2.bf16.msra.mxu0 0
    %2727 = vmatprep.subr.bf16.mxu0 0
    %2728 = vmatpush2.bf16.msra.mxu0 0
    %2729 = vmatprep.subr.bf16.mxu0 0
    %2730 = vmatpush2.bf16.msra.mxu0 0
    %2731 = vmatprep.subr.bf16.mxu0 0
    %2732 = vmatpush2.bf16.msra.mxu0 0
    %2733 = vmatprep.subr.bf16.mxu0 0
    %2734 = vmatpush2.bf16.msra.mxu0 0
    %2735 = vmatprep.subr.bf16.mxu0 0
    %2736 = vmatpush2.bf16.msra.mxu0 0
    %2737 = vmatprep.mubr.bf16.mxu0 0
    %2738 = vmatmul.mubr.bf16.gmra.mxu0 %v2703
    %v2739 = vpop.f32.mrf.mxu0
    %v2740 = vadd.f32 %v2658, %v2739
    %v2741 = vpop.f32.mrf.mxu0
    %v2742 = vadd.f32 %v2662, %v2741
    %v2743 = vpop.f32.mrf.mxu0
    %v2744 = vadd.f32 %v2658, %v2743
    %v2745 = vpop.f32.mrf.mxu0
    %v2746 = vadd.f32 %v2662, %v2745
    %2747 = vdwg.mxu0
    %2748 = vmatprep.subr.bf16.mxu0 0
    %2749 = vmatpush1.bf16.msra.mxu0 0
    %2750 = vmatprep.subr.bf16.mxu0 0
    %2751 = vmatpush1.bf16.msra.mxu0 0
    %2752 = vmatprep.subr.bf16.mxu0 0
    %2753 = vmatpush1.bf16.msra.mxu0 0
    %2754 = vmatprep.subr.bf16.mxu0 0
    %2755 = vmatpush1.bf16.msra.mxu0 0
    %2756 = vmatprep.subr.bf16.mxu0 0
    %2757 = vmatpush1.bf16.msra.mxu0 0
    %2758 = vmatprep.subr.bf16.mxu0 0
    %2759 = vmatpush1.bf16.msra.mxu0 0
    %2760 = vmatprep.subr.bf16.mxu0 0
    %2761 = vmatpush1.bf16.msra.mxu0 %v2695
    %2762 = vmatprep.subr.bf16.mxu0 0
    %2763 = vmatpush1.bf16.msra.mxu0 %v2692
    %2764 = vmatprep.subr.bf16.mxu0 0
    %2765 = vmatpush2.bf16.msra.mxu0 0
    %2766 = vmatprep.subr.bf16.mxu0 0
    %2767 = vmatpush2.bf16.msra.mxu0 0
    %2768 = vmatprep.subr.bf16.mxu0 0
    %2769 = vmatpush2.bf16.msra.mxu0 0
    %2770 = vmatprep.subr.bf16.mxu0 0
    %2771 = vmatpush2.bf16.msra.mxu0 0
    %2772 = vmatprep.subr.bf16.mxu0 0
    %2773 = vmatpush2.bf16.msra.mxu0 0
    %2774 = vmatprep.subr.bf16.mxu0 0
    %2775 = vmatpush2.bf16.msra.mxu0 0
    %2776 = vmatprep.subr.bf16.mxu0 0
    %2777 = vmatpush2.bf16.msra.mxu0 0
    %2778 = vmatprep.subr.bf16.mxu0 0
    %2779 = vmatpush2.bf16.msra.mxu0 0
    %2780 = vmatprep.mubr.bf16.mxu0 0
    %2781 = vmatmul.mubr.bf16.gmra.mxu0 %v2703
    %v2782 = vpop.f32.mrf.mxu0
    %v2783 = vadd.f32 %v2666, %v2782
    %v2784 = vpop.f32.mrf.mxu0
    %v2785 = vpop.f32.mrf.mxu0
    %v2786 = vadd.f32 %v2666, %v2785
    %v2787 = vpop.f32.mrf.mxu0
    %2788 = vdwg.mxu0
    %v2789 = vmul.f32 %v2740, %v2742
    %v2790 = vmul.f32 %v2744, %v2742
    %v2791 = vpack.c.bf16 %v2790, %v2789
    %v2793 = vsel %vm228, %v2791, 0
    %2795 = vmatprep.subr.bf16.mxu0 0
    %2796 = vmatpush1.bf16.msra.mxu0 0
    %2797 = vmatprep.subr.bf16.mxu0 0
    %2798 = vmatpush1.bf16.msra.mxu0 0
    %2799 = vmatprep.subr.bf16.mxu0 0
    %2800 = vmatpush1.bf16.msra.mxu0 0
    %2801 = vmatprep.subr.bf16.mxu0 0
    %2802 = vmatpush1.bf16.msra.mxu0 0
    %2803 = vmatprep.subr.bf16.mxu0 0
    %2804 = vmatpush1.bf16.msra.mxu0 0
    %2805 = vmatprep.subr.bf16.mxu0 0
    %2806 = vmatpush1.bf16.msra.mxu0 0
    %2807 = vmatprep.subr.bf16.mxu0 0
    %2808 = vmatpush1.bf16.msra.mxu0 %v328
    %2809 = vmatprep.subr.bf16.mxu0 0
    %2810 = vmatpush1.bf16.msra.mxu0 %v327
    %2811 = vmatprep.subr.bf16.mxu0 0
    %2812 = vmatpush2.bf16.msra.mxu0 0
    %2813 = vmatprep.subr.bf16.mxu0 0
    %2814 = vmatpush2.bf16.msra.mxu0 0
    %2815 = vmatprep.subr.bf16.mxu0 0
    %2816 = vmatpush2.bf16.msra.mxu0 0
    %2817 = vmatprep.subr.bf16.mxu0 0
    %2818 = vmatpush2.bf16.msra.mxu0 0
    %2819 = vmatprep.subr.bf16.mxu0 0
    %2820 = vmatpush2.bf16.msra.mxu0 0
    %2821 = vmatprep.subr.bf16.mxu0 0
    %2822 = vmatpush2.bf16.msra.mxu0 0
    %2823 = vmatprep.subr.bf16.mxu0 0
    %2824 = vmatpush2.bf16.msra.mxu0 0
    %2825 = vmatprep.subr.bf16.mxu0 0
    %2826 = vmatpush2.bf16.msra.mxu0 0
    %2827 = vmatprep.mubr.bf16.mxu0 0
    %2828 = vmatmul.mubr.bf16.gmra.mxu0 %v2793
    %v2829 = vpop.f32.mrf.mxu0
    %v2830 = vadd.f32 0.0, %v2829
    %v2831 = vpop.f32.mrf.mxu0
    %v2832 = vpop.f32.mrf.mxu0
    %v2833 = vadd.f32 0.0, %v2832
    %v2834 = vpop.f32.mrf.mxu0
    %2835 = vdwg.mxu0
    %v2836 = vmul.f32 %v2740, %v2746
    %v2837 = vmul.f32 %v2744, %v2746
    %v2838 = vpack.c.bf16 %v2837, %v2836
    %v2840 = vsel %vm228, %v2838, 0
    %2842 = vmatprep.subr.bf16.mxu0 0
    %2843 = vmatpush1.bf16.msra.mxu0 0
    %2844 = vmatprep.subr.bf16.mxu0 0
    %2845 = vmatpush1.bf16.msra.mxu0 0
    %2846 = vmatprep.subr.bf16.mxu0 0
    %2847 = vmatpush1.bf16.msra.mxu0 0
    %2848 = vmatprep.subr.bf16.mxu0 0
    %2849 = vmatpush1.bf16.msra.mxu0 0
    %2850 = vmatprep.subr.bf16.mxu0 0
    %2851 = vmatpush1.bf16.msra.mxu0 0
    %2852 = vmatprep.subr.bf16.mxu0 0
    %2853 = vmatpush1.bf16.msra.mxu0 0
    %2854 = vmatprep.subr.bf16.mxu0 0
    %2855 = vmatpush1.bf16.msra.mxu0 %v328
    %2856 = vmatprep.subr.bf16.mxu0 0
    %2857 = vmatpush1.bf16.msra.mxu0 %v327
    %2858 = vmatprep.subr.bf16.mxu0 0
    %2859 = vmatpush2.bf16.msra.mxu0 0
    %2860 = vmatprep.subr.bf16.mxu0 0
    %2861 = vmatpush2.bf16.msra.mxu0 0
    %2862 = vmatprep.subr.bf16.mxu0 0
    %2863 = vmatpush2.bf16.msra.mxu0 0
    %2864 = vmatprep.subr.bf16.mxu0 0
    %2865 = vmatpush2.bf16.msra.mxu0 0
    %2866 = vmatprep.subr.bf16.mxu0 0
    %2867 = vmatpush2.bf16.msra.mxu0 0
    %2868 = vmatprep.subr.bf16.mxu0 0
    %2869 = vmatpush2.bf16.msra.mxu0 0
    %2870 = vmatprep.subr.bf16.mxu0 0
    %2871 = vmatpush2.bf16.msra.mxu0 0
    %2872 = vmatprep.subr.bf16.mxu0 0
    %2873 = vmatpush2.bf16.msra.mxu0 0
    %2874 = vmatprep.mubr.bf16.mxu0 0
    %2875 = vmatmul.mubr.bf16.gmra.mxu0 %v2840
    %v2876 = vpop.f32.mrf.mxu0
    %v2877 = vadd.f32 0.0, %v2876
    %v2878 = vpop.f32.mrf.mxu0
    %v2879 = vpop.f32.mrf.mxu0
    %v2880 = vadd.f32 0.0, %v2879
    %v2881 = vpop.f32.mrf.mxu0
    %2882 = vdwg.mxu0
    %v2883 = vmax.f32 %v2830, %v2877
    %v2884 = vmax.f32 %v2833, %v2880
    %v2885 = vsub.f32 %v2830, %v2883
    %v2886 = vsub.f32 %v2833, %v2884
    %v2887 = vmul.f32 %v2885, 1.442695
    %v2888 = vpow.pop %v2887
    %v2889 = vmul.f32 %v2886, 1.442695
    %v2890 = vpow.pop %v2889
    %v2891 = vsub.f32 %v2877, %v2883
    %v2892 = vsub.f32 %v2880, %v2884
    %v2893 = vmul.f32 %v2891, 1.442695
    %v2894 = vpow.pop %v2893
    %v2895 = vmul.f32 %v2892, 1.442695
    %v2896 = vpow.pop %v2895
    %v2897 = vadd.f32 %v2888, %v2894
    %v2898 = vadd.f32 %v2890, %v2896
    %v2899 = vrcp.pop %v2897
    %v2900 = vrcp.pop %v2898
    %v2901 = vmul.f32 %v2888, %v2899
    %v2902 = vmul.f32 %v2890, %v2900
    %v2903 = vmul.f32 %v2901, %v2783
    %v2904 = vmul.f32 %v2902, %v2783
    %v2905 = vmul.f32 %v2894, %v2899
    %v2906 = vmul.f32 %v2896, %v2900
    %v2907 = vmul.f32 %v2905, %v2786
    %v2908 = vmul.f32 %v2906, %v2786
    %v2909 = vadd.f32 %v2903, %v2907
    %v2910 = vadd.f32 %v2904, %v2908
    %v2911 = vpack.c.bf16 %v2910, %v2909
    %s2912 = scalar_lea.vmem [#allocation8], 16
    %v2913 = vld [vmem:[%s2912] sm:$0xf]
    %v2914 = vld [vmem:[%s2912 + $0x4] sm:$0xf]
    %v2915 = vld [vmem:[%s2912 + $0x8] sm:$0xf]
    %v2916 = vld [vmem:[%s2912 + $0xc] sm:$0xf]
    %s2917 = scalar_lea.vmem %s5, 1
    %v2918 = vld [vmem:[%s2917] sm:$0x1]
    %v2920 = vlaneseq
    %v2921 = vshrl.u32 %v2920, 7
    %v2922 = vsub.s32 0, %v2921
    %v2923 = vrot.slane %v2918, %v2922
    %v2929 = vunpack.c.l.b16 %v2913
    %v2930 = vunpack.c.l.b16 %v2914
    %v2931 = vunpack.c.l.b16 %v2915
    %v2932 = vunpack.c.l.b16 %v2916
    %v2933 = vpack.c.b16 %v2930, %v2929
    %v2934 = vpack.c.b16 %v2932, %v2931
    %v2938 = vsel %vm228, %v2911, 0
    %2940 = vmatprep.subr.bf16.mxu0 0
    %2941 = vmatpush1.bf16.msra.mxu0 0
    %2942 = vmatprep.subr.bf16.mxu0 0
    %2943 = vmatpush1.bf16.msra.mxu0 0
    %2944 = vmatprep.subr.bf16.mxu0 0
    %2945 = vmatpush1.bf16.msra.mxu0 0
    %2946 = vmatprep.subr.bf16.mxu0 0
    %2947 = vmatpush1.bf16.msra.mxu0 0
    %2948 = vmatprep.subr.bf16.mxu0 0
    %2949 = vmatpush1.bf16.msra.mxu0 0
    %2950 = vmatprep.subr.bf16.mxu0 0
    %2951 = vmatpush1.bf16.msra.mxu0 0
    %2952 = vmatprep.subr.bf16.mxu0 0
    %2953 = vmatpush1.bf16.msra.mxu0 %v2934
    %2954 = vmatprep.subr.bf16.mxu0 0
    %2955 = vmatpush1.bf16.msra.mxu0 %v2933
    %2956 = vmatprep.subr.bf16.mxu0 0
    %2957 = vmatpush2.bf16.msra.mxu0 0
    %2958 = vmatprep.subr.bf16.mxu0 0
    %2959 = vmatpush2.bf16.msra.mxu0 0
    %2960 = vmatprep.subr.bf16.mxu0 0
    %2961 = vmatpush2.bf16.msra.mxu0 0
    %2962 = vmatprep.subr.bf16.mxu0 0
    %2963 = vmatpush2.bf16.msra.mxu0 0
    %2964 = vmatprep.subr.bf16.mxu0 0
    %2965 = vmatpush2.bf16.msra.mxu0 0
    %2966 = vmatprep.subr.bf16.mxu0 0
    %2967 = vmatpush2.bf16.msra.mxu0 0
    %2968 = vmatprep.subr.bf16.mxu0 0
    %2969 = vmatpush2.bf16.msra.mxu0 0
    %2970 = vmatprep.subr.bf16.mxu0 0
    %2971 = vmatpush2.bf16.msra.mxu0 0
    %2972 = vmatprep.mubr.bf16.mxu0 0
    %2973 = vmatmul.mubr.bf16.gmra.mxu0 %v2938
    %v2974 = vpop.f32.mrf.mxu0
    %v2975 = vadd.f32 %v2923, %v2974
    %v2976 = vpop.f32.mrf.mxu0
    %v2977 = vpop.f32.mrf.mxu0
    %v2978 = vadd.f32 %v2923, %v2977
    %v2979 = vpop.f32.mrf.mxu0
    %2980 = vdwg.mxu0
    %v2981 = vadd.f32 %v2640, %v2975
    %v2982 = vadd.f32 %v2641, %v2978
    %s2983 = scalar_lea.vmem %s6, 1
    %v2984 = vld [vmem:[%s2983] sm:$0x1]
    %s2985 = scalar_lea.vmem %s7, 1
    %v2986 = vld [vmem:[%s2985] sm:$0x1]
    %v2987 = vsel %vm228, %v2981, 0.0
    %2988 = vadd.xlane.f32.xlu0 %v2987
    %v2989 = vpop.xlane.xlu0 %2988
    %v2990 = vsel %vm228, %v2982, 0.0
    %2991 = vadd.xlane.f32.xlu0 %v2990
    %v2992 = vpop.xlane.xlu0 %2991
    %v2993 = vmul.f32 %v2989, %v528
    %v2994 = vmul.f32 %v2992, %v528
    %v2995 = vsub.f32 %v2981, %v2993
    %v2996 = vsub.f32 %v2982, %v2994
    %v2997 = vmul.f32 %v2995, %v2995
    %v2998 = vmul.f32 %v2996, %v2996
    %v2999 = vsel %vm228, %v2997, 0.0
    %3000 = vadd.xlane.f32.xlu0 %v2999
    %v3001 = vpop.xlane.xlu0 %3000
    %v3002 = vsel %vm228, %v2998, 0.0
    %3003 = vadd.xlane.f32.xlu0 %v3002
    %v3004 = vpop.xlane.xlu0 %3003
    %v3005 = vmul.f32 %v3001, %v528
    %v3006 = vmul.f32 %v3004, %v528
    %v3007 = vadd.f32 %v3005, 1e-05
    %v3008 = vadd.f32 %v3006, 1e-05
    %v3009 = vrsqrt.pop %v3007
    %v3010 = vrsqrt.pop %v3008
    %v3011 = vmul.f32 %v2995, %v3009
    %v3012 = vmul.f32 %v2996, %v3010
    %v3014 = vlaneseq
    %v3015 = vshrl.u32 %v3014, 7
    %v3016 = vsub.s32 0, %v3015
    %v3017 = vrot.slane %v2984, %v3016
    %v3019 = vmul.f32 %v3011, %v3017
    %v3020 = vmul.f32 %v3012, %v3017
    %v3022 = vlaneseq
    %v3023 = vshrl.u32 %v3022, 7
    %v3024 = vsub.s32 0, %v3023
    %v3025 = vrot.slane %v2986, %v3024
    %v3027 = vadd.f32 %v3019, %v3025
    %v3028 = vadd.f32 %v3020, %v3025
    %v3029 = vpack.c.bf16 %v3028, %v3027
    %s3030 = scalar_lea.vmem [#allocation10], 256
    %v3031 = vld [vmem:[%s3030] sm:$0xff]
    %v3032 = vld [vmem:[%s3030 + $0x8] sm:$0xff]
    %v3033 = vld [vmem:[%s3030 + $0x10] sm:$0xff]
    %v3034 = vld [vmem:[%s3030 + $0x18] sm:$0xff]
    %v3035 = vld [vmem:[%s3030 + $0x20] sm:$0xff]
    %v3036 = vld [vmem:[%s3030 + $0x28] sm:$0xff]
    %v3037 = vld [vmem:[%s3030 + $0x30] sm:$0xff]
    %v3038 = vld [vmem:[%s3030 + $0x38] sm:$0xff]
    %v3039 = vld [vmem:[%s3030 + $0x40] sm:$0xff]
    %v3040 = vld [vmem:[%s3030 + $0x48] sm:$0xff]
    %v3041 = vld [vmem:[%s3030 + $0x50] sm:$0xff]
    %v3042 = vld [vmem:[%s3030 + $0x58] sm:$0xff]
    %v3043 = vld [vmem:[%s3030 + $0x60] sm:$0xff]
    %v3044 = vld [vmem:[%s3030 + $0x68] sm:$0xff]
    %v3045 = vld [vmem:[%s3030 + $0x70] sm:$0xff]
    %v3046 = vld [vmem:[%s3030 + $0x78] sm:$0xff]
    %v3047 = vld [vmem:[%s3030 + $0x80] sm:$0xff]
    %v3048 = vld [vmem:[%s3030 + $0x88] sm:$0xff]
    %v3049 = vld [vmem:[%s3030 + $0x90] sm:$0xff]
    %v3050 = vld [vmem:[%s3030 + $0x98] sm:$0xff]
    %v3051 = vld [vmem:[%s3030 + $0xa0] sm:$0xff]
    %v3052 = vld [vmem:[%s3030 + $0xa8] sm:$0xff]
    %v3053 = vld [vmem:[%s3030 + $0xb0] sm:$0xff]
    %v3054 = vld [vmem:[%s3030 + $0xb8] sm:$0xff]
    %v3055 = vld [vmem:[%s3030 + $0xc0] sm:$0xff]
    %v3056 = vld [vmem:[%s3030 + $0xc8] sm:$0xff]
    %v3057 = vld [vmem:[%s3030 + $0xd0] sm:$0xff]
    %v3058 = vld [vmem:[%s3030 + $0xd8] sm:$0xff]
    %v3059 = vld [vmem:[%s3030 + $0xe0] sm:$0xff]
    %v3060 = vld [vmem:[%s3030 + $0xe8] sm:$0xff]
    %v3061 = vld [vmem:[%s3030 + $0xf0] sm:$0xff]
    %v3062 = vld [vmem:[%s3030 + $0xf8] sm:$0xff]
    %s3063 = scalar_lea.vmem [#allocation11], 16
    %v3064 = vld [vmem:[%s3063] sm:$0xff]
    %v3065 = vld [vmem:[%s3063 + $0x8] sm:$0xff]
    %v3068 = vlaneseq
    %v3069 = vshrl.u32 %v3068, 7
    %v3070 = vsub.s32 0, %v3069
    %v3071 = vrot.slane %v3064, %v3070
    %v3072 = vlaneseq
    %v3073 = vshrl.u32 %v3072, 7
    %v3074 = vsub.s32 1, %v3073
    %v3075 = vrot.slane %v3064, %v3074
    %v3076 = vlaneseq
    %v3077 = vshrl.u32 %v3076, 7
    %v3078 = vsub.s32 2, %v3077
    %v3079 = vrot.slane %v3064, %v3078
    %v3080 = vlaneseq
    %v3081 = vshrl.u32 %v3080, 7
    %v3082 = vsub.s32 3, %v3081
    %v3083 = vrot.slane %v3064, %v3082
    %v3084 = vlaneseq
    %v3085 = vshrl.u32 %v3084, 7
    %v3086 = vsub.s32 4, %v3085
    %v3087 = vrot.slane %v3064, %v3086
    %v3088 = vlaneseq
    %v3089 = vshrl.u32 %v3088, 7
    %v3090 = vsub.s32 5, %v3089
    %v3091 = vrot.slane %v3064, %v3090
    %v3092 = vlaneseq
    %v3093 = vshrl.u32 %v3092, 7
    %v3094 = vsub.s32 6, %v3093
    %v3095 = vrot.slane %v3064, %v3094
    %v3096 = vlaneseq
    %v3097 = vshrl.u32 %v3096, 7
    %v3098 = vsub.s32 7, %v3097
    %v3099 = vrot.slane %v3064, %v3098
    %v3100 = vlaneseq
    %v3101 = vshrl.u32 %v3100, 7
    %v3102 = vsub.s32 0, %v3101
    %v3103 = vrot.slane %v3065, %v3102
    %v3104 = vlaneseq
    %v3105 = vshrl.u32 %v3104, 7
    %v3106 = vsub.s32 1, %v3105
    %v3107 = vrot.slane %v3065, %v3106
    %v3108 = vlaneseq
    %v3109 = vshrl.u32 %v3108, 7
    %v3110 = vsub.s32 2, %v3109
    %v3111 = vrot.slane %v3065, %v3110
    %v3112 = vlaneseq
    %v3113 = vshrl.u32 %v3112, 7
    %v3114 = vsub.s32 3, %v3113
    %v3115 = vrot.slane %v3065, %v3114
    %v3116 = vlaneseq
    %v3117 = vshrl.u32 %v3116, 7
    %v3118 = vsub.s32 4, %v3117
    %v3119 = vrot.slane %v3065, %v3118
    %v3120 = vlaneseq
    %v3121 = vshrl.u32 %v3120, 7
    %v3122 = vsub.s32 5, %v3121
    %v3123 = vrot.slane %v3065, %v3122
    %v3124 = vlaneseq
    %v3125 = vshrl.u32 %v3124, 7
    %v3126 = vsub.s32 6, %v3125
    %v3127 = vrot.slane %v3065, %v3126
    %v3128 = vlaneseq
    %v3129 = vshrl.u32 %v3128, 7
    %v3130 = vsub.s32 7, %v3129
    %v3131 = vrot.slane %v3065, %v3130
    %v3180 = vunpack.c.l.b16 %v3031
    %v3181 = vunpack.c.h.b16 %v3031
    %v3182 = vunpack.c.l.b16 %v3032
    %v3183 = vunpack.c.h.b16 %v3032
    %v3184 = vunpack.c.l.b16 %v3033
    %v3185 = vunpack.c.h.b16 %v3033
    %v3186 = vunpack.c.l.b16 %v3034
    %v3187 = vunpack.c.h.b16 %v3034
    %v3188 = vunpack.c.l.b16 %v3035
    %v3189 = vunpack.c.h.b16 %v3035
    %v3190 = vunpack.c.l.b16 %v3036
    %v3191 = vunpack.c.h.b16 %v3036
    %v3192 = vunpack.c.l.b16 %v3037
    %v3193 = vunpack.c.h.b16 %v3037
    %v3194 = vunpack.c.l.b16 %v3038
    %v3195 = vunpack.c.h.b16 %v3038
    %v3196 = vunpack.c.l.b16 %v3039
    %v3197 = vunpack.c.h.b16 %v3039
    %v3198 = vunpack.c.l.b16 %v3040
    %v3199 = vunpack.c.h.b16 %v3040
    %v3200 = vunpack.c.l.b16 %v3041
    %v3201 = vunpack.c.h.b16 %v3041
    %v3202 = vunpack.c.l.b16 %v3042
    %v3203 = vunpack.c.h.b16 %v3042
    %v3204 = vunpack.c.l.b16 %v3043
    %v3205 = vunpack.c.h.b16 %v3043
    %v3206 = vunpack.c.l.b16 %v3044
    %v3207 = vunpack.c.h.b16 %v3044
    %v3208 = vunpack.c.l.b16 %v3045
    %v3209 = vunpack.c.h.b16 %v3045
    %v3210 = vunpack.c.l.b16 %v3046
    %v3211 = vunpack.c.h.b16 %v3046
    %v3212 = vunpack.c.l.b16 %v3047
    %v3213 = vunpack.c.h.b16 %v3047
    %v3214 = vunpack.c.l.b16 %v3048
    %v3215 = vunpack.c.h.b16 %v3048
    %v3216 = vunpack.c.l.b16 %v3049
    %v3217 = vunpack.c.h.b16 %v3049
    %v3218 = vunpack.c.l.b16 %v3050
    %v3219 = vunpack.c.h.b16 %v3050
    %v3220 = vunpack.c.l.b16 %v3051
    %v3221 = vunpack.c.h.b16 %v3051
    %v3222 = vunpack.c.l.b16 %v3052
    %v3223 = vunpack.c.h.b16 %v3052
    %v3224 = vunpack.c.l.b16 %v3053
    %v3225 = vunpack.c.h.b16 %v3053
    %v3226 = vunpack.c.l.b16 %v3054
    %v3227 = vunpack.c.h.b16 %v3054
    %v3228 = vunpack.c.l.b16 %v3055
    %v3229 = vunpack.c.h.b16 %v3055
    %v3230 = vunpack.c.l.b16 %v3056
    %v3231 = vunpack.c.h.b16 %v3056
    %v3232 = vunpack.c.l.b16 %v3057
    %v3233 = vunpack.c.h.b16 %v3057
    %v3234 = vunpack.c.l.b16 %v3058
    %v3235 = vunpack.c.h.b16 %v3058
    %v3236 = vunpack.c.l.b16 %v3059
    %v3237 = vunpack.c.h.b16 %v3059
    %v3238 = vunpack.c.l.b16 %v3060
    %v3239 = vunpack.c.h.b16 %v3060
    %v3240 = vunpack.c.l.b16 %v3061
    %v3241 = vunpack.c.h.b16 %v3061
    %v3242 = vunpack.c.l.b16 %v3062
    %v3243 = vunpack.c.h.b16 %v3062
    %v3244 = vpack.c.b16 %v3196, %v3180
    %v3245 = vpack.c.b16 %v3197, %v3181
    %v3246 = vpack.c.b16 %v3198, %v3182
    %v3247 = vpack.c.b16 %v3199, %v3183
    %v3248 = vpack.c.b16 %v3200, %v3184
    %v3249 = vpack.c.b16 %v3201, %v3185
    %v3250 = vpack.c.b16 %v3202, %v3186
    %v3251 = vpack.c.b16 %v3203, %v3187
    %v3252 = vpack.c.b16 %v3204, %v3188
    %v3253 = vpack.c.b16 %v3205, %v3189
    %v3254 = vpack.c.b16 %v3206, %v3190
    %v3255 = vpack.c.b16 %v3207, %v3191
    %v3256 = vpack.c.b16 %v3208, %v3192
    %v3257 = vpack.c.b16 %v3209, %v3193
    %v3258 = vpack.c.b16 %v3210, %v3194
    %v3259 = vpack.c.b16 %v3211, %v3195
    %v3260 = vpack.c.b16 %v3228, %v3212
    %v3261 = vpack.c.b16 %v3229, %v3213
    %v3262 = vpack.c.b16 %v3230, %v3214
    %v3263 = vpack.c.b16 %v3231, %v3215
    %v3264 = vpack.c.b16 %v3232, %v3216
    %v3265 = vpack.c.b16 %v3233, %v3217
    %v3266 = vpack.c.b16 %v3234, %v3218
    %v3267 = vpack.c.b16 %v3235, %v3219
    %v3268 = vpack.c.b16 %v3236, %v3220
    %v3269 = vpack.c.b16 %v3237, %v3221
    %v3270 = vpack.c.b16 %v3238, %v3222
    %v3271 = vpack.c.b16 %v3239, %v3223
    %v3272 = vpack.c.b16 %v3240, %v3224
    %v3273 = vpack.c.b16 %v3241, %v3225
    %v3274 = vpack.c.b16 %v3242, %v3226
    %v3275 = vpack.c.b16 %v3243, %v3227
    %v3309 = vsel %vm228, %v3029, 0
    %3311 = vmatprep.subr.bf16.mxu0 0
    %3312 = vmatpush1.bf16.msra.mxu0 0
    %3313 = vmatprep.subr.bf16.mxu0 0
    %3314 = vmatpush1.bf16.msra.mxu0 0
    %3315 = vmatprep.subr.bf16.mxu0 0
    %3316 = vmatpush1.bf16.msra.mxu0 0
    %3317 = vmatprep.subr.bf16.mxu0 0
    %3318 = vmatpush1.bf16.msra.mxu0 0
    %3319 = vmatprep.subr.bf16.mxu0 0
    %3320 = vmatpush1.bf16.msra.mxu0 0
    %3321 = vmatprep.subr.bf16.mxu0 0
    %3322 = vmatpush1.bf16.msra.mxu0 0
    %3323 = vmatprep.subr.bf16.mxu0 %v3261
    %3324 = vmatpush1.bf16.msra.mxu0 %v3260
    %3325 = vmatprep.subr.bf16.mxu0 %v3245
    %3326 = vmatpush1.bf16.msra.mxu0 %v3244
    %3327 = vmatprep.subr.bf16.mxu0 0
    %3328 = vmatpush2.bf16.msra.mxu0 0
    %3329 = vmatprep.subr.bf16.mxu0 0
    %3330 = vmatpush2.bf16.msra.mxu0 0
    %3331 = vmatprep.subr.bf16.mxu0 0
    %3332 = vmatpush2.bf16.msra.mxu0 0
    %3333 = vmatprep.subr.bf16.mxu0 0
    %3334 = vmatpush2.bf16.msra.mxu0 0
    %3335 = vmatprep.subr.bf16.mxu0 0
    %3336 = vmatpush2.bf16.msra.mxu0 0
    %3337 = vmatprep.subr.bf16.mxu0 0
    %3338 = vmatpush2.bf16.msra.mxu0 0
    %3339 = vmatprep.subr.bf16.mxu0 0
    %3340 = vmatpush2.bf16.msra.mxu0 0
    %3341 = vmatprep.subr.bf16.mxu0 0
    %3342 = vmatpush2.bf16.msra.mxu0 0
    %3343 = vmatprep.mubr.bf16.mxu0 0
    %3344 = vmatmul.mubr.bf16.gmra.mxu0 %v3309
    %v3345 = vpop.f32.mrf.mxu0
    %v3346 = vadd.f32 %v3071, %v3345
    %v3347 = vpop.f32.mrf.mxu0
    %v3348 = vadd.f32 %v3075, %v3347
    %v3349 = vpop.f32.mrf.mxu0
    %v3350 = vadd.f32 %v3071, %v3349
    %v3351 = vpop.f32.mrf.mxu0
    %v3352 = vadd.f32 %v3075, %v3351
    %3353 = vdwg.mxu0
    %3354 = vmatprep.subr.bf16.mxu0 0
    %3355 = vmatpush1.bf16.msra.mxu0 0
    %3356 = vmatprep.subr.bf16.mxu0 0
    %3357 = vmatpush1.bf16.msra.mxu0 0
    %3358 = vmatprep.subr.bf16.mxu0 0
    %3359 = vmatpush1.bf16.msra.mxu0 0
    %3360 = vmatprep.subr.bf16.mxu0 0
    %3361 = vmatpush1.bf16.msra.mxu0 0
    %3362 = vmatprep.subr.bf16.mxu0 0
    %3363 = vmatpush1.bf16.msra.mxu0 0
    %3364 = vmatprep.subr.bf16.mxu0 0
    %3365 = vmatpush1.bf16.msra.mxu0 0
    %3366 = vmatprep.subr.bf16.mxu0 %v3263
    %3367 = vmatpush1.bf16.msra.mxu0 %v3262
    %3368 = vmatprep.subr.bf16.mxu0 %v3247
    %3369 = vmatpush1.bf16.msra.mxu0 %v3246
    %3370 = vmatprep.subr.bf16.mxu0 0
    %3371 = vmatpush2.bf16.msra.mxu0 0
    %3372 = vmatprep.subr.bf16.mxu0 0
    %3373 = vmatpush2.bf16.msra.mxu0 0
    %3374 = vmatprep.subr.bf16.mxu0 0
    %3375 = vmatpush2.bf16.msra.mxu0 0
    %3376 = vmatprep.subr.bf16.mxu0 0
    %3377 = vmatpush2.bf16.msra.mxu0 0
    %3378 = vmatprep.subr.bf16.mxu0 0
    %3379 = vmatpush2.bf16.msra.mxu0 0
    %3380 = vmatprep.subr.bf16.mxu0 0
    %3381 = vmatpush2.bf16.msra.mxu0 0
    %3382 = vmatprep.subr.bf16.mxu0 0
    %3383 = vmatpush2.bf16.msra.mxu0 0
    %3384 = vmatprep.subr.bf16.mxu0 0
    %3385 = vmatpush2.bf16.msra.mxu0 0
    %3386 = vmatprep.mubr.bf16.mxu0 0
    %3387 = vmatmul.mubr.bf16.gmra.mxu0 %v3309
    %v3388 = vpop.f32.mrf.mxu0
    %v3389 = vadd.f32 %v3079, %v3388
    %v3390 = vpop.f32.mrf.mxu0
    %v3391 = vadd.f32 %v3083, %v3390
    %v3392 = vpop.f32.mrf.mxu0
    %v3393 = vadd.f32 %v3079, %v3392
    %v3394 = vpop.f32.mrf.mxu0
    %v3395 = vadd.f32 %v3083, %v3394
    %3396 = vdwg.mxu0
    %3397 = vmatprep.subr.bf16.mxu0 0
    %3398 = vmatpush1.bf16.msra.mxu0 0
    %3399 = vmatprep.subr.bf16.mxu0 0
    %3400 = vmatpush1.bf16.msra.mxu0 0
    %3401 = vmatprep.subr.bf16.mxu0 0
    %3402 = vmatpush1.bf16.msra.mxu0 0
    %3403 = vmatprep.subr.bf16.mxu0 0
    %3404 = vmatpush1.bf16.msra.mxu0 0
    %3405 = vmatprep.subr.bf16.mxu0 0
    %3406 = vmatpush1.bf16.msra.mxu0 0
    %3407 = vmatprep.subr.bf16.mxu0 0
    %3408 = vmatpush1.bf16.msra.mxu0 0
    %3409 = vmatprep.subr.bf16.mxu0 %v3265
    %3410 = vmatpush1.bf16.msra.mxu0 %v3264
    %3411 = vmatprep.subr.bf16.mxu0 %v3249
    %3412 = vmatpush1.bf16.msra.mxu0 %v3248
    %3413 = vmatprep.subr.bf16.mxu0 0
    %3414 = vmatpush2.bf16.msra.mxu0 0
    %3415 = vmatprep.subr.bf16.mxu0 0
    %3416 = vmatpush2.bf16.msra.mxu0 0
    %3417 = vmatprep.subr.bf16.mxu0 0
    %3418 = vmatpush2.bf16.msra.mxu0 0
    %3419 = vmatprep.subr.bf16.mxu0 0
    %3420 = vmatpush2.bf16.msra.mxu0 0
    %3421 = vmatprep.subr.bf16.mxu0 0
    %3422 = vmatpush2.bf16.msra.mxu0 0
    %3423 = vmatprep.subr.bf16.mxu0 0
    %3424 = vmatpush2.bf16.msra.mxu0 0
    %3425 = vmatprep.subr.bf16.mxu0 0
    %3426 = vmatpush2.bf16.msra.mxu0 0
    %3427 = vmatprep.subr.bf16.mxu0 0
    %3428 = vmatpush2.bf16.msra.mxu0 0
    %3429 = vmatprep.mubr.bf16.mxu0 0
    %3430 = vmatmul.mubr.bf16.gmra.mxu0 %v3309
    %v3431 = vpop.f32.mrf.mxu0
    %v3432 = vadd.f32 %v3087, %v3431
    %v3433 = vpop.f32.mrf.mxu0
    %v3434 = vadd.f32 %v3091, %v3433
    %v3435 = vpop.f32.mrf.mxu0
    %v3436 = vadd.f32 %v3087, %v3435
    %v3437 = vpop.f32.mrf.mxu0
    %v3438 = vadd.f32 %v3091, %v3437
    %3439 = vdwg.mxu0
    %3440 = vmatprep.subr.bf16.mxu0 0
    %3441 = vmatpush1.bf16.msra.mxu0 0
    %3442 = vmatprep.subr.bf16.mxu0 0
    %3443 = vmatpush1.bf16.msra.mxu0 0
    %3444 = vmatprep.subr.bf16.mxu0 0
    %3445 = vmatpush1.bf16.msra.mxu0 0
    %3446 = vmatprep.subr.bf16.mxu0 0
    %3447 = vmatpush1.bf16.msra.mxu0 0
    %3448 = vmatprep.subr.bf16.mxu0 0
    %3449 = vmatpush1.bf16.msra.mxu0 0
    %3450 = vmatprep.subr.bf16.mxu0 0
    %3451 = vmatpush1.bf16.msra.mxu0 0
    %3452 = vmatprep.subr.bf16.mxu0 %v3267
    %3453 = vmatpush1.bf16.msra.mxu0 %v3266
    %3454 = vmatprep.subr.bf16.mxu0 %v3251
    %3455 = vmatpush1.bf16.msra.mxu0 %v3250
    %3456 = vmatprep.subr.bf16.mxu0 0
    %3457 = vmatpush2.bf16.msra.mxu0 0
    %3458 = vmatprep.subr.bf16.mxu0 0
    %3459 = vmatpush2.bf16.msra.mxu0 0
    %3460 = vmatprep.subr.bf16.mxu0 0
    %3461 = vmatpush2.bf16.msra.mxu0 0
    %3462 = vmatprep.subr.bf16.mxu0 0
    %3463 = vmatpush2.bf16.msra.mxu0 0
    %3464 = vmatprep.subr.bf16.mxu0 0
    %3465 = vmatpush2.bf16.msra.mxu0 0
    %3466 = vmatprep.subr.bf16.mxu0 0
    %3467 = vmatpush2.bf16.msra.mxu0 0
    %3468 = vmatprep.subr.bf16.mxu0 0
    %3469 = vmatpush2.bf16.msra.mxu0 0
    %3470 = vmatprep.subr.bf16.mxu0 0
    %3471 = vmatpush2.bf16.msra.mxu0 0
    %3472 = vmatprep.mubr.bf16.mxu0 0
    %3473 = vmatmul.mubr.bf16.gmra.mxu0 %v3309
    %v3474 = vpop.f32.mrf.mxu0
    %v3475 = vadd.f32 %v3095, %v3474
    %v3476 = vpop.f32.mrf.mxu0
    %v3477 = vadd.f32 %v3099, %v3476
    %v3478 = vpop.f32.mrf.mxu0
    %v3479 = vadd.f32 %v3095, %v3478
    %v3480 = vpop.f32.mrf.mxu0
    %v3481 = vadd.f32 %v3099, %v3480
    %3482 = vdwg.mxu0
    %3483 = vmatprep.subr.bf16.mxu0 0
    %3484 = vmatpush1.bf16.msra.mxu0 0
    %3485 = vmatprep.subr.bf16.mxu0 0
    %3486 = vmatpush1.bf16.msra.mxu0 0
    %3487 = vmatprep.subr.bf16.mxu0 0
    %3488 = vmatpush1.bf16.msra.mxu0 0
    %3489 = vmatprep.subr.bf16.mxu0 0
    %3490 = vmatpush1.bf16.msra.mxu0 0
    %3491 = vmatprep.subr.bf16.mxu0 0
    %3492 = vmatpush1.bf16.msra.mxu0 0
    %3493 = vmatprep.subr.bf16.mxu0 0
    %3494 = vmatpush1.bf16.msra.mxu0 0
    %3495 = vmatprep.subr.bf16.mxu0 %v3269
    %3496 = vmatpush1.bf16.msra.mxu0 %v3268
    %3497 = vmatprep.subr.bf16.mxu0 %v3253
    %3498 = vmatpush1.bf16.msra.mxu0 %v3252
    %3499 = vmatprep.subr.bf16.mxu0 0
    %3500 = vmatpush2.bf16.msra.mxu0 0
    %3501 = vmatprep.subr.bf16.mxu0 0
    %3502 = vmatpush2.bf16.msra.mxu0 0
    %3503 = vmatprep.subr.bf16.mxu0 0
    %3504 = vmatpush2.bf16.msra.mxu0 0
    %3505 = vmatprep.subr.bf16.mxu0 0
    %3506 = vmatpush2.bf16.msra.mxu0 0
    %3507 = vmatprep.subr.bf16.mxu0 0
    %3508 = vmatpush2.bf16.msra.mxu0 0
    %3509 = vmatprep.subr.bf16.mxu0 0
    %3510 = vmatpush2.bf16.msra.mxu0 0
    %3511 = vmatprep.subr.bf16.mxu0 0
    %3512 = vmatpush2.bf16.msra.mxu0 0
    %3513 = vmatprep.subr.bf16.mxu0 0
    %3514 = vmatpush2.bf16.msra.mxu0 0
    %3515 = vmatprep.mubr.bf16.mxu0 0
    %3516 = vmatmul.mubr.bf16.gmra.mxu0 %v3309
    %v3517 = vpop.f32.mrf.mxu0
    %v3518 = vadd.f32 %v3103, %v3517
    %v3519 = vpop.f32.mrf.mxu0
    %v3520 = vadd.f32 %v3107, %v3519
    %v3521 = vpop.f32.mrf.mxu0
    %v3522 = vadd.f32 %v3103, %v3521
    %v3523 = vpop.f32.mrf.mxu0
    %v3524 = vadd.f32 %v3107, %v3523
    %3525 = vdwg.mxu0
    %3526 = vmatprep.subr.bf16.mxu0 0
    %3527 = vmatpush1.bf16.msra.mxu0 0
    %3528 = vmatprep.subr.bf16.mxu0 0
    %3529 = vmatpush1.bf16.msra.mxu0 0
    %3530 = vmatprep.subr.bf16.mxu0 0
    %3531 = vmatpush1.bf16.msra.mxu0 0
    %3532 = vmatprep.subr.bf16.mxu0 0
    %3533 = vmatpush1.bf16.msra.mxu0 0
    %3534 = vmatprep.subr.bf16.mxu0 0
    %3535 = vmatpush1.bf16.msra.mxu0 0
    %3536 = vmatprep.subr.bf16.mxu0 0
    %3537 = vmatpush1.bf16.msra.mxu0 0
    %3538 = vmatprep.subr.bf16.mxu0 %v3271
    %3539 = vmatpush1.bf16.msra.mxu0 %v3270
    %3540 = vmatprep.subr.bf16.mxu0 %v3255
    %3541 = vmatpush1.bf16.msra.mxu0 %v3254
    %3542 = vmatprep.subr.bf16.mxu0 0
    %3543 = vmatpush2.bf16.msra.mxu0 0
    %3544 = vmatprep.subr.bf16.mxu0 0
    %3545 = vmatpush2.bf16.msra.mxu0 0
    %3546 = vmatprep.subr.bf16.mxu0 0
    %3547 = vmatpush2.bf16.msra.mxu0 0
    %3548 = vmatprep.subr.bf16.mxu0 0
    %3549 = vmatpush2.bf16.msra.mxu0 0
    %3550 = vmatprep.subr.bf16.mxu0 0
    %3551 = vmatpush2.bf16.msra.mxu0 0
    %3552 = vmatprep.subr.bf16.mxu0 0
    %3553 = vmatpush2.bf16.msra.mxu0 0
    %3554 = vmatprep.subr.bf16.mxu0 0
    %3555 = vmatpush2.bf16.msra.mxu0 0
    %3556 = vmatprep.subr.bf16.mxu0 0
    %3557 = vmatpush2.bf16.msra.mxu0 0
    %3558 = vmatprep.mubr.bf16.mxu0 0
    %3559 = vmatmul.mubr.bf16.gmra.mxu0 %v3309
    %v3560 = vpop.f32.mrf.mxu0
    %v3561 = vadd.f32 %v3111, %v3560
    %v3562 = vpop.f32.mrf.mxu0
    %v3563 = vadd.f32 %v3115, %v3562
    %v3564 = vpop.f32.mrf.mxu0
    %v3565 = vadd.f32 %v3111, %v3564
    %v3566 = vpop.f32.mrf.mxu0
    %v3567 = vadd.f32 %v3115, %v3566
    %3568 = vdwg.mxu0
    %3569 = vmatprep.subr.bf16.mxu0 0
    %3570 = vmatpush1.bf16.msra.mxu0 0
    %3571 = vmatprep.subr.bf16.mxu0 0
    %3572 = vmatpush1.bf16.msra.mxu0 0
    %3573 = vmatprep.subr.bf16.mxu0 0
    %3574 = vmatpush1.bf16.msra.mxu0 0
    %3575 = vmatprep.subr.bf16.mxu0 0
    %3576 = vmatpush1.bf16.msra.mxu0 0
    %3577 = vmatprep.subr.bf16.mxu0 0
    %3578 = vmatpush1.bf16.msra.mxu0 0
    %3579 = vmatprep.subr.bf16.mxu0 0
    %3580 = vmatpush1.bf16.msra.mxu0 0
    %3581 = vmatprep.subr.bf16.mxu0 %v3273
    %3582 = vmatpush1.bf16.msra.mxu0 %v3272
    %3583 = vmatprep.subr.bf16.mxu0 %v3257
    %3584 = vmatpush1.bf16.msra.mxu0 %v3256
    %3585 = vmatprep.subr.bf16.mxu0 0
    %3586 = vmatpush2.bf16.msra.mxu0 0
    %3587 = vmatprep.subr.bf16.mxu0 0
    %3588 = vmatpush2.bf16.msra.mxu0 0
    %3589 = vmatprep.subr.bf16.mxu0 0
    %3590 = vmatpush2.bf16.msra.mxu0 0
    %3591 = vmatprep.subr.bf16.mxu0 0
    %3592 = vmatpush2.bf16.msra.mxu0 0
    %3593 = vmatprep.subr.bf16.mxu0 0
    %3594 = vmatpush2.bf16.msra.mxu0 0
    %3595 = vmatprep.subr.bf16.mxu0 0
    %3596 = vmatpush2.bf16.msra.mxu0 0
    %3597 = vmatprep.subr.bf16.mxu0 0
    %3598 = vmatpush2.bf16.msra.mxu0 0
    %3599 = vmatprep.subr.bf16.mxu0 0
    %3600 = vmatpush2.bf16.msra.mxu0 0
    %3601 = vmatprep.mubr.bf16.mxu0 0
    %3602 = vmatmul.mubr.bf16.gmra.mxu0 %v3309
    %v3603 = vpop.f32.mrf.mxu0
    %v3604 = vadd.f32 %v3119, %v3603
    %v3605 = vpop.f32.mrf.mxu0
    %v3606 = vadd.f32 %v3123, %v3605
    %v3607 = vpop.f32.mrf.mxu0
    %v3608 = vadd.f32 %v3119, %v3607
    %v3609 = vpop.f32.mrf.mxu0
    %v3610 = vadd.f32 %v3123, %v3609
    %3611 = vdwg.mxu0
    %3612 = vmatprep.subr.bf16.mxu0 0
    %3613 = vmatpush1.bf16.msra.mxu0 0
    %3614 = vmatprep.subr.bf16.mxu0 0
    %3615 = vmatpush1.bf16.msra.mxu0 0
    %3616 = vmatprep.subr.bf16.mxu0 0
    %3617 = vmatpush1.bf16.msra.mxu0 0
    %3618 = vmatprep.subr.bf16.mxu0 0
    %3619 = vmatpush1.bf16.msra.mxu0 0
    %3620 = vmatprep.subr.bf16.mxu0 0
    %3621 = vmatpush1.bf16.msra.mxu0 0
    %3622 = vmatprep.subr.bf16.mxu0 0
    %3623 = vmatpush1.bf16.msra.mxu0 0
    %3624 = vmatprep.subr.bf16.mxu0 %v3275
    %3625 = vmatpush1.bf16.msra.mxu0 %v3274
    %3626 = vmatprep.subr.bf16.mxu0 %v3259
    %3627 = vmatpush1.bf16.msra.mxu0 %v3258
    %3628 = vmatprep.subr.bf16.mxu0 0
    %3629 = vmatpush2.bf16.msra.mxu0 0
    %3630 = vmatprep.subr.bf16.mxu0 0
    %3631 = vmatpush2.bf16.msra.mxu0 0
    %3632 = vmatprep.subr.bf16.mxu0 0
    %3633 = vmatpush2.bf16.msra.mxu0 0
    %3634 = vmatprep.subr.bf16.mxu0 0
    %3635 = vmatpush2.bf16.msra.mxu0 0
    %3636 = vmatprep.subr.bf16.mxu0 0
    %3637 = vmatpush2.bf16.msra.mxu0 0
    %3638 = vmatprep.subr.bf16.mxu0 0
    %3639 = vmatpush2.bf16.msra.mxu0 0
    %3640 = vmatprep.subr.bf16.mxu0 0
    %3641 = vmatpush2.bf16.msra.mxu0 0
    %3642 = vmatprep.subr.bf16.mxu0 0
    %3643 = vmatpush2.bf16.msra.mxu0 0
    %3644 = vmatprep.mubr.bf16.mxu0 0
    %3645 = vmatmul.mubr.bf16.gmra.mxu0 %v3309
    %v3646 = vpop.f32.mrf.mxu0
    %v3647 = vadd.f32 %v3127, %v3646
    %v3648 = vpop.f32.mrf.mxu0
    %v3649 = vadd.f32 %v3131, %v3648
    %v3650 = vpop.f32.mrf.mxu0
    %v3651 = vadd.f32 %v3127, %v3650
    %v3652 = vpop.f32.mrf.mxu0
    %v3653 = vadd.f32 %v3131, %v3652
    %3654 = vdwg.mxu0
    %v3655 = vmax.f32 %v3346, 0.0
    %v3656 = vmax.f32 %v3348, 0.0
    %v3657 = vmax.f32 %v3389, 0.0
    %v3658 = vmax.f32 %v3391, 0.0
    %v3659 = vmax.f32 %v3432, 0.0
    %v3660 = vmax.f32 %v3434, 0.0
    %v3661 = vmax.f32 %v3475, 0.0
    %v3662 = vmax.f32 %v3477, 0.0
    %v3663 = vmax.f32 %v3518, 0.0
    %v3664 = vmax.f32 %v3520, 0.0
    %v3665 = vmax.f32 %v3561, 0.0
    %v3666 = vmax.f32 %v3563, 0.0
    %v3667 = vmax.f32 %v3604, 0.0
    %v3668 = vmax.f32 %v3606, 0.0
    %v3669 = vmax.f32 %v3647, 0.0
    %v3670 = vmax.f32 %v3649, 0.0
    %v3671 = vmax.f32 %v3350, 0.0
    %v3672 = vmax.f32 %v3352, 0.0
    %v3673 = vmax.f32 %v3393, 0.0
    %v3674 = vmax.f32 %v3395, 0.0
    %v3675 = vmax.f32 %v3436, 0.0
    %v3676 = vmax.f32 %v3438, 0.0
    %v3677 = vmax.f32 %v3479, 0.0
    %v3678 = vmax.f32 %v3481, 0.0
    %v3679 = vmax.f32 %v3522, 0.0
    %v3680 = vmax.f32 %v3524, 0.0
    %v3681 = vmax.f32 %v3565, 0.0
    %v3682 = vmax.f32 %v3567, 0.0
    %v3683 = vmax.f32 %v3608, 0.0
    %v3684 = vmax.f32 %v3610, 0.0
    %v3685 = vmax.f32 %v3651, 0.0
    %v3686 = vmax.f32 %v3653, 0.0
    %v3687 = vpack.c.bf16 %v3671, %v3655
    %v3688 = vpack.c.bf16 %v3672, %v3656
    %v3689 = vpack.c.bf16 %v3673, %v3657
    %v3690 = vpack.c.bf16 %v3674, %v3658
    %v3691 = vpack.c.bf16 %v3675, %v3659
    %v3692 = vpack.c.bf16 %v3676, %v3660
    %v3693 = vpack.c.bf16 %v3677, %v3661
    %v3694 = vpack.c.bf16 %v3678, %v3662
    %v3695 = vpack.c.bf16 %v3679, %v3663
    %v3696 = vpack.c.bf16 %v3680, %v3664
    %v3697 = vpack.c.bf16 %v3681, %v3665
    %v3698 = vpack.c.bf16 %v3682, %v3666
    %v3699 = vpack.c.bf16 %v3683, %v3667
    %v3700 = vpack.c.bf16 %v3684, %v3668
    %v3701 = vpack.c.bf16 %v3685, %v3669
    %v3702 = vpack.c.bf16 %v3686, %v3670
    %s3703 = scalar_lea.vmem [#allocation13], 1024
    %v3704 = vld [vmem:[%s3703] sm:$0xf]
    %v3705 = vld [vmem:[%s3703 + $0x4] sm:$0xf]
    %v3706 = vld [vmem:[%s3703 + $0x8] sm:$0xf]
    %v3707 = vld [vmem:[%s3703 + $0xc] sm:$0xf]
    %v3708 = vld [vmem:[%s3703 + $0x10] sm:$0xf]
    %v3709 = vld [vmem:[%s3703 + $0x14] sm:$0xf]
    %v3710 = vld [vmem:[%s3703 + $0x18] sm:$0xf]
    %v3711 = vld [vmem:[%s3703 + $0x1c] sm:$0xf]
    %v3712 = vld [vmem:[%s3703 + $0x20] sm:$0xf]
    %v3713 = vld [vmem:[%s3703 + $0x24] sm:$0xf]
    %v3714 = vld [vmem:[%s3703 + $0x28] sm:$0xf]
    %v3715 = vld [vmem:[%s3703 + $0x2c] sm:$0xf]
    %v3716 = vld [vmem:[%s3703 + $0x30] sm:$0xf]
    %v3717 = vld [vmem:[%s3703 + $0x34] sm:$0xf]
    %v3718 = vld [vmem:[%s3703 + $0x38] sm:$0xf]
    %v3719 = vld [vmem:[%s3703 + $0x3c] sm:$0xf]
    %v3720 = vld [vmem:[%s3703 + $0x40] sm:$0xf]
    %v3721 = vld [vmem:[%s3703 + $0x44] sm:$0xf]
    %v3722 = vld [vmem:[%s3703 + $0x48] sm:$0xf]
    %v3723 = vld [vmem:[%s3703 + $0x4c] sm:$0xf]
    %v3724 = vld [vmem:[%s3703 + $0x50] sm:$0xf]
    %v3725 = vld [vmem:[%s3703 + $0x54] sm:$0xf]
    %v3726 = vld [vmem:[%s3703 + $0x58] sm:$0xf]
    %v3727 = vld [vmem:[%s3703 + $0x5c] sm:$0xf]
    %v3728 = vld [vmem:[%s3703 + $0x60] sm:$0xf]
    %v3729 = vld [vmem:[%s3703 + $0x64] sm:$0xf]
    %v3730 = vld [vmem:[%s3703 + $0x68] sm:$0xf]
    %v3731 = vld [vmem:[%s3703 + $0x6c] sm:$0xf]
    %v3732 = vld [vmem:[%s3703 + $0x70] sm:$0xf]
    %v3733 = vld [vmem:[%s3703 + $0x74] sm:$0xf]
    %v3734 = vld [vmem:[%s3703 + $0x78] sm:$0xf]
    %v3735 = vld [vmem:[%s3703 + $0x7c] sm:$0xf]
    %v3736 = vld [vmem:[%s3703 + $0x80] sm:$0xf]
    %v3737 = vld [vmem:[%s3703 + $0x84] sm:$0xf]
    %v3738 = vld [vmem:[%s3703 + $0x88] sm:$0xf]
    %v3739 = vld [vmem:[%s3703 + $0x8c] sm:$0xf]
    %v3740 = vld [vmem:[%s3703 + $0x90] sm:$0xf]
    %v3741 = vld [vmem:[%s3703 + $0x94] sm:$0xf]
    %v3742 = vld [vmem:[%s3703 + $0x98] sm:$0xf]
    %v3743 = vld [vmem:[%s3703 + $0x9c] sm:$0xf]
    %v3744 = vld [vmem:[%s3703 + $0xa0] sm:$0xf]
    %v3745 = vld [vmem:[%s3703 + $0xa4] sm:$0xf]
    %v3746 = vld [vmem:[%s3703 + $0xa8] sm:$0xf]
    %v3747 = vld [vmem:[%s3703 + $0xac] sm:$0xf]
    %v3748 = vld [vmem:[%s3703 + $0xb0] sm:$0xf]
    %v3749 = vld [vmem:[%s3703 + $0xb4] sm:$0xf]
    %v3750 = vld [vmem:[%s3703 + $0xb8] sm:$0xf]
    %v3751 = vld [vmem:[%s3703 + $0xbc] sm:$0xf]
    %v3752 = vld [vmem:[%s3703 + $0xc0] sm:$0xf]
    %v3753 = vld [vmem:[%s3703 + $0xc4] sm:$0xf]
    %v3754 = vld [vmem:[%s3703 + $0xc8] sm:$0xf]
    %v3755 = vld [vmem:[%s3703 + $0xcc] sm:$0xf]
    %v3756 = vld [vmem:[%s3703 + $0xd0] sm:$0xf]
    %v3757 = vld [vmem:[%s3703 + $0xd4] sm:$0xf]
    %v3758 = vld [vmem:[%s3703 + $0xd8] sm:$0xf]
    %v3759 = vld [vmem:[%s3703 + $0xdc] sm:$0xf]
    %v3760 = vld [vmem:[%s3703 + $0xe0] sm:$0xf]
    %v3761 = vld [vmem:[%s3703 + $0xe4] sm:$0xf]
    %v3762 = vld [vmem:[%s3703 + $0xe8] sm:$0xf]
    %v3763 = vld [vmem:[%s3703 + $0xec] sm:$0xf]
    %v3764 = vld [vmem:[%s3703 + $0xf0] sm:$0xf]
    %v3765 = vld [vmem:[%s3703 + $0xf4] sm:$0xf]
    %v3766 = vld [vmem:[%s3703 + $0xf8] sm:$0xf]
    %v3767 = vld [vmem:[%s3703 + $0xfc] sm:$0xf]
    %v3768 = vld [vmem:[%s3703 + $0x100] sm:$0xf]
    %v3769 = vld [vmem:[%s3703 + $0x104] sm:$0xf]
    %v3770 = vld [vmem:[%s3703 + $0x108] sm:$0xf]
    %v3771 = vld [vmem:[%s3703 + $0x10c] sm:$0xf]
    %v3772 = vld [vmem:[%s3703 + $0x110] sm:$0xf]
    %v3773 = vld [vmem:[%s3703 + $0x114] sm:$0xf]
    %v3774 = vld [vmem:[%s3703 + $0x118] sm:$0xf]
    %v3775 = vld [vmem:[%s3703 + $0x11c] sm:$0xf]
    %v3776 = vld [vmem:[%s3703 + $0x120] sm:$0xf]
    %v3777 = vld [vmem:[%s3703 + $0x124] sm:$0xf]
    %v3778 = vld [vmem:[%s3703 + $0x128] sm:$0xf]
    %v3779 = vld [vmem:[%s3703 + $0x12c] sm:$0xf]
    %v3780 = vld [vmem:[%s3703 + $0x130] sm:$0xf]
    %v3781 = vld [vmem:[%s3703 + $0x134] sm:$0xf]
    %v3782 = vld [vmem:[%s3703 + $0x138] sm:$0xf]
    %v3783 = vld [vmem:[%s3703 + $0x13c] sm:$0xf]
    %v3784 = vld [vmem:[%s3703 + $0x140] sm:$0xf]
    %v3785 = vld [vmem:[%s3703 + $0x144] sm:$0xf]
    %v3786 = vld [vmem:[%s3703 + $0x148] sm:$0xf]
    %v3787 = vld [vmem:[%s3703 + $0x14c] sm:$0xf]
    %v3788 = vld [vmem:[%s3703 + $0x150] sm:$0xf]
    %v3789 = vld [vmem:[%s3703 + $0x154] sm:$0xf]
    %v3790 = vld [vmem:[%s3703 + $0x158] sm:$0xf]
    %v3791 = vld [vmem:[%s3703 + $0x15c] sm:$0xf]
    %v3792 = vld [vmem:[%s3703 + $0x160] sm:$0xf]
    %v3793 = vld [vmem:[%s3703 + $0x164] sm:$0xf]
    %v3794 = vld [vmem:[%s3703 + $0x168] sm:$0xf]
    %v3795 = vld [vmem:[%s3703 + $0x16c] sm:$0xf]
    %v3796 = vld [vmem:[%s3703 + $0x170] sm:$0xf]
    %v3797 = vld [vmem:[%s3703 + $0x174] sm:$0xf]
    %v3798 = vld [vmem:[%s3703 + $0x178] sm:$0xf]
    %v3799 = vld [vmem:[%s3703 + $0x17c] sm:$0xf]
    %v3800 = vld [vmem:[%s3703 + $0x180] sm:$0xf]
    %v3801 = vld [vmem:[%s3703 + $0x184] sm:$0xf]
    %v3802 = vld [vmem:[%s3703 + $0x188] sm:$0xf]
    %v3803 = vld [vmem:[%s3703 + $0x18c] sm:$0xf]
    %v3804 = vld [vmem:[%s3703 + $0x190] sm:$0xf]
    %v3805 = vld [vmem:[%s3703 + $0x194] sm:$0xf]
    %v3806 = vld [vmem:[%s3703 + $0x198] sm:$0xf]
    %v3807 = vld [vmem:[%s3703 + $0x19c] sm:$0xf]
    %v3808 = vld [vmem:[%s3703 + $0x1a0] sm:$0xf]
    %v3809 = vld [vmem:[%s3703 + $0x1a4] sm:$0xf]
    %v3810 = vld [vmem:[%s3703 + $0x1a8] sm:$0xf]
    %v3811 = vld [vmem:[%s3703 + $0x1ac] sm:$0xf]
    %v3812 = vld [vmem:[%s3703 + $0x1b0] sm:$0xf]
    %v3813 = vld [vmem:[%s3703 + $0x1b4] sm:$0xf]
    %v3814 = vld [vmem:[%s3703 + $0x1b8] sm:$0xf]
    %v3815 = vld [vmem:[%s3703 + $0x1bc] sm:$0xf]
    %v3816 = vld [vmem:[%s3703 + $0x1c0] sm:$0xf]
    %v3817 = vld [vmem:[%s3703 + $0x1c4] sm:$0xf]
    %v3818 = vld [vmem:[%s3703 + $0x1c8] sm:$0xf]
    %v3819 = vld [vmem:[%s3703 + $0x1cc] sm:$0xf]
    %v3820 = vld [vmem:[%s3703 + $0x1d0] sm:$0xf]
    %v3821 = vld [vmem:[%s3703 + $0x1d4] sm:$0xf]
    %v3822 = vld [vmem:[%s3703 + $0x1d8] sm:$0xf]
    %v3823 = vld [vmem:[%s3703 + $0x1dc] sm:$0xf]
    %v3824 = vld [vmem:[%s3703 + $0x1e0] sm:$0xf]
    %v3825 = vld [vmem:[%s3703 + $0x1e4] sm:$0xf]
    %v3826 = vld [vmem:[%s3703 + $0x1e8] sm:$0xf]
    %v3827 = vld [vmem:[%s3703 + $0x1ec] sm:$0xf]
    %v3828 = vld [vmem:[%s3703 + $0x1f0] sm:$0xf]
    %v3829 = vld [vmem:[%s3703 + $0x1f4] sm:$0xf]
    %v3830 = vld [vmem:[%s3703 + $0x1f8] sm:$0xf]
    %v3831 = vld [vmem:[%s3703 + $0x1fc] sm:$0xf]
    %v3832 = vld [vmem:[%s3703 + $0x200] sm:$0xf]
    %v3833 = vld [vmem:[%s3703 + $0x204] sm:$0xf]
    %v3834 = vld [vmem:[%s3703 + $0x208] sm:$0xf]
    %v3835 = vld [vmem:[%s3703 + $0x20c] sm:$0xf]
    %v3836 = vld [vmem:[%s3703 + $0x210] sm:$0xf]
    %v3837 = vld [vmem:[%s3703 + $0x214] sm:$0xf]
    %v3838 = vld [vmem:[%s3703 + $0x218] sm:$0xf]
    %v3839 = vld [vmem:[%s3703 + $0x21c] sm:$0xf]
    %v3840 = vld [vmem:[%s3703 + $0x220] sm:$0xf]
    %v3841 = vld [vmem:[%s3703 + $0x224] sm:$0xf]
    %v3842 = vld [vmem:[%s3703 + $0x228] sm:$0xf]
    %v3843 = vld [vmem:[%s3703 + $0x22c] sm:$0xf]
    %v3844 = vld [vmem:[%s3703 + $0x230] sm:$0xf]
    %v3845 = vld [vmem:[%s3703 + $0x234] sm:$0xf]
    %v3846 = vld [vmem:[%s3703 + $0x238] sm:$0xf]
    %v3847 = vld [vmem:[%s3703 + $0x23c] sm:$0xf]
    %v3848 = vld [vmem:[%s3703 + $0x240] sm:$0xf]
    %v3849 = vld [vmem:[%s3703 + $0x244] sm:$0xf]
    %v3850 = vld [vmem:[%s3703 + $0x248] sm:$0xf]
    %v3851 = vld [vmem:[%s3703 + $0x24c] sm:$0xf]
    %v3852 = vld [vmem:[%s3703 + $0x250] sm:$0xf]
    %v3853 = vld [vmem:[%s3703 + $0x254] sm:$0xf]
    %v3854 = vld [vmem:[%s3703 + $0x258] sm:$0xf]
    %v3855 = vld [vmem:[%s3703 + $0x25c] sm:$0xf]
    %v3856 = vld [vmem:[%s3703 + $0x260] sm:$0xf]
    %v3857 = vld [vmem:[%s3703 + $0x264] sm:$0xf]
    %v3858 = vld [vmem:[%s3703 + $0x268] sm:$0xf]
    %v3859 = vld [vmem:[%s3703 + $0x26c] sm:$0xf]
    %v3860 = vld [vmem:[%s3703 + $0x270] sm:$0xf]
    %v3861 = vld [vmem:[%s3703 + $0x274] sm:$0xf]
    %v3862 = vld [vmem:[%s3703 + $0x278] sm:$0xf]
    %v3863 = vld [vmem:[%s3703 + $0x27c] sm:$0xf]
    %v3864 = vld [vmem:[%s3703 + $0x280] sm:$0xf]
    %v3865 = vld [vmem:[%s3703 + $0x284] sm:$0xf]
    %v3866 = vld [vmem:[%s3703 + $0x288] sm:$0xf]
    %v3867 = vld [vmem:[%s3703 + $0x28c] sm:$0xf]
    %v3868 = vld [vmem:[%s3703 + $0x290] sm:$0xf]
    %v3869 = vld [vmem:[%s3703 + $0x294] sm:$0xf]
    %v3870 = vld [vmem:[%s3703 + $0x298] sm:$0xf]
    %v3871 = vld [vmem:[%s3703 + $0x29c] sm:$0xf]
    %v3872 = vld [vmem:[%s3703 + $0x2a0] sm:$0xf]
    %v3873 = vld [vmem:[%s3703 + $0x2a4] sm:$0xf]
    %v3874 = vld [vmem:[%s3703 + $0x2a8] sm:$0xf]
    %v3875 = vld [vmem:[%s3703 + $0x2ac] sm:$0xf]
    %v3876 = vld [vmem:[%s3703 + $0x2b0] sm:$0xf]
    %v3877 = vld [vmem:[%s3703 + $0x2b4] sm:$0xf]
    %v3878 = vld [vmem:[%s3703 + $0x2b8] sm:$0xf]
    %v3879 = vld [vmem:[%s3703 + $0x2bc] sm:$0xf]
    %v3880 = vld [vmem:[%s3703 + $0x2c0] sm:$0xf]
    %v3881 = vld [vmem:[%s3703 + $0x2c4] sm:$0xf]
    %v3882 = vld [vmem:[%s3703 + $0x2c8] sm:$0xf]
    %v3883 = vld [vmem:[%s3703 + $0x2cc] sm:$0xf]
    %v3884 = vld [vmem:[%s3703 + $0x2d0] sm:$0xf]
    %v3885 = vld [vmem:[%s3703 + $0x2d4] sm:$0xf]
    %v3886 = vld [vmem:[%s3703 + $0x2d8] sm:$0xf]
    %v3887 = vld [vmem:[%s3703 + $0x2dc] sm:$0xf]
    %v3888 = vld [vmem:[%s3703 + $0x2e0] sm:$0xf]
    %v3889 = vld [vmem:[%s3703 + $0x2e4] sm:$0xf]
    %v3890 = vld [vmem:[%s3703 + $0x2e8] sm:$0xf]
    %v3891 = vld [vmem:[%s3703 + $0x2ec] sm:$0xf]
    %v3892 = vld [vmem:[%s3703 + $0x2f0] sm:$0xf]
    %v3893 = vld [vmem:[%s3703 + $0x2f4] sm:$0xf]
    %v3894 = vld [vmem:[%s3703 + $0x2f8] sm:$0xf]
    %v3895 = vld [vmem:[%s3703 + $0x2fc] sm:$0xf]
    %v3896 = vld [vmem:[%s3703 + $0x300] sm:$0xf]
    %v3897 = vld [vmem:[%s3703 + $0x304] sm:$0xf]
    %v3898 = vld [vmem:[%s3703 + $0x308] sm:$0xf]
    %v3899 = vld [vmem:[%s3703 + $0x30c] sm:$0xf]
    %v3900 = vld [vmem:[%s3703 + $0x310] sm:$0xf]
    %v3901 = vld [vmem:[%s3703 + $0x314] sm:$0xf]
    %v3902 = vld [vmem:[%s3703 + $0x318] sm:$0xf]
    %v3903 = vld [vmem:[%s3703 + $0x31c] sm:$0xf]
    %v3904 = vld [vmem:[%s3703 + $0x320] sm:$0xf]
    %v3905 = vld [vmem:[%s3703 + $0x324] sm:$0xf]
    %v3906 = vld [vmem:[%s3703 + $0x328] sm:$0xf]
    %v3907 = vld [vmem:[%s3703 + $0x32c] sm:$0xf]
    %v3908 = vld [vmem:[%s3703 + $0x330] sm:$0xf]
    %v3909 = vld [vmem:[%s3703 + $0x334] sm:$0xf]
    %v3910 = vld [vmem:[%s3703 + $0x338] sm:$0xf]
    %v3911 = vld [vmem:[%s3703 + $0x33c] sm:$0xf]
    %v3912 = vld [vmem:[%s3703 + $0x340] sm:$0xf]
    %v3913 = vld [vmem:[%s3703 + $0x344] sm:$0xf]
    %v3914 = vld [vmem:[%s3703 + $0x348] sm:$0xf]
    %v3915 = vld [vmem:[%s3703 + $0x34c] sm:$0xf]
    %v3916 = vld [vmem:[%s3703 + $0x350] sm:$0xf]
    %v3917 = vld [vmem:[%s3703 + $0x354] sm:$0xf]
    %v3918 = vld [vmem:[%s3703 + $0x358] sm:$0xf]
    %v3919 = vld [vmem:[%s3703 + $0x35c] sm:$0xf]
    %v3920 = vld [vmem:[%s3703 + $0x360] sm:$0xf]
    %v3921 = vld [vmem:[%s3703 + $0x364] sm:$0xf]
    %v3922 = vld [vmem:[%s3703 + $0x368] sm:$0xf]
    %v3923 = vld [vmem:[%s3703 + $0x36c] sm:$0xf]
    %v3924 = vld [vmem:[%s3703 + $0x370] sm:$0xf]
    %v3925 = vld [vmem:[%s3703 + $0x374] sm:$0xf]
    %v3926 = vld [vmem:[%s3703 + $0x378] sm:$0xf]
    %v3927 = vld [vmem:[%s3703 + $0x37c] sm:$0xf]
    %v3928 = vld [vmem:[%s3703 + $0x380] sm:$0xf]
    %v3929 = vld [vmem:[%s3703 + $0x384] sm:$0xf]
    %v3930 = vld [vmem:[%s3703 + $0x388] sm:$0xf]
    %v3931 = vld [vmem:[%s3703 + $0x38c] sm:$0xf]
    %v3932 = vld [vmem:[%s3703 + $0x390] sm:$0xf]
    %v3933 = vld [vmem:[%s3703 + $0x394] sm:$0xf]
    %v3934 = vld [vmem:[%s3703 + $0x398] sm:$0xf]
    %v3935 = vld [vmem:[%s3703 + $0x39c] sm:$0xf]
    %v3936 = vld [vmem:[%s3703 + $0x3a0] sm:$0xf]
    %v3937 = vld [vmem:[%s3703 + $0x3a4] sm:$0xf]
    %v3938 = vld [vmem:[%s3703 + $0x3a8] sm:$0xf]
    %v3939 = vld [vmem:[%s3703 + $0x3ac] sm:$0xf]
    %v3940 = vld [vmem:[%s3703 + $0x3b0] sm:$0xf]
    %v3941 = vld [vmem:[%s3703 + $0x3b4] sm:$0xf]
    %v3942 = vld [vmem:[%s3703 + $0x3b8] sm:$0xf]
    %v3943 = vld [vmem:[%s3703 + $0x3bc] sm:$0xf]
    %v3944 = vld [vmem:[%s3703 + $0x3c0] sm:$0xf]
    %v3945 = vld [vmem:[%s3703 + $0x3c4] sm:$0xf]
    %v3946 = vld [vmem:[%s3703 + $0x3c8] sm:$0xf]
    %v3947 = vld [vmem:[%s3703 + $0x3cc] sm:$0xf]
    %v3948 = vld [vmem:[%s3703 + $0x3d0] sm:$0xf]
    %v3949 = vld [vmem:[%s3703 + $0x3d4] sm:$0xf]
    %v3950 = vld [vmem:[%s3703 + $0x3d8] sm:$0xf]
    %v3951 = vld [vmem:[%s3703 + $0x3dc] sm:$0xf]
    %v3952 = vld [vmem:[%s3703 + $0x3e0] sm:$0xf]
    %v3953 = vld [vmem:[%s3703 + $0x3e4] sm:$0xf]
    %v3954 = vld [vmem:[%s3703 + $0x3e8] sm:$0xf]
    %v3955 = vld [vmem:[%s3703 + $0x3ec] sm:$0xf]
    %v3956 = vld [vmem:[%s3703 + $0x3f0] sm:$0xf]
    %v3957 = vld [vmem:[%s3703 + $0x3f4] sm:$0xf]
    %v3958 = vld [vmem:[%s3703 + $0x3f8] sm:$0xf]
    %v3959 = vld [vmem:[%s3703 + $0x3fc] sm:$0xf]
    %s3960 = scalar_lea.vmem %s11, 1
    %v3961 = vld [vmem:[%s3960] sm:$0x1]
    %v3963 = vlaneseq
    %v3964 = vshrl.u32 %v3963, 7
    %v3965 = vsub.s32 0, %v3964
    %v3966 = vrot.slane %v3961, %v3965
    %v4224 = vunpack.c.l.b16 %v3704
    %v4225 = vunpack.c.l.b16 %v3705
    %v4226 = vunpack.c.l.b16 %v3706
    %v4227 = vunpack.c.l.b16 %v3707
    %v4228 = vunpack.c.l.b16 %v3708
    %v4229 = vunpack.c.l.b16 %v3709
    %v4230 = vunpack.c.l.b16 %v3710
    %v4231 = vunpack.c.l.b16 %v3711
    %v4232 = vunpack.c.l.b16 %v3712
    %v4233 = vunpack.c.l.b16 %v3713
    %v4234 = vunpack.c.l.b16 %v3714
    %v4235 = vunpack.c.l.b16 %v3715
    %v4236 = vunpack.c.l.b16 %v3716
    %v4237 = vunpack.c.l.b16 %v3717
    %v4238 = vunpack.c.l.b16 %v3718
    %v4239 = vunpack.c.l.b16 %v3719
    %v4240 = vunpack.c.l.b16 %v3720
    %v4241 = vunpack.c.l.b16 %v3721
    %v4242 = vunpack.c.l.b16 %v3722
    %v4243 = vunpack.c.l.b16 %v3723
    %v4244 = vunpack.c.l.b16 %v3724
    %v4245 = vunpack.c.l.b16 %v3725
    %v4246 = vunpack.c.l.b16 %v3726
    %v4247 = vunpack.c.l.b16 %v3727
    %v4248 = vunpack.c.l.b16 %v3728
    %v4249 = vunpack.c.l.b16 %v3729
    %v4250 = vunpack.c.l.b16 %v3730
    %v4251 = vunpack.c.l.b16 %v3731
    %v4252 = vunpack.c.l.b16 %v3732
    %v4253 = vunpack.c.l.b16 %v3733
    %v4254 = vunpack.c.l.b16 %v3734
    %v4255 = vunpack.c.l.b16 %v3735
    %v4256 = vunpack.c.l.b16 %v3736
    %v4257 = vunpack.c.l.b16 %v3737
    %v4258 = vunpack.c.l.b16 %v3738
    %v4259 = vunpack.c.l.b16 %v3739
    %v4260 = vunpack.c.l.b16 %v3740
    %v4261 = vunpack.c.l.b16 %v3741
    %v4262 = vunpack.c.l.b16 %v3742
    %v4263 = vunpack.c.l.b16 %v3743
    %v4264 = vunpack.c.l.b16 %v3744
    %v4265 = vunpack.c.l.b16 %v3745
    %v4266 = vunpack.c.l.b16 %v3746
    %v4267 = vunpack.c.l.b16 %v3747
    %v4268 = vunpack.c.l.b16 %v3748
    %v4269 = vunpack.c.l.b16 %v3749
    %v4270 = vunpack.c.l.b16 %v3750
    %v4271 = vunpack.c.l.b16 %v3751
    %v4272 = vunpack.c.l.b16 %v3752
    %v4273 = vunpack.c.l.b16 %v3753
    %v4274 = vunpack.c.l.b16 %v3754
    %v4275 = vunpack.c.l.b16 %v3755
    %v4276 = vunpack.c.l.b16 %v3756
    %v4277 = vunpack.c.l.b16 %v3757
    %v4278 = vunpack.c.l.b16 %v3758
    %v4279 = vunpack.c.l.b16 %v3759
    %v4280 = vunpack.c.l.b16 %v3760
    %v4281 = vunpack.c.l.b16 %v3761
    %v4282 = vunpack.c.l.b16 %v3762
    %v4283 = vunpack.c.l.b16 %v3763
    %v4284 = vunpack.c.l.b16 %v3764
    %v4285 = vunpack.c.l.b16 %v3765
    %v4286 = vunpack.c.l.b16 %v3766
    %v4287 = vunpack.c.l.b16 %v3767
    %v4288 = vunpack.c.l.b16 %v3768
    %v4289 = vunpack.c.l.b16 %v3769
    %v4290 = vunpack.c.l.b16 %v3770
    %v4291 = vunpack.c.l.b16 %v3771
    %v4292 = vunpack.c.l.b16 %v3772
    %v4293 = vunpack.c.l.b16 %v3773
    %v4294 = vunpack.c.l.b16 %v3774
    %v4295 = vunpack.c.l.b16 %v3775
    %v4296 = vunpack.c.l.b16 %v3776
    %v4297 = vunpack.c.l.b16 %v3777
    %v4298 = vunpack.c.l.b16 %v3778
    %v4299 = vunpack.c.l.b16 %v3779
    %v4300 = vunpack.c.l.b16 %v3780
    %v4301 = vunpack.c.l.b16 %v3781
    %v4302 = vunpack.c.l.b16 %v3782
    %v4303 = vunpack.c.l.b16 %v3783
    %v4304 = vunpack.c.l.b16 %v3784
    %v4305 = vunpack.c.l.b16 %v3785
    %v4306 = vunpack.c.l.b16 %v3786
    %v4307 = vunpack.c.l.b16 %v3787
    %v4308 = vunpack.c.l.b16 %v3788
    %v4309 = vunpack.c.l.b16 %v3789
    %v4310 = vunpack.c.l.b16 %v3790
    %v4311 = vunpack.c.l.b16 %v3791
    %v4312 = vunpack.c.l.b16 %v3792
    %v4313 = vunpack.c.l.b16 %v3793
    %v4314 = vunpack.c.l.b16 %v3794
    %v4315 = vunpack.c.l.b16 %v3795
    %v4316 = vunpack.c.l.b16 %v3796
    %v4317 = vunpack.c.l.b16 %v3797
    %v4318 = vunpack.c.l.b16 %v3798
    %v4319 = vunpack.c.l.b16 %v3799
    %v4320 = vunpack.c.l.b16 %v3800
    %v4321 = vunpack.c.l.b16 %v3801
    %v4322 = vunpack.c.l.b16 %v3802
    %v4323 = vunpack.c.l.b16 %v3803
    %v4324 = vunpack.c.l.b16 %v3804
    %v4325 = vunpack.c.l.b16 %v3805
    %v4326 = vunpack.c.l.b16 %v3806
    %v4327 = vunpack.c.l.b16 %v3807
    %v4328 = vunpack.c.l.b16 %v3808
    %v4329 = vunpack.c.l.b16 %v3809
    %v4330 = vunpack.c.l.b16 %v3810
    %v4331 = vunpack.c.l.b16 %v3811
    %v4332 = vunpack.c.l.b16 %v3812
    %v4333 = vunpack.c.l.b16 %v3813
    %v4334 = vunpack.c.l.b16 %v3814
    %v4335 = vunpack.c.l.b16 %v3815
    %v4336 = vunpack.c.l.b16 %v3816
    %v4337 = vunpack.c.l.b16 %v3817
    %v4338 = vunpack.c.l.b16 %v3818
    %v4339 = vunpack.c.l.b16 %v3819
    %v4340 = vunpack.c.l.b16 %v3820
    %v4341 = vunpack.c.l.b16 %v3821
    %v4342 = vunpack.c.l.b16 %v3822
    %v4343 = vunpack.c.l.b16 %v3823
    %v4344 = vunpack.c.l.b16 %v3824
    %v4345 = vunpack.c.l.b16 %v3825
    %v4346 = vunpack.c.l.b16 %v3826
    %v4347 = vunpack.c.l.b16 %v3827
    %v4348 = vunpack.c.l.b16 %v3828
    %v4349 = vunpack.c.l.b16 %v3829
    %v4350 = vunpack.c.l.b16 %v3830
    %v4351 = vunpack.c.l.b16 %v3831
    %v4352 = vunpack.c.l.b16 %v3832
    %v4353 = vunpack.c.l.b16 %v3833
    %v4354 = vunpack.c.l.b16 %v3834
    %v4355 = vunpack.c.l.b16 %v3835
    %v4356 = vunpack.c.l.b16 %v3836
    %v4357 = vunpack.c.l.b16 %v3837
    %v4358 = vunpack.c.l.b16 %v3838
    %v4359 = vunpack.c.l.b16 %v3839
    %v4360 = vunpack.c.l.b16 %v3840
    %v4361 = vunpack.c.l.b16 %v3841
    %v4362 = vunpack.c.l.b16 %v3842
    %v4363 = vunpack.c.l.b16 %v3843
    %v4364 = vunpack.c.l.b16 %v3844
    %v4365 = vunpack.c.l.b16 %v3845
    %v4366 = vunpack.c.l.b16 %v3846
    %v4367 = vunpack.c.l.b16 %v3847
    %v4368 = vunpack.c.l.b16 %v3848
    %v4369 = vunpack.c.l.b16 %v3849
    %v4370 = vunpack.c.l.b16 %v3850
    %v4371 = vunpack.c.l.b16 %v3851
    %v4372 = vunpack.c.l.b16 %v3852
    %v4373 = vunpack.c.l.b16 %v3853
    %v4374 = vunpack.c.l.b16 %v3854
    %v4375 = vunpack.c.l.b16 %v3855
    %v4376 = vunpack.c.l.b16 %v3856
    %v4377 = vunpack.c.l.b16 %v3857
    %v4378 = vunpack.c.l.b16 %v3858
    %v4379 = vunpack.c.l.b16 %v3859
    %v4380 = vunpack.c.l.b16 %v3860
    %v4381 = vunpack.c.l.b16 %v3861
    %v4382 = vunpack.c.l.b16 %v3862
    %v4383 = vunpack.c.l.b16 %v3863
    %v4384 = vunpack.c.l.b16 %v3864
    %v4385 = vunpack.c.l.b16 %v3865
    %v4386 = vunpack.c.l.b16 %v3866
    %v4387 = vunpack.c.l.b16 %v3867
    %v4388 = vunpack.c.l.b16 %v3868
    %v4389 = vunpack.c.l.b16 %v3869
    %v4390 = vunpack.c.l.b16 %v3870
    %v4391 = vunpack.c.l.b16 %v3871
    %v4392 = vunpack.c.l.b16 %v3872
    %v4393 = vunpack.c.l.b16 %v3873
    %v4394 = vunpack.c.l.b16 %v3874
    %v4395 = vunpack.c.l.b16 %v3875
    %v4396 = vunpack.c.l.b16 %v3876
    %v4397 = vunpack.c.l.b16 %v3877
    %v4398 = vunpack.c.l.b16 %v3878
    %v4399 = vunpack.c.l.b16 %v3879
    %v4400 = vunpack.c.l.b16 %v3880
    %v4401 = vunpack.c.l.b16 %v3881
    %v4402 = vunpack.c.l.b16 %v3882
    %v4403 = vunpack.c.l.b16 %v3883
    %v4404 = vunpack.c.l.b16 %v3884
    %v4405 = vunpack.c.l.b16 %v3885
    %v4406 = vunpack.c.l.b16 %v3886
    %v4407 = vunpack.c.l.b16 %v3887
    %v4408 = vunpack.c.l.b16 %v3888
    %v4409 = vunpack.c.l.b16 %v3889
    %v4410 = vunpack.c.l.b16 %v3890
    %v4411 = vunpack.c.l.b16 %v3891
    %v4412 = vunpack.c.l.b16 %v3892
    %v4413 = vunpack.c.l.b16 %v3893
    %v4414 = vunpack.c.l.b16 %v3894
    %v4415 = vunpack.c.l.b16 %v3895
    %v4416 = vunpack.c.l.b16 %v3896
    %v4417 = vunpack.c.l.b16 %v3897
    %v4418 = vunpack.c.l.b16 %v3898
    %v4419 = vunpack.c.l.b16 %v3899
    %v4420 = vunpack.c.l.b16 %v3900
    %v4421 = vunpack.c.l.b16 %v3901
    %v4422 = vunpack.c.l.b16 %v3902
    %v4423 = vunpack.c.l.b16 %v3903
    %v4424 = vunpack.c.l.b16 %v3904
    %v4425 = vunpack.c.l.b16 %v3905
    %v4426 = vunpack.c.l.b16 %v3906
    %v4427 = vunpack.c.l.b16 %v3907
    %v4428 = vunpack.c.l.b16 %v3908
    %v4429 = vunpack.c.l.b16 %v3909
    %v4430 = vunpack.c.l.b16 %v3910
    %v4431 = vunpack.c.l.b16 %v3911
    %v4432 = vunpack.c.l.b16 %v3912
    %v4433 = vunpack.c.l.b16 %v3913
    %v4434 = vunpack.c.l.b16 %v3914
    %v4435 = vunpack.c.l.b16 %v3915
    %v4436 = vunpack.c.l.b16 %v3916
    %v4437 = vunpack.c.l.b16 %v3917
    %v4438 = vunpack.c.l.b16 %v3918
    %v4439 = vunpack.c.l.b16 %v3919
    %v4440 = vunpack.c.l.b16 %v3920
    %v4441 = vunpack.c.l.b16 %v3921
    %v4442 = vunpack.c.l.b16 %v3922
    %v4443 = vunpack.c.l.b16 %v3923
    %v4444 = vunpack.c.l.b16 %v3924
    %v4445 = vunpack.c.l.b16 %v3925
    %v4446 = vunpack.c.l.b16 %v3926
    %v4447 = vunpack.c.l.b16 %v3927
    %v4448 = vunpack.c.l.b16 %v3928
    %v4449 = vunpack.c.l.b16 %v3929
    %v4450 = vunpack.c.l.b16 %v3930
    %v4451 = vunpack.c.l.b16 %v3931
    %v4452 = vunpack.c.l.b16 %v3932
    %v4453 = vunpack.c.l.b16 %v3933
    %v4454 = vunpack.c.l.b16 %v3934
    %v4455 = vunpack.c.l.b16 %v3935
    %v4456 = vunpack.c.l.b16 %v3936
    %v4457 = vunpack.c.l.b16 %v3937
    %v4458 = vunpack.c.l.b16 %v3938
    %v4459 = vunpack.c.l.b16 %v3939
    %v4460 = vunpack.c.l.b16 %v3940
    %v4461 = vunpack.c.l.b16 %v3941
    %v4462 = vunpack.c.l.b16 %v3942
    %v4463 = vunpack.c.l.b16 %v3943
    %v4464 = vunpack.c.l.b16 %v3944
    %v4465 = vunpack.c.l.b16 %v3945
    %v4466 = vunpack.c.l.b16 %v3946
    %v4467 = vunpack.c.l.b16 %v3947
    %v4468 = vunpack.c.l.b16 %v3948
    %v4469 = vunpack.c.l.b16 %v3949
    %v4470 = vunpack.c.l.b16 %v3950
    %v4471 = vunpack.c.l.b16 %v3951
    %v4472 = vunpack.c.l.b16 %v3952
    %v4473 = vunpack.c.l.b16 %v3953
    %v4474 = vunpack.c.l.b16 %v3954
    %v4475 = vunpack.c.l.b16 %v3955
    %v4476 = vunpack.c.l.b16 %v3956
    %v4477 = vunpack.c.l.b16 %v3957
    %v4478 = vunpack.c.l.b16 %v3958
    %v4479 = vunpack.c.l.b16 %v3959
    %v4480 = vpack.c.b16 %v4225, %v4224
    %v4481 = vpack.c.b16 %v4227, %v4226
    %v4482 = vpack.c.b16 %v4229, %v4228
    %v4483 = vpack.c.b16 %v4231, %v4230
    %v4484 = vpack.c.b16 %v4233, %v4232
    %v4485 = vpack.c.b16 %v4235, %v4234
    %v4486 = vpack.c.b16 %v4237, %v4236
    %v4487 = vpack.c.b16 %v4239, %v4238
    %v4488 = vpack.c.b16 %v4241, %v4240
    %v4489 = vpack.c.b16 %v4243, %v4242
    %v4490 = vpack.c.b16 %v4245, %v4244
    %v4491 = vpack.c.b16 %v4247, %v4246
    %v4492 = vpack.c.b16 %v4249, %v4248
    %v4493 = vpack.c.b16 %v4251, %v4250
    %v4494 = vpack.c.b16 %v4253, %v4252
    %v4495 = vpack.c.b16 %v4255, %v4254
    %v4496 = vpack.c.b16 %v4257, %v4256
    %v4497 = vpack.c.b16 %v4259, %v4258
    %v4498 = vpack.c.b16 %v4261, %v4260
    %v4499 = vpack.c.b16 %v4263, %v4262
    %v4500 = vpack.c.b16 %v4265, %v4264
    %v4501 = vpack.c.b16 %v4267, %v4266
    %v4502 = vpack.c.b16 %v4269, %v4268
    %v4503 = vpack.c.b16 %v4271, %v4270
    %v4504 = vpack.c.b16 %v4273, %v4272
    %v4505 = vpack.c.b16 %v4275, %v4274
    %v4506 = vpack.c.b16 %v4277, %v4276
    %v4507 = vpack.c.b16 %v4279, %v4278
    %v4508 = vpack.c.b16 %v4281, %v4280
    %v4509 = vpack.c.b16 %v4283, %v4282
    %v4510 = vpack.c.b16 %v4285, %v4284
    %v4511 = vpack.c.b16 %v4287, %v4286
    %v4512 = vpack.c.b16 %v4289, %v4288
    %v4513 = vpack.c.b16 %v4291, %v4290
    %v4514 = vpack.c.b16 %v4293, %v4292
    %v4515 = vpack.c.b16 %v4295, %v4294
    %v4516 = vpack.c.b16 %v4297, %v4296
    %v4517 = vpack.c.b16 %v4299, %v4298
    %v4518 = vpack.c.b16 %v4301, %v4300
    %v4519 = vpack.c.b16 %v4303, %v4302
    %v4520 = vpack.c.b16 %v4305, %v4304
    %v4521 = vpack.c.b16 %v4307, %v4306
    %v4522 = vpack.c.b16 %v4309, %v4308
    %v4523 = vpack.c.b16 %v4311, %v4310
    %v4524 = vpack.c.b16 %v4313, %v4312
    %v4525 = vpack.c.b16 %v4315, %v4314
    %v4526 = vpack.c.b16 %v4317, %v4316
    %v4527 = vpack.c.b16 %v4319, %v4318
    %v4528 = vpack.c.b16 %v4321, %v4320
    %v4529 = vpack.c.b16 %v4323, %v4322
    %v4530 = vpack.c.b16 %v4325, %v4324
    %v4531 = vpack.c.b16 %v4327, %v4326
    %v4532 = vpack.c.b16 %v4329, %v4328
    %v4533 = vpack.c.b16 %v4331, %v4330
    %v4534 = vpack.c.b16 %v4333, %v4332
    %v4535 = vpack.c.b16 %v4335, %v4334
    %v4536 = vpack.c.b16 %v4337, %v4336
    %v4537 = vpack.c.b16 %v4339, %v4338
    %v4538 = vpack.c.b16 %v4341, %v4340
    %v4539 = vpack.c.b16 %v4343, %v4342
    %v4540 = vpack.c.b16 %v4345, %v4344
    %v4541 = vpack.c.b16 %v4347, %v4346
    %v4542 = vpack.c.b16 %v4349, %v4348
    %v4543 = vpack.c.b16 %v4351, %v4350
    %v4544 = vpack.c.b16 %v4353, %v4352
    %v4545 = vpack.c.b16 %v4355, %v4354
    %v4546 = vpack.c.b16 %v4357, %v4356
    %v4547 = vpack.c.b16 %v4359, %v4358
    %v4548 = vpack.c.b16 %v4361, %v4360
    %v4549 = vpack.c.b16 %v4363, %v4362
    %v4550 = vpack.c.b16 %v4365, %v4364
    %v4551 = vpack.c.b16 %v4367, %v4366
    %v4552 = vpack.c.b16 %v4369, %v4368
    %v4553 = vpack.c.b16 %v4371, %v4370
    %v4554 = vpack.c.b16 %v4373, %v4372
    %v4555 = vpack.c.b16 %v4375, %v4374
    %v4556 = vpack.c.b16 %v4377, %v4376
    %v4557 = vpack.c.b16 %v4379, %v4378
    %v4558 = vpack.c.b16 %v4381, %v4380
    %v4559 = vpack.c.b16 %v4383, %v4382
    %v4560 = vpack.c.b16 %v4385, %v4384
    %v4561 = vpack.c.b16 %v4387, %v4386
    %v4562 = vpack.c.b16 %v4389, %v4388
    %v4563 = vpack.c.b16 %v4391, %v4390
    %v4564 = vpack.c.b16 %v4393, %v4392
    %v4565 = vpack.c.b16 %v4395, %v4394
    %v4566 = vpack.c.b16 %v4397, %v4396
    %v4567 = vpack.c.b16 %v4399, %v4398
    %v4568 = vpack.c.b16 %v4401, %v4400
    %v4569 = vpack.c.b16 %v4403, %v4402
    %v4570 = vpack.c.b16 %v4405, %v4404
    %v4571 = vpack.c.b16 %v4407, %v4406
    %v4572 = vpack.c.b16 %v4409, %v4408
    %v4573 = vpack.c.b16 %v4411, %v4410
    %v4574 = vpack.c.b16 %v4413, %v4412
    %v4575 = vpack.c.b16 %v4415, %v4414
    %v4576 = vpack.c.b16 %v4417, %v4416
    %v4577 = vpack.c.b16 %v4419, %v4418
    %v4578 = vpack.c.b16 %v4421, %v4420
    %v4579 = vpack.c.b16 %v4423, %v4422
    %v4580 = vpack.c.b16 %v4425, %v4424
    %v4581 = vpack.c.b16 %v4427, %v4426
    %v4582 = vpack.c.b16 %v4429, %v4428
    %v4583 = vpack.c.b16 %v4431, %v4430
    %v4584 = vpack.c.b16 %v4433, %v4432
    %v4585 = vpack.c.b16 %v4435, %v4434
    %v4586 = vpack.c.b16 %v4437, %v4436
    %v4587 = vpack.c.b16 %v4439, %v4438
    %v4588 = vpack.c.b16 %v4441, %v4440
    %v4589 = vpack.c.b16 %v4443, %v4442
    %v4590 = vpack.c.b16 %v4445, %v4444
    %v4591 = vpack.c.b16 %v4447, %v4446
    %v4592 = vpack.c.b16 %v4449, %v4448
    %v4593 = vpack.c.b16 %v4451, %v4450
    %v4594 = vpack.c.b16 %v4453, %v4452
    %v4595 = vpack.c.b16 %v4455, %v4454
    %v4596 = vpack.c.b16 %v4457, %v4456
    %v4597 = vpack.c.b16 %v4459, %v4458
    %v4598 = vpack.c.b16 %v4461, %v4460
    %v4599 = vpack.c.b16 %v4463, %v4462
    %v4600 = vpack.c.b16 %v4465, %v4464
    %v4601 = vpack.c.b16 %v4467, %v4466
    %v4602 = vpack.c.b16 %v4469, %v4468
    %v4603 = vpack.c.b16 %v4471, %v4470
    %v4604 = vpack.c.b16 %v4473, %v4472
    %v4605 = vpack.c.b16 %v4475, %v4474
    %v4606 = vpack.c.b16 %v4477, %v4476
    %v4607 = vpack.c.b16 %v4479, %v4478
    %4736 = vmatprep.subr.bf16.mxu0 0
    %4737 = vmatpush1.bf16.msra.mxu0 %v4487
    %4738 = vmatprep.subr.bf16.mxu0 0
    %4739 = vmatpush1.bf16.msra.mxu0 %v4486
    %4740 = vmatprep.subr.bf16.mxu0 0
    %4741 = vmatpush1.bf16.msra.mxu0 %v4485
    %4742 = vmatprep.subr.bf16.mxu0 0
    %4743 = vmatpush1.bf16.msra.mxu0 %v4484
    %4744 = vmatprep.subr.bf16.mxu0 0
    %4745 = vmatpush1.bf16.msra.mxu0 %v4483
    %4746 = vmatprep.subr.bf16.mxu0 0
    %4747 = vmatpush1.bf16.msra.mxu0 %v4482
    %4748 = vmatprep.subr.bf16.mxu0 0
    %4749 = vmatpush1.bf16.msra.mxu0 %v4481
    %4750 = vmatprep.subr.bf16.mxu0 0
    %4751 = vmatpush1.bf16.msra.mxu0 %v4480
    %4752 = vmatprep.subr.bf16.mxu0 0
    %4753 = vmatpush2.bf16.msra.mxu0 %v4495
    %4754 = vmatprep.subr.bf16.mxu0 0
    %4755 = vmatpush2.bf16.msra.mxu0 %v4494
    %4756 = vmatprep.subr.bf16.mxu0 0
    %4757 = vmatpush2.bf16.msra.mxu0 %v4493
    %4758 = vmatprep.subr.bf16.mxu0 0
    %4759 = vmatpush2.bf16.msra.mxu0 %v4492
    %4760 = vmatprep.subr.bf16.mxu0 0
    %4761 = vmatpush2.bf16.msra.mxu0 %v4491
    %4762 = vmatprep.subr.bf16.mxu0 0
    %4763 = vmatpush2.bf16.msra.mxu0 %v4490
    %4764 = vmatprep.subr.bf16.mxu0 0
    %4765 = vmatpush2.bf16.msra.mxu0 %v4489
    %4766 = vmatprep.subr.bf16.mxu0 0
    %4767 = vmatpush2.bf16.msra.mxu0 %v4488
    %4768 = vmatprep.mubr.bf16.mxu0 %v3688
    %4769 = vmatmul.mubr.bf16.gmra.mxu0 %v3687
    %v4770 = vpop.f32.mrf.mxu0
    %v4771 = vadd.f32 %v3966, %v4770
    %v4772 = vpop.f32.mrf.mxu0
    %v4773 = vpop.f32.mrf.mxu0
    %v4774 = vadd.f32 %v3966, %v4773
    %v4775 = vpop.f32.mrf.mxu0
    %4776 = vdwg.mxu0
    %4777 = vmatprep.subr.bf16.mxu0 0
    %4778 = vmatpush1.bf16.msra.mxu0 %v4503
    %4779 = vmatprep.subr.bf16.mxu0 0
    %4780 = vmatpush1.bf16.msra.mxu0 %v4502
    %4781 = vmatprep.subr.bf16.mxu0 0
    %4782 = vmatpush1.bf16.msra.mxu0 %v4501
    %4783 = vmatprep.subr.bf16.mxu0 0
    %4784 = vmatpush1.bf16.msra.mxu0 %v4500
    %4785 = vmatprep.subr.bf16.mxu0 0
    %4786 = vmatpush1.bf16.msra.mxu0 %v4499
    %4787 = vmatprep.subr.bf16.mxu0 0
    %4788 = vmatpush1.bf16.msra.mxu0 %v4498
    %4789 = vmatprep.subr.bf16.mxu0 0
    %4790 = vmatpush1.bf16.msra.mxu0 %v4497
    %4791 = vmatprep.subr.bf16.mxu0 0
    %4792 = vmatpush1.bf16.msra.mxu0 %v4496
    %4793 = vmatprep.subr.bf16.mxu0 0
    %4794 = vmatpush2.bf16.msra.mxu0 %v4511
    %4795 = vmatprep.subr.bf16.mxu0 0
    %4796 = vmatpush2.bf16.msra.mxu0 %v4510
    %4797 = vmatprep.subr.bf16.mxu0 0
    %4798 = vmatpush2.bf16.msra.mxu0 %v4509
    %4799 = vmatprep.subr.bf16.mxu0 0
    %4800 = vmatpush2.bf16.msra.mxu0 %v4508
    %4801 = vmatprep.subr.bf16.mxu0 0
    %4802 = vmatpush2.bf16.msra.mxu0 %v4507
    %4803 = vmatprep.subr.bf16.mxu0 0
    %4804 = vmatpush2.bf16.msra.mxu0 %v4506
    %4805 = vmatprep.subr.bf16.mxu0 0
    %4806 = vmatpush2.bf16.msra.mxu0 %v4505
    %4807 = vmatprep.subr.bf16.mxu0 0
    %4808 = vmatpush2.bf16.msra.mxu0 %v4504
    %4809 = vmatprep.mubr.bf16.mxu0 %v3690
    %4810 = vmatmul.mubr.bf16.gmra.mxu0 %v3689
    %v4811 = vpop.f32.mrf.mxu0
    %v4812 = vadd.f32 %v4771, %v4811
    %v4813 = vpop.f32.mrf.mxu0
    %v4814 = vpop.f32.mrf.mxu0
    %v4815 = vadd.f32 %v4774, %v4814
    %v4816 = vpop.f32.mrf.mxu0
    %4817 = vdwg.mxu0
    %4818 = vmatprep.subr.bf16.mxu0 0
    %4819 = vmatpush1.bf16.msra.mxu0 %v4519
    %4820 = vmatprep.subr.bf16.mxu0 0
    %4821 = vmatpush1.bf16.msra.mxu0 %v4518
    %4822 = vmatprep.subr.bf16.mxu0 0
    %4823 = vmatpush1.bf16.msra.mxu0 %v4517
    %4824 = vmatprep.subr.bf16.mxu0 0
    %4825 = vmatpush1.bf16.msra.mxu0 %v4516
    %4826 = vmatprep.subr.bf16.mxu0 0
    %4827 = vmatpush1.bf16.msra.mxu0 %v4515
    %4828 = vmatprep.subr.bf16.mxu0 0
    %4829 = vmatpush1.bf16.msra.mxu0 %v4514
    %4830 = vmatprep.subr.bf16.mxu0 0
    %4831 = vmatpush1.bf16.msra.mxu0 %v4513
    %4832 = vmatprep.subr.bf16.mxu0 0
    %4833 = vmatpush1.bf16.msra.mxu0 %v4512
    %4834 = vmatprep.subr.bf16.mxu0 0
    %4835 = vmatpush2.bf16.msra.mxu0 %v4527
    %4836 = vmatprep.subr.bf16.mxu0 0
    %4837 = vmatpush2.bf16.msra.mxu0 %v4526
    %4838 = vmatprep.subr.bf16.mxu0 0
    %4839 = vmatpush2.bf16.msra.mxu0 %v4525
    %4840 = vmatprep.subr.bf16.mxu0 0
    %4841 = vmatpush2.bf16.msra.mxu0 %v4524
    %4842 = vmatprep.subr.bf16.mxu0 0
    %4843 = vmatpush2.bf16.msra.mxu0 %v4523
    %4844 = vmatprep.subr.bf16.mxu0 0
    %4845 = vmatpush2.bf16.msra.mxu0 %v4522
    %4846 = vmatprep.subr.bf16.mxu0 0
    %4847 = vmatpush2.bf16.msra.mxu0 %v4521
    %4848 = vmatprep.subr.bf16.mxu0 0
    %4849 = vmatpush2.bf16.msra.mxu0 %v4520
    %4850 = vmatprep.mubr.bf16.mxu0 %v3692
    %4851 = vmatmul.mubr.bf16.gmra.mxu0 %v3691
    %v4852 = vpop.f32.mrf.mxu0
    %v4853 = vadd.f32 %v4812, %v4852
    %v4854 = vpop.f32.mrf.mxu0
    %v4855 = vpop.f32.mrf.mxu0
    %v4856 = vadd.f32 %v4815, %v4855
    %v4857 = vpop.f32.mrf.mxu0
    %4858 = vdwg.mxu0
    %4859 = vmatprep.subr.bf16.mxu0 0
    %4860 = vmatpush1.bf16.msra.mxu0 %v4535
    %4861 = vmatprep.subr.bf16.mxu0 0
    %4862 = vmatpush1.bf16.msra.mxu0 %v4534
    %4863 = vmatprep.subr.bf16.mxu0 0
    %4864 = vmatpush1.bf16.msra.mxu0 %v4533
    %4865 = vmatprep.subr.bf16.mxu0 0
    %4866 = vmatpush1.bf16.msra.mxu0 %v4532
    %4867 = vmatprep.subr.bf16.mxu0 0
    %4868 = vmatpush1.bf16.msra.mxu0 %v4531
    %4869 = vmatprep.subr.bf16.mxu0 0
    %4870 = vmatpush1.bf16.msra.mxu0 %v4530
    %4871 = vmatprep.subr.bf16.mxu0 0
    %4872 = vmatpush1.bf16.msra.mxu0 %v4529
    %4873 = vmatprep.subr.bf16.mxu0 0
    %4874 = vmatpush1.bf16.msra.mxu0 %v4528
    %4875 = vmatprep.subr.bf16.mxu0 0
    %4876 = vmatpush2.bf16.msra.mxu0 %v4543
    %4877 = vmatprep.subr.bf16.mxu0 0
    %4878 = vmatpush2.bf16.msra.mxu0 %v4542
    %4879 = vmatprep.subr.bf16.mxu0 0
    %4880 = vmatpush2.bf16.msra.mxu0 %v4541
    %4881 = vmatprep.subr.bf16.mxu0 0
    %4882 = vmatpush2.bf16.msra.mxu0 %v4540
    %4883 = vmatprep.subr.bf16.mxu0 0
    %4884 = vmatpush2.bf16.msra.mxu0 %v4539
    %4885 = vmatprep.subr.bf16.mxu0 0
    %4886 = vmatpush2.bf16.msra.mxu0 %v4538
    %4887 = vmatprep.subr.bf16.mxu0 0
    %4888 = vmatpush2.bf16.msra.mxu0 %v4537
    %4889 = vmatprep.subr.bf16.mxu0 0
    %4890 = vmatpush2.bf16.msra.mxu0 %v4536
    %4891 = vmatprep.mubr.bf16.mxu0 %v3694
    %4892 = vmatmul.mubr.bf16.gmra.mxu0 %v3693
    %v4893 = vpop.f32.mrf.mxu0
    %v4894 = vadd.f32 %v4853, %v4893
    %v4895 = vpop.f32.mrf.mxu0
    %v4896 = vpop.f32.mrf.mxu0
    %v4897 = vadd.f32 %v4856, %v4896
    %v4898 = vpop.f32.mrf.mxu0
    %4899 = vdwg.mxu0
    %4900 = vmatprep.subr.bf16.mxu0 0
    %4901 = vmatpush1.bf16.msra.mxu0 %v4551
    %4902 = vmatprep.subr.bf16.mxu0 0
    %4903 = vmatpush1.bf16.msra.mxu0 %v4550
    %4904 = vmatprep.subr.bf16.mxu0 0
    %4905 = vmatpush1.bf16.msra.mxu0 %v4549
    %4906 = vmatprep.subr.bf16.mxu0 0
    %4907 = vmatpush1.bf16.msra.mxu0 %v4548
    %4908 = vmatprep.subr.bf16.mxu0 0
    %4909 = vmatpush1.bf16.msra.mxu0 %v4547
    %4910 = vmatprep.subr.bf16.mxu0 0
    %4911 = vmatpush1.bf16.msra.mxu0 %v4546
    %4912 = vmatprep.subr.bf16.mxu0 0
    %4913 = vmatpush1.bf16.msra.mxu0 %v4545
    %4914 = vmatprep.subr.bf16.mxu0 0
    %4915 = vmatpush1.bf16.msra.mxu0 %v4544
    %4916 = vmatprep.subr.bf16.mxu0 0
    %4917 = vmatpush2.bf16.msra.mxu0 %v4559
    %4918 = vmatprep.subr.bf16.mxu0 0
    %4919 = vmatpush2.bf16.msra.mxu0 %v4558
    %4920 = vmatprep.subr.bf16.mxu0 0
    %4921 = vmatpush2.bf16.msra.mxu0 %v4557
    %4922 = vmatprep.subr.bf16.mxu0 0
    %4923 = vmatpush2.bf16.msra.mxu0 %v4556
    %4924 = vmatprep.subr.bf16.mxu0 0
    %4925 = vmatpush2.bf16.msra.mxu0 %v4555
    %4926 = vmatprep.subr.bf16.mxu0 0
    %4927 = vmatpush2.bf16.msra.mxu0 %v4554
    %4928 = vmatprep.subr.bf16.mxu0 0
    %4929 = vmatpush2.bf16.msra.mxu0 %v4553
    %4930 = vmatprep.subr.bf16.mxu0 0
    %4931 = vmatpush2.bf16.msra.mxu0 %v4552
    %4932 = vmatprep.mubr.bf16.mxu0 %v3696
    %4933 = vmatmul.mubr.bf16.gmra.mxu0 %v3695
    %v4934 = vpop.f32.mrf.mxu0
    %v4935 = vadd.f32 %v4894, %v4934
    %v4936 = vpop.f32.mrf.mxu0
    %v4937 = vpop.f32.mrf.mxu0
    %v4938 = vadd.f32 %v4897, %v4937
    %v4939 = vpop.f32.mrf.mxu0
    %4940 = vdwg.mxu0
    %4941 = vmatprep.subr.bf16.mxu0 0
    %4942 = vmatpush1.bf16.msra.mxu0 %v4567
    %4943 = vmatprep.subr.bf16.mxu0 0
    %4944 = vmatpush1.bf16.msra.mxu0 %v4566
    %4945 = vmatprep.subr.bf16.mxu0 0
    %4946 = vmatpush1.bf16.msra.mxu0 %v4565
    %4947 = vmatprep.subr.bf16.mxu0 0
    %4948 = vmatpush1.bf16.msra.mxu0 %v4564
    %4949 = vmatprep.subr.bf16.mxu0 0
    %4950 = vmatpush1.bf16.msra.mxu0 %v4563
    %4951 = vmatprep.subr.bf16.mxu0 0
    %4952 = vmatpush1.bf16.msra.mxu0 %v4562
    %4953 = vmatprep.subr.bf16.mxu0 0
    %4954 = vmatpush1.bf16.msra.mxu0 %v4561
    %4955 = vmatprep.subr.bf16.mxu0 0
    %4956 = vmatpush1.bf16.msra.mxu0 %v4560
    %4957 = vmatprep.subr.bf16.mxu0 0
    %4958 = vmatpush2.bf16.msra.mxu0 %v4575
    %4959 = vmatprep.subr.bf16.mxu0 0
    %4960 = vmatpush2.bf16.msra.mxu0 %v4574
    %4961 = vmatprep.subr.bf16.mxu0 0
    %4962 = vmatpush2.bf16.msra.mxu0 %v4573
    %4963 = vmatprep.subr.bf16.mxu0 0
    %4964 = vmatpush2.bf16.msra.mxu0 %v4572
    %4965 = vmatprep.subr.bf16.mxu0 0
    %4966 = vmatpush2.bf16.msra.mxu0 %v4571
    %4967 = vmatprep.subr.bf16.mxu0 0
    %4968 = vmatpush2.bf16.msra.mxu0 %v4570
    %4969 = vmatprep.subr.bf16.mxu0 0
    %4970 = vmatpush2.bf16.msra.mxu0 %v4569
    %4971 = vmatprep.subr.bf16.mxu0 0
    %4972 = vmatpush2.bf16.msra.mxu0 %v4568
    %4973 = vmatprep.mubr.bf16.mxu0 %v3698
    %4974 = vmatmul.mubr.bf16.gmra.mxu0 %v3697
    %v4975 = vpop.f32.mrf.mxu0
    %v4976 = vadd.f32 %v4935, %v4975
    %v4977 = vpop.f32.mrf.mxu0
    %v4978 = vpop.f32.mrf.mxu0
    %v4979 = vadd.f32 %v4938, %v4978
    %v4980 = vpop.f32.mrf.mxu0
    %4981 = vdwg.mxu0
    %4982 = vmatprep.subr.bf16.mxu0 0
    %4983 = vmatpush1.bf16.msra.mxu0 %v4583
    %4984 = vmatprep.subr.bf16.mxu0 0
    %4985 = vmatpush1.bf16.msra.mxu0 %v4582
    %4986 = vmatprep.subr.bf16.mxu0 0
    %4987 = vmatpush1.bf16.msra.mxu0 %v4581
    %4988 = vmatprep.subr.bf16.mxu0 0
    %4989 = vmatpush1.bf16.msra.mxu0 %v4580
    %4990 = vmatprep.subr.bf16.mxu0 0
    %4991 = vmatpush1.bf16.msra.mxu0 %v4579
    %4992 = vmatprep.subr.bf16.mxu0 0
    %4993 = vmatpush1.bf16.msra.mxu0 %v4578
    %4994 = vmatprep.subr.bf16.mxu0 0
    %4995 = vmatpush1.bf16.msra.mxu0 %v4577
    %4996 = vmatprep.subr.bf16.mxu0 0
    %4997 = vmatpush1.bf16.msra.mxu0 %v4576
    %4998 = vmatprep.subr.bf16.mxu0 0
    %4999 = vmatpush2.bf16.msra.mxu0 %v4591
    %5000 = vmatprep.subr.bf16.mxu0 0
    %5001 = vmatpush2.bf16.msra.mxu0 %v4590
    %5002 = vmatprep.subr.bf16.mxu0 0
    %5003 = vmatpush2.bf16.msra.mxu0 %v4589
    %5004 = vmatprep.subr.bf16.mxu0 0
    %5005 = vmatpush2.bf16.msra.mxu0 %v4588
    %5006 = vmatprep.subr.bf16.mxu0 0
    %5007 = vmatpush2.bf16.msra.mxu0 %v4587
    %5008 = vmatprep.subr.bf16.mxu0 0
    %5009 = vmatpush2.bf16.msra.mxu0 %v4586
    %5010 = vmatprep.subr.bf16.mxu0 0
    %5011 = vmatpush2.bf16.msra.mxu0 %v4585
    %5012 = vmatprep.subr.bf16.mxu0 0
    %5013 = vmatpush2.bf16.msra.mxu0 %v4584
    %5014 = vmatprep.mubr.bf16.mxu0 %v3700
    %5015 = vmatmul.mubr.bf16.gmra.mxu0 %v3699
    %v5016 = vpop.f32.mrf.mxu0
    %v5017 = vadd.f32 %v4976, %v5016
    %v5018 = vpop.f32.mrf.mxu0
    %v5019 = vpop.f32.mrf.mxu0
    %v5020 = vadd.f32 %v4979, %v5019
    %v5021 = vpop.f32.mrf.mxu0
    %5022 = vdwg.mxu0
    %5023 = vmatprep.subr.bf16.mxu0 0
    %5024 = vmatpush1.bf16.msra.mxu0 %v4599
    %5025 = vmatprep.subr.bf16.mxu0 0
    %5026 = vmatpush1.bf16.msra.mxu0 %v4598
    %5027 = vmatprep.subr.bf16.mxu0 0
    %5028 = vmatpush1.bf16.msra.mxu0 %v4597
    %5029 = vmatprep.subr.bf16.mxu0 0
    %5030 = vmatpush1.bf16.msra.mxu0 %v4596
    %5031 = vmatprep.subr.bf16.mxu0 0
    %5032 = vmatpush1.bf16.msra.mxu0 %v4595
    %5033 = vmatprep.subr.bf16.mxu0 0
    %5034 = vmatpush1.bf16.msra.mxu0 %v4594
    %5035 = vmatprep.subr.bf16.mxu0 0
    %5036 = vmatpush1.bf16.msra.mxu0 %v4593
    %5037 = vmatprep.subr.bf16.mxu0 0
    %5038 = vmatpush1.bf16.msra.mxu0 %v4592
    %5039 = vmatprep.subr.bf16.mxu0 0
    %5040 = vmatpush2.bf16.msra.mxu0 %v4607
    %5041 = vmatprep.subr.bf16.mxu0 0
    %5042 = vmatpush2.bf16.msra.mxu0 %v4606
    %5043 = vmatprep.subr.bf16.mxu0 0
    %5044 = vmatpush2.bf16.msra.mxu0 %v4605
    %5045 = vmatprep.subr.bf16.mxu0 0
    %5046 = vmatpush2.bf16.msra.mxu0 %v4604
    %5047 = vmatprep.subr.bf16.mxu0 0
    %5048 = vmatpush2.bf16.msra.mxu0 %v4603
    %5049 = vmatprep.subr.bf16.mxu0 0
    %5050 = vmatpush2.bf16.msra.mxu0 %v4602
    %5051 = vmatprep.subr.bf16.mxu0 0
    %5052 = vmatpush2.bf16.msra.mxu0 %v4601
    %5053 = vmatprep.subr.bf16.mxu0 0
    %5054 = vmatpush2.bf16.msra.mxu0 %v4600
    %5055 = vmatprep.mubr.bf16.mxu0 %v3702
    %5056 = vmatmul.mubr.bf16.gmra.mxu0 %v3701
    %v5057 = vpop.f32.mrf.mxu0
    %v5058 = vadd.f32 %v5017, %v5057
    %v5059 = vpop.f32.mrf.mxu0
    %v5060 = vpop.f32.mrf.mxu0
    %v5061 = vadd.f32 %v5020, %v5060
    %v5062 = vpop.f32.mrf.mxu0
    %5063 = vdwg.mxu0
    %v5064 = vadd.f32 %v3027, %v5058
    %v5065 = vadd.f32 %v3028, %v5061
    %s5066 = scalar_lea.vmem %s12, 1
    %v5067 = vld [vmem:[%s5066] sm:$0x1]
    %s5068 = scalar_lea.vmem %s13, 1
    %v5069 = vld [vmem:[%s5068] sm:$0x1]
    %v5070 = vsel %vm228, %v5064, 0.0
    %5071 = vadd.xlane.f32.xlu0 %v5070
    %v5072 = vpop.xlane.xlu0 %5071
    %v5073 = vsel %vm228, %v5065, 0.0
    %5074 = vadd.xlane.f32.xlu0 %v5073
    %v5075 = vpop.xlane.xlu0 %5074
    %v5076 = vmul.f32 %v5072, %v528
    %v5077 = vmul.f32 %v5075, %v528
    %v5078 = vsub.f32 %v5064, %v5076
    %v5079 = vsub.f32 %v5065, %v5077
    %v5080 = vmul.f32 %v5078, %v5078
    %v5081 = vmul.f32 %v5079, %v5079
    %v5082 = vsel %vm228, %v5080, 0.0
    %5083 = vadd.xlane.f32.xlu0 %v5082
    %v5084 = vpop.xlane.xlu0 %5083
    %v5085 = vsel %vm228, %v5081, 0.0
    %5086 = vadd.xlane.f32.xlu0 %v5085
    %v5087 = vpop.xlane.xlu0 %5086
    %v5088 = vmul.f32 %v5084, %v528
    %v5089 = vmul.f32 %v5087, %v528
    %v5090 = vadd.f32 %v5088, 1e-05
    %v5091 = vadd.f32 %v5089, 1e-05
    %v5092 = vrsqrt.pop %v5090
    %v5093 = vrsqrt.pop %v5091
    %v5094 = vmul.f32 %v5078, %v5092
    %v5095 = vmul.f32 %v5079, %v5093
    %v5097 = vlaneseq
    %v5098 = vshrl.u32 %v5097, 7
    %v5099 = vsub.s32 0, %v5098
    %v5100 = vrot.slane %v5067, %v5099
    %v5102 = vmul.f32 %v5094, %v5100
    %v5103 = vmul.f32 %v5095, %v5100
    %v5105 = vlaneseq
    %v5106 = vshrl.u32 %v5105, 7
    %v5107 = vsub.s32 0, %v5106
    %v5108 = vrot.slane %v5069, %v5107
    %v5110 = vadd.f32 %v5102, %v5108
    %v5111 = vadd.f32 %v5103, %v5108
    %v5112 = vld [vmem:[%s15] sm:$0x1]
    %v5114 = vrot.slane %v5111, 7
    %vm5116 = vcmask 1040384
    %v5117 = vsel %vm5116, %v5110, %v5114
    %v5118 = vpack.c.bf16 %v5117, %v5117
    %v5119 = vld [vmem:[#allocation14] sm:$0xf]
    %v5120 = vld [vmem:[#allocation14 + $0x4] sm:$0xf]
    %v5121 = vld [vmem:[#allocation14 + $0x8] sm:$0xf]
    %v5122 = vld [vmem:[#allocation14 + $0xc] sm:$0xf]
    %v5127 = vunpack.c.l.b16 %v5119
    %v5128 = vunpack.c.l.b16 %v5120
    %v5129 = vunpack.c.l.b16 %v5121
    %v5130 = vunpack.c.l.b16 %v5122
    %v5131 = vpack.c.b16 %v5128, %v5127
    %v5132 = vpack.c.b16 %v5130, %v5129
    %v5136 = vsel %vm228, %v5118, 0
    %5138 = vmatprep.subr.bf16.mxu0 0
    %5139 = vmatpush1.bf16.msra.mxu0 0
    %5140 = vmatprep.subr.bf16.mxu0 0
    %5141 = vmatpush1.bf16.msra.mxu0 0
    %5142 = vmatprep.subr.bf16.mxu0 0
    %5143 = vmatpush1.bf16.msra.mxu0 0
    %5144 = vmatprep.subr.bf16.mxu0 0
    %5145 = vmatpush1.bf16.msra.mxu0 0
    %5146 = vmatprep.subr.bf16.mxu0 0
    %5147 = vmatpush1.bf16.msra.mxu0 0
    %5148 = vmatprep.subr.bf16.mxu0 0
    %5149 = vmatpush1.bf16.msra.mxu0 0
    %5150 = vmatprep.subr.bf16.mxu0 0
    %5151 = vmatpush1.bf16.msra.mxu0 %v5132
    %5152 = vmatprep.subr.bf16.mxu0 0
    %5153 = vmatpush1.bf16.msra.mxu0 %v5131
    %5154 = vmatprep.subr.bf16.mxu0 0
    %5155 = vmatpush2.bf16.msra.mxu0 0
    %5156 = vmatprep.subr.bf16.mxu0 0
    %5157 = vmatpush2.bf16.msra.mxu0 0
    %5158 = vmatprep.subr.bf16.mxu0 0
    %5159 = vmatpush2.bf16.msra.mxu0 0
    %5160 = vmatprep.subr.bf16.mxu0 0
    %5161 = vmatpush2.bf16.msra.mxu0 0
    %5162 = vmatprep.subr.bf16.mxu0 0
    %5163 = vmatpush2.bf16.msra.mxu0 0
    %5164 = vmatprep.subr.bf16.mxu0 0
    %5165 = vmatpush2.bf16.msra.mxu0 0
    %5166 = vmatprep.subr.bf16.mxu0 0
    %5167 = vmatpush2.bf16.msra.mxu0 0
    %5168 = vmatprep.subr.bf16.mxu0 0
    %5169 = vmatpush2.bf16.msra.mxu0 0
    %5170 = vmatprep.mubr.bf16.mxu0 0
    %5171 = vmatmul.mubr.bf16.gmra.mxu0 %v5136
    %v5172 = vpop.f32.mrf.mxu0
    %v5173 = vadd.f32 0.0, %v5172
    %v5174 = vpop.f32.mrf.mxu0
    %v5175 = vpop.f32.mrf.mxu0
    %v5176 = vpop.f32.mrf.mxu0
    %5177 = vdwg.mxu0
    %v5179 = vlaneseq
    %v5180 = vshrl.u32 %v5179, 7
    %v5181 = vsub.s32 0, %v5180
    %v5182 = vrot.slane %v5112, %v5181
    %v5184 = vadd.f32 %v5182, %v5173
    %v5186 = vrot.slane %v5110, 1
    %v5188 = vsel %vm5116, %v5186, %v5111
    %v5189 = vpack.c.bf16 %v5188, %v5188
    %s5190 = scalar_lea.vmem [#allocation14], 16
    %v5191 = vld [vmem:[%s5190] sm:$0xf]
    %v5192 = vld [vmem:[%s5190 + $0x4] sm:$0xf]
    %v5193 = vld [vmem:[%s5190 + $0x8] sm:$0xf]
    %v5194 = vld [vmem:[%s5190 + $0xc] sm:$0xf]
    %v5199 = vunpack.c.l.b16 %v5191
    %v5200 = vunpack.c.l.b16 %v5192
    %v5201 = vunpack.c.l.b16 %v5193
    %v5202 = vunpack.c.l.b16 %v5194
    %v5203 = vpack.c.b16 %v5200, %v5199
    %v5204 = vpack.c.b16 %v5202, %v5201
    %v5208 = vsel %vm228, %v5189, 0
    %5210 = vmatprep.subr.bf16.mxu0 0
    %5211 = vmatpush1.bf16.msra.mxu0 0
    %5212 = vmatprep.subr.bf16.mxu0 0
    %5213 = vmatpush1.bf16.msra.mxu0 0
    %5214 = vmatprep.subr.bf16.mxu0 0
    %5215 = vmatpush1.bf16.msra.mxu0 0
    %5216 = vmatprep.subr.bf16.mxu0 0
    %5217 = vmatpush1.bf16.msra.mxu0 0
    %5218 = vmatprep.subr.bf16.mxu0 0
    %5219 = vmatpush1.bf16.msra.mxu0 0
    %5220 = vmatprep.subr.bf16.mxu0 0
    %5221 = vmatpush1.bf16.msra.mxu0 0
    %5222 = vmatprep.subr.bf16.mxu0 0
    %5223 = vmatpush1.bf16.msra.mxu0 %v5204
    %5224 = vmatprep.subr.bf16.mxu0 0
    %5225 = vmatpush1.bf16.msra.mxu0 %v5203
    %5226 = vmatprep.subr.bf16.mxu0 0
    %5227 = vmatpush2.bf16.msra.mxu0 0
    %5228 = vmatprep.subr.bf16.mxu0 0
    %5229 = vmatpush2.bf16.msra.mxu0 0
    %5230 = vmatprep.subr.bf16.mxu0 0
    %5231 = vmatpush2.bf16.msra.mxu0 0
    %5232 = vmatprep.subr.bf16.mxu0 0
    %5233 = vmatpush2.bf16.msra.mxu0 0
    %5234 = vmatprep.subr.bf16.mxu0 0
    %5235 = vmatpush2.bf16.msra.mxu0 0
    %5236 = vmatprep.subr.bf16.mxu0 0
    %5237 = vmatpush2.bf16.msra.mxu0 0
    %5238 = vmatprep.subr.bf16.mxu0 0
    %5239 = vmatpush2.bf16.msra.mxu0 0
    %5240 = vmatprep.subr.bf16.mxu0 0
    %5241 = vmatpush2.bf16.msra.mxu0 0
    %5242 = vmatprep.mubr.bf16.mxu0 0
    %5243 = vmatmul.mubr.bf16.gmra.mxu0 %v5208
    %v5244 = vpop.f32.mrf.mxu0
    %v5245 = vadd.f32 0.0, %v5244
    %v5246 = vpop.f32.mrf.mxu0
    %v5247 = vpop.f32.mrf.mxu0
    %v5248 = vpop.f32.mrf.mxu0
    %5249 = vdwg.mxu0
    %v5250 = vadd.f32 %v5184, %v5245
    %v5251 = vrot.slane %v5110, 2
    %v5253 = vrot.slane %v5111, 1
    %v5255 = vsel %vm5116, %v5251, %v5253
    %v5256 = vpack.c.bf16 %v5255, %v5255
    %s5257 = scalar_lea.vmem [#allocation14], 32
    %v5258 = vld [vmem:[%s5257] sm:$0xf]
    %v5259 = vld [vmem:[%s5257 + $0x4] sm:$0xf]
    %v5260 = vld [vmem:[%s5257 + $0x8] sm:$0xf]
    %v5261 = vld [vmem:[%s5257 + $0xc] sm:$0xf]
    %v5266 = vunpack.c.l.b16 %v5258
    %v5267 = vunpack.c.l.b16 %v5259
    %v5268 = vunpack.c.l.b16 %v5260
    %v5269 = vunpack.c.l.b16 %v5261
    %v5270 = vpack.c.b16 %v5267, %v5266
    %v5271 = vpack.c.b16 %v5269, %v5268
    %v5275 = vsel %vm228, %v5256, 0
    %5277 = vmatprep.subr.bf16.mxu0 0
    %5278 = vmatpush1.bf16.msra.mxu0 0
    %5279 = vmatprep.subr.bf16.mxu0 0
    %5280 = vmatpush1.bf16.msra.mxu0 0
    %5281 = vmatprep.subr.bf16.mxu0 0
    %5282 = vmatpush1.bf16.msra.mxu0 0
    %5283 = vmatprep.subr.bf16.mxu0 0
    %5284 = vmatpush1.bf16.msra.mxu0 0
    %5285 = vmatprep.subr.bf16.mxu0 0
    %5286 = vmatpush1.bf16.msra.mxu0 0
    %5287 = vmatprep.subr.bf16.mxu0 0
    %5288 = vmatpush1.bf16.msra.mxu0 0
    %5289 = vmatprep.subr.bf16.mxu0 0
    %5290 = vmatpush1.bf16.msra.mxu0 %v5271
    %5291 = vmatprep.subr.bf16.mxu0 0
    %5292 = vmatpush1.bf16.msra.mxu0 %v5270
    %5293 = vmatprep.subr.bf16.mxu0 0
    %5294 = vmatpush2.bf16.msra.mxu0 0
    %5295 = vmatprep.subr.bf16.mxu0 0
    %5296 = vmatpush2.bf16.msra.mxu0 0
    %5297 = vmatprep.subr.bf16.mxu0 0
    %5298 = vmatpush2.bf16.msra.mxu0 0
    %5299 = vmatprep.subr.bf16.mxu0 0
    %5300 = vmatpush2.bf16.msra.mxu0 0
    %5301 = vmatprep.subr.bf16.mxu0 0
    %5302 = vmatpush2.bf16.msra.mxu0 0
    %5303 = vmatprep.subr.bf16.mxu0 0
    %5304 = vmatpush2.bf16.msra.mxu0 0
    %5305 = vmatprep.subr.bf16.mxu0 0
    %5306 = vmatpush2.bf16.msra.mxu0 0
    %5307 = vmatprep.subr.bf16.mxu0 0
    %5308 = vmatpush2.bf16.msra.mxu0 0
    %5309 = vmatprep.mubr.bf16.mxu0 0
    %5310 = vmatmul.mubr.bf16.gmra.mxu0 %v5275
    %v5311 = vpop.f32.mrf.mxu0
    %v5312 = vadd.f32 0.0, %v5311
    %v5313 = vpop.f32.mrf.mxu0
    %v5314 = vpop.f32.mrf.mxu0
    %v5315 = vpop.f32.mrf.mxu0
    %5316 = vdwg.mxu0
    %v5317 = vadd.f32 %v5250, %v5312
    %v5318 = vrot.slane %v5110, 3
    %v5320 = vrot.slane %v5111, 2
    %v5322 = vsel %vm5116, %v5318, %v5320
    %v5323 = vpack.c.bf16 %v5322, %v5322
    %s5324 = scalar_lea.vmem [#allocation14], 48
    %v5325 = vld [vmem:[%s5324] sm:$0xf]
    %v5326 = vld [vmem:[%s5324 + $0x4] sm:$0xf]
    %v5327 = vld [vmem:[%s5324 + $0x8] sm:$0xf]
    %v5328 = vld [vmem:[%s5324 + $0xc] sm:$0xf]
    %v5333 = vunpack.c.l.b16 %v5325
    %v5334 = vunpack.c.l.b16 %v5326
    %v5335 = vunpack.c.l.b16 %v5327
    %v5336 = vunpack.c.l.b16 %v5328
    %v5337 = vpack.c.b16 %v5334, %v5333
    %v5338 = vpack.c.b16 %v5336, %v5335
    %v5342 = vsel %vm228, %v5323, 0
    %5344 = vmatprep.subr.bf16.mxu0 0
    %5345 = vmatpush1.bf16.msra.mxu0 0
    %5346 = vmatprep.subr.bf16.mxu0 0
    %5347 = vmatpush1.bf16.msra.mxu0 0
    %5348 = vmatprep.subr.bf16.mxu0 0
    %5349 = vmatpush1.bf16.msra.mxu0 0
    %5350 = vmatprep.subr.bf16.mxu0 0
    %5351 = vmatpush1.bf16.msra.mxu0 0
    %5352 = vmatprep.subr.bf16.mxu0 0
    %5353 = vmatpush1.bf16.msra.mxu0 0
    %5354 = vmatprep.subr.bf16.mxu0 0
    %5355 = vmatpush1.bf16.msra.mxu0 0
    %5356 = vmatprep.subr.bf16.mxu0 0
    %5357 = vmatpush1.bf16.msra.mxu0 %v5338
    %5358 = vmatprep.subr.bf16.mxu0 0
    %5359 = vmatpush1.bf16.msra.mxu0 %v5337
    %5360 = vmatprep.subr.bf16.mxu0 0
    %5361 = vmatpush2.bf16.msra.mxu0 0
    %5362 = vmatprep.subr.bf16.mxu0 0
    %5363 = vmatpush2.bf16.msra.mxu0 0
    %5364 = vmatprep.subr.bf16.mxu0 0
    %5365 = vmatpush2.bf16.msra.mxu0 0
    %5366 = vmatprep.subr.bf16.mxu0 0
    %5367 = vmatpush2.bf16.msra.mxu0 0
    %5368 = vmatprep.subr.bf16.mxu0 0
    %5369 = vmatpush2.bf16.msra.mxu0 0
    %5370 = vmatprep.subr.bf16.mxu0 0
    %5371 = vmatpush2.bf16.msra.mxu0 0
    %5372 = vmatprep.subr.bf16.mxu0 0
    %5373 = vmatpush2.bf16.msra.mxu0 0
    %5374 = vmatprep.subr.bf16.mxu0 0
    %5375 = vmatpush2.bf16.msra.mxu0 0
    %5376 = vmatprep.mubr.bf16.mxu0 0
    %5377 = vmatmul.mubr.bf16.gmra.mxu0 %v5342
    %v5378 = vpop.f32.mrf.mxu0
    %v5379 = vadd.f32 0.0, %v5378
    %v5380 = vpop.f32.mrf.mxu0
    %v5381 = vpop.f32.mrf.mxu0
    %v5382 = vpop.f32.mrf.mxu0
    %5383 = vdwg.mxu0
    %v5384 = vadd.f32 %v5317, %v5379
    %v5385 = vrot.slane %v5110, 4
    %v5387 = vrot.slane %v5111, 3
    %v5389 = vsel %vm5116, %v5385, %v5387
    %v5390 = vpack.c.bf16 %v5389, %v5389
    %s5391 = scalar_lea.vmem [#allocation14], 64
    %v5392 = vld [vmem:[%s5391] sm:$0xf]
    %v5393 = vld [vmem:[%s5391 + $0x4] sm:$0xf]
    %v5394 = vld [vmem:[%s5391 + $0x8] sm:$0xf]
    %v5395 = vld [vmem:[%s5391 + $0xc] sm:$0xf]
    %v5400 = vunpack.c.l.b16 %v5392
    %v5401 = vunpack.c.l.b16 %v5393
    %v5402 = vunpack.c.l.b16 %v5394
    %v5403 = vunpack.c.l.b16 %v5395
    %v5404 = vpack.c.b16 %v5401, %v5400
    %v5405 = vpack.c.b16 %v5403, %v5402
    %v5409 = vsel %vm228, %v5390, 0
    %5411 = vmatprep.subr.bf16.mxu0 0
    %5412 = vmatpush1.bf16.msra.mxu0 0
    %5413 = vmatprep.subr.bf16.mxu0 0
    %5414 = vmatpush1.bf16.msra.mxu0 0
    %5415 = vmatprep.subr.bf16.mxu0 0
    %5416 = vmatpush1.bf16.msra.mxu0 0
    %5417 = vmatprep.subr.bf16.mxu0 0
    %5418 = vmatpush1.bf16.msra.mxu0 0
    %5419 = vmatprep.subr.bf16.mxu0 0
    %5420 = vmatpush1.bf16.msra.mxu0 0
    %5421 = vmatprep.subr.bf16.mxu0 0
    %5422 = vmatpush1.bf16.msra.mxu0 0
    %5423 = vmatprep.subr.bf16.mxu0 0
    %5424 = vmatpush1.bf16.msra.mxu0 %v5405
    %5425 = vmatprep.subr.bf16.mxu0 0
    %5426 = vmatpush1.bf16.msra.mxu0 %v5404
    %5427 = vmatprep.subr.bf16.mxu0 0
    %5428 = vmatpush2.bf16.msra.mxu0 0
    %5429 = vmatprep.subr.bf16.mxu0 0
    %5430 = vmatpush2.bf16.msra.mxu0 0
    %5431 = vmatprep.subr.bf16.mxu0 0
    %5432 = vmatpush2.bf16.msra.mxu0 0
    %5433 = vmatprep.subr.bf16.mxu0 0
    %5434 = vmatpush2.bf16.msra.mxu0 0
    %5435 = vmatprep.subr.bf16.mxu0 0
    %5436 = vmatpush2.bf16.msra.mxu0 0
    %5437 = vmatprep.subr.bf16.mxu0 0
    %5438 = vmatpush2.bf16.msra.mxu0 0
    %5439 = vmatprep.subr.bf16.mxu0 0
    %5440 = vmatpush2.bf16.msra.mxu0 0
    %5441 = vmatprep.subr.bf16.mxu0 0
    %5442 = vmatpush2.bf16.msra.mxu0 0
    %5443 = vmatprep.mubr.bf16.mxu0 0
    %5444 = vmatmul.mubr.bf16.gmra.mxu0 %v5409
    %v5445 = vpop.f32.mrf.mxu0
    %v5446 = vadd.f32 0.0, %v5445
    %v5447 = vpop.f32.mrf.mxu0
    %v5448 = vpop.f32.mrf.mxu0
    %v5449 = vpop.f32.mrf.mxu0
    %5450 = vdwg.mxu0
    %v5451 = vadd.f32 %v5384, %v5446
    %v5452 = vrot.slane %v5110, 5
    %v5454 = vrot.slane %v5111, 4
    %v5456 = vsel %vm5116, %v5452, %v5454
    %v5457 = vpack.c.bf16 %v5456, %v5456
    %s5458 = scalar_lea.vmem [#allocation14], 80
    %v5459 = vld [vmem:[%s5458] sm:$0xf]
    %v5460 = vld [vmem:[%s5458 + $0x4] sm:$0xf]
    %v5461 = vld [vmem:[%s5458 + $0x8] sm:$0xf]
    %v5462 = vld [vmem:[%s5458 + $0xc] sm:$0xf]
    %v5467 = vunpack.c.l.b16 %v5459
    %v5468 = vunpack.c.l.b16 %v5460
    %v5469 = vunpack.c.l.b16 %v5461
    %v5470 = vunpack.c.l.b16 %v5462
    %v5471 = vpack.c.b16 %v5468, %v5467
    %v5472 = vpack.c.b16 %v5470, %v5469
    %v5476 = vsel %vm228, %v5457, 0
    %5478 = vmatprep.subr.bf16.mxu0 0
    %5479 = vmatpush1.bf16.msra.mxu0 0
    %5480 = vmatprep.subr.bf16.mxu0 0
    %5481 = vmatpush1.bf16.msra.mxu0 0
    %5482 = vmatprep.subr.bf16.mxu0 0
    %5483 = vmatpush1.bf16.msra.mxu0 0
    %5484 = vmatprep.subr.bf16.mxu0 0
    %5485 = vmatpush1.bf16.msra.mxu0 0
    %5486 = vmatprep.subr.bf16.mxu0 0
    %5487 = vmatpush1.bf16.msra.mxu0 0
    %5488 = vmatprep.subr.bf16.mxu0 0
    %5489 = vmatpush1.bf16.msra.mxu0 0
    %5490 = vmatprep.subr.bf16.mxu0 0
    %5491 = vmatpush1.bf16.msra.mxu0 %v5472
    %5492 = vmatprep.subr.bf16.mxu0 0
    %5493 = vmatpush1.bf16.msra.mxu0 %v5471
    %5494 = vmatprep.subr.bf16.mxu0 0
    %5495 = vmatpush2.bf16.msra.mxu0 0
    %5496 = vmatprep.subr.bf16.mxu0 0
    %5497 = vmatpush2.bf16.msra.mxu0 0
    %5498 = vmatprep.subr.bf16.mxu0 0
    %5499 = vmatpush2.bf16.msra.mxu0 0
    %5500 = vmatprep.subr.bf16.mxu0 0
    %5501 = vmatpush2.bf16.msra.mxu0 0
    %5502 = vmatprep.subr.bf16.mxu0 0
    %5503 = vmatpush2.bf16.msra.mxu0 0
    %5504 = vmatprep.subr.bf16.mxu0 0
    %5505 = vmatpush2.bf16.msra.mxu0 0
    %5506 = vmatprep.subr.bf16.mxu0 0
    %5507 = vmatpush2.bf16.msra.mxu0 0
    %5508 = vmatprep.subr.bf16.mxu0 0
    %5509 = vmatpush2.bf16.msra.mxu0 0
    %5510 = vmatprep.mubr.bf16.mxu0 0
    %5511 = vmatmul.mubr.bf16.gmra.mxu0 %v5476
    %v5512 = vpop.f32.mrf.mxu0
    %v5513 = vadd.f32 0.0, %v5512
    %v5514 = vpop.f32.mrf.mxu0
    %v5515 = vpop.f32.mrf.mxu0
    %v5516 = vpop.f32.mrf.mxu0
    %5517 = vdwg.mxu0
    %v5518 = vadd.f32 %v5451, %v5513
    %v5519 = vrot.slane %v5110, 6
    %v5521 = vrot.slane %v5111, 5
    %v5523 = vsel %vm5116, %v5519, %v5521
    %v5524 = vpack.c.bf16 %v5523, %v5523
    %s5525 = scalar_lea.vmem [#allocation14], 96
    %v5526 = vld [vmem:[%s5525] sm:$0xf]
    %v5527 = vld [vmem:[%s5525 + $0x4] sm:$0xf]
    %v5528 = vld [vmem:[%s5525 + $0x8] sm:$0xf]
    %v5529 = vld [vmem:[%s5525 + $0xc] sm:$0xf]
    %v5534 = vunpack.c.l.b16 %v5526
    %v5535 = vunpack.c.l.b16 %v5527
    %v5536 = vunpack.c.l.b16 %v5528
    %v5537 = vunpack.c.l.b16 %v5529
    %v5538 = vpack.c.b16 %v5535, %v5534
    %v5539 = vpack.c.b16 %v5537, %v5536
    %v5543 = vsel %vm228, %v5524, 0
    %5545 = vmatprep.subr.bf16.mxu0 0
    %5546 = vmatpush1.bf16.msra.mxu0 0
    %5547 = vmatprep.subr.bf16.mxu0 0
    %5548 = vmatpush1.bf16.msra.mxu0 0
    %5549 = vmatprep.subr.bf16.mxu0 0
    %5550 = vmatpush1.bf16.msra.mxu0 0
    %5551 = vmatprep.subr.bf16.mxu0 0
    %5552 = vmatpush1.bf16.msra.mxu0 0
    %5553 = vmatprep.subr.bf16.mxu0 0
    %5554 = vmatpush1.bf16.msra.mxu0 0
    %5555 = vmatprep.subr.bf16.mxu0 0
    %5556 = vmatpush1.bf16.msra.mxu0 0
    %5557 = vmatprep.subr.bf16.mxu0 0
    %5558 = vmatpush1.bf16.msra.mxu0 %v5539
    %5559 = vmatprep.subr.bf16.mxu0 0
    %5560 = vmatpush1.bf16.msra.mxu0 %v5538
    %5561 = vmatprep.subr.bf16.mxu0 0
    %5562 = vmatpush2.bf16.msra.mxu0 0
    %5563 = vmatprep.subr.bf16.mxu0 0
    %5564 = vmatpush2.bf16.msra.mxu0 0
    %5565 = vmatprep.subr.bf16.mxu0 0
    %5566 = vmatpush2.bf16.msra.mxu0 0
    %5567 = vmatprep.subr.bf16.mxu0 0
    %5568 = vmatpush2.bf16.msra.mxu0 0
    %5569 = vmatprep.subr.bf16.mxu0 0
    %5570 = vmatpush2.bf16.msra.mxu0 0
    %5571 = vmatprep.subr.bf16.mxu0 0
    %5572 = vmatpush2.bf16.msra.mxu0 0
    %5573 = vmatprep.subr.bf16.mxu0 0
    %5574 = vmatpush2.bf16.msra.mxu0 0
    %5575 = vmatprep.subr.bf16.mxu0 0
    %5576 = vmatpush2.bf16.msra.mxu0 0
    %5577 = vmatprep.mubr.bf16.mxu0 0
    %5578 = vmatmul.mubr.bf16.gmra.mxu0 %v5543
    %v5579 = vpop.f32.mrf.mxu0
    %v5580 = vadd.f32 0.0, %v5579
    %v5581 = vpop.f32.mrf.mxu0
    %v5582 = vpop.f32.mrf.mxu0
    %v5583 = vpop.f32.mrf.mxu0
    %5584 = vdwg.mxu0
    %v5585 = vadd.f32 %v5518, %v5580
    %v5586 = vrot.slane %v5110, 7
    %v5588 = vrot.slane %v5111, 6
    %v5590 = vsel %vm5116, %v5586, %v5588
    %v5591 = vpack.c.bf16 %v5590, %v5590
    %s5592 = scalar_lea.vmem [#allocation14], 112
    %v5593 = vld [vmem:[%s5592] sm:$0xf]
    %v5594 = vld [vmem:[%s5592 + $0x4] sm:$0xf]
    %v5595 = vld [vmem:[%s5592 + $0x8] sm:$0xf]
    %v5596 = vld [vmem:[%s5592 + $0xc] sm:$0xf]
    %v5601 = vunpack.c.l.b16 %v5593
    %v5602 = vunpack.c.l.b16 %v5594
    %v5603 = vunpack.c.l.b16 %v5595
    %v5604 = vunpack.c.l.b16 %v5596
    %v5605 = vpack.c.b16 %v5602, %v5601
    %v5606 = vpack.c.b16 %v5604, %v5603
    %v5610 = vsel %vm228, %v5591, 0
    %5612 = vmatprep.subr.bf16.mxu0 0
    %5613 = vmatpush1.bf16.msra.mxu0 0
    %5614 = vmatprep.subr.bf16.mxu0 0
    %5615 = vmatpush1.bf16.msra.mxu0 0
    %5616 = vmatprep.subr.bf16.mxu0 0
    %5617 = vmatpush1.bf16.msra.mxu0 0
    %5618 = vmatprep.subr.bf16.mxu0 0
    %5619 = vmatpush1.bf16.msra.mxu0 0
    %5620 = vmatprep.subr.bf16.mxu0 0
    %5621 = vmatpush1.bf16.msra.mxu0 0
    %5622 = vmatprep.subr.bf16.mxu0 0
    %5623 = vmatpush1.bf16.msra.mxu0 0
    %5624 = vmatprep.subr.bf16.mxu0 0
    %5625 = vmatpush1.bf16.msra.mxu0 %v5606
    %5626 = vmatprep.subr.bf16.mxu0 0
    %5627 = vmatpush1.bf16.msra.mxu0 %v5605
    %5628 = vmatprep.subr.bf16.mxu0 0
    %5629 = vmatpush2.bf16.msra.mxu0 0
    %5630 = vmatprep.subr.bf16.mxu0 0
    %5631 = vmatpush2.bf16.msra.mxu0 0
    %5632 = vmatprep.subr.bf16.mxu0 0
    %5633 = vmatpush2.bf16.msra.mxu0 0
    %5634 = vmatprep.subr.bf16.mxu0 0
    %5635 = vmatpush2.bf16.msra.mxu0 0
    %5636 = vmatprep.subr.bf16.mxu0 0
    %5637 = vmatpush2.bf16.msra.mxu0 0
    %5638 = vmatprep.subr.bf16.mxu0 0
    %5639 = vmatpush2.bf16.msra.mxu0 0
    %5640 = vmatprep.subr.bf16.mxu0 0
    %5641 = vmatpush2.bf16.msra.mxu0 0
    %5642 = vmatprep.subr.bf16.mxu0 0
    %5643 = vmatpush2.bf16.msra.mxu0 0
    %5644 = vmatprep.mubr.bf16.mxu0 0
    %5645 = vmatmul.mubr.bf16.gmra.mxu0 %v5610
    %v5646 = vpop.f32.mrf.mxu0
    %v5647 = vadd.f32 0.0, %v5646
    %v5648 = vpop.f32.mrf.mxu0
    %v5649 = vpop.f32.mrf.mxu0
    %v5650 = vpop.f32.mrf.mxu0
    %5651 = vdwg.mxu0
    %v5652 = vadd.f32 %v5585, %v5647
    %vm5653 = vcmask 254976
    %5654 = vst.msk [vmem:[#allocation16] sm:$0x3] %vm5653, %v5652
    // Predicated region
    $region98: #{_lambda_.1} parent=1 // pred_check
      _
    $region99: #{_lambda_.1} parent=1 // pred_check_branch
      %5656 = sbr.rel (0) target = $region101
    $region100: #{_lambda_.1} parent=1 // pred_region
      %s5658 = ssub.s32 32, 32
      %5659 = vsyncadd [#allocation4], %s5658
      %s5661 = sshll.u32 [#allocation16], 4
      %s5662 = int_to_ptr.vmem [resolvable:$true] %s5661
      %5664 = dma.vmem_to_hbm [thread:$0]  %s5662, 32, %s16, [#allocation4]
    $region101: #{_lambda_.1} parent=1 // pred_fallthru
      _
    // Predicated region
    $region102: #{_lambda_.1} parent=1 // pred_check
      _
    $region103: #{_lambda_.1} parent=1 // pred_check_branch
      %5666 = sbr.rel (0) target = $region105
    $region104: #{_lambda_.1} parent=1 // pred_region
      %5667 = dma.done [#allocation4], 32
    $region105: #{_lambda_.1} parent=1 // pred_fallthru
      _
    %5668 = vsyncpa [#allocation3], 1
    %5669 = vsyncpa [#allocation6], 1
    %5670 = vsyncpa [#allocation9], 1
    %5671 = vsyncpa [#allocation12], 1
    %5672 = vsyncpa [#allocation15], 1
    %5673 = vsyncpa [#allocation4], 1

</llo_original>
